<compile_context>
chip_gen: v7x
topology: tpu7x:2x2x1
jax: 0.10.0
libtpu: 0.0.40
codegen_flags: <defaults>
</compile_context>

<pallas_src>
import functools

import numpy as np
import jax
import jax.numpy as jnp
from jax import lax
from jax.experimental import pallas as pl
from jax.experimental.pallas import tpu as pltpu

HEAD_PAD = 128  # lane-dense padded width of the fused actor|critic head

# architecture constants of the module
K1, S1 = 8, 4   # conv1 kernel / stride
K2, S2 = 4, 2   # conv2 kernel / stride
K3, S3 = 3, 1   # conv3 kernel / stride
C1, C2, C3 = 32, 64, 32
FC = 512
QWIN = K1 + S1 * (K2 - 1)  # = 20: input-column span of one conv1 "quad"


# -------------------------------- geometry --------------------------------- #

def conv_geometry(h, w):
    """Spatial sizes after conv(8,s4) -> conv(4,s2) -> conv(3,s1), VALID."""
    oh1, ow1 = (h - K1) // S1 + 1, (w - K1) // S1 + 1
    oh2, ow2 = (oh1 - K2) // S2 + 1, (ow1 - K2) // S2 + 1
    oh3, ow3 = (oh2 - K3) // S3 + 1, (ow2 - K3) // S3 + 1
    return (oh1, ow1), (oh2, ow2), (oh3, ow3)


# --------------------------- fused Pallas kernel ---------------------------- #

def _ac_fused_kernel(p1_ref, w1q_ref, w2_ref, w3_ref, wf_ref, wh_ref,
                     bsm_ref, bf_ref, o_ref, p2_ref, *, nb, oh1, oh2, ow2):
    """Entire AC forward on VMEM-resident tiles (single grid step)."""
    f32 = jnp.float32
    nq = ow2  # quads per conv1 output row

    # Packed lane-dense biases: row0 = conv1 quad bias (tiled x4),
    # row1 = conv2 bias (lanes 0:64), row2 = conv3 bias (lanes 0:32), row3 = head.
    b1q = bsm_ref[0:1, :]
    b2 = bsm_ref[1:2, 0:C2]
    b3 = bsm_ref[2:3, 0:C3]
    bh = bsm_ref[3:4, :]

    # --- conv1 (8x8, s4) directly in "quad" layout --------------------------
    # rows = (sample, y, quad q); lane xb*32 + c = conv1 output at x = 2q + xb.
    # bf16 MXU operands, f32 accumulation.
    h1q = jnp.dot(p1_ref[...], w1q_ref[...], preferred_element_type=f32)
    h1q = jnp.maximum(h1q + b1q, 0.0)                 # (nb*oh1*nq, 128) f32

    # --- conv2 (4x4, s2) im2col: 72 full-lane (1,128) copies -----------------
    # dst rows are position-major ((oy*ow2+ox)*nb + s) so conv3 below can use
    # contiguous nb-row blocks; every store is 128 lanes at a 128-aligned
    # column offset (no masked vst, no XLU lane shifts).
    for s in range(nb):
        for oy in range(oh2):
            for i in range(K2):
                src_base = (s * oh1 + S2 * oy + i) * nq
                for ox in range(ow2):
                    dst = (oy * ow2 + ox) * nb + s
                    p2_ref[dst:dst + 1, i * 128:(i + 1) * 128] = \
                        h1q[src_base + ox:src_base + ox + 1, :]

    h2 = jnp.dot(p2_ref[...].astype(jnp.bfloat16), w2_ref[...],
                 preferred_element_type=f32)
    h2 = jnp.maximum(h2 + b2, 0.0)                    # (oh2*ow2*nb, 64)
    h2b = h2.astype(jnp.bfloat16)

    # --- conv3 (3x3, s1 over the 3x3 map -> 1x1): tap accumulation, no im2col
    acc3 = jnp.zeros((nb, C3), f32)
    for t in range(oh2 * ow2):
        acc3 = acc3 + jnp.dot(h2b[t * nb:(t + 1) * nb, :],
                              w3_ref[t * C2:(t + 1) * C2, :],
                              preferred_element_type=f32)
    h3 = jnp.maximum(acc3 + b3, 0.0)                  # (nb, 32)

    # --- Linear(conv_out, 512) + ReLU ---------------------------------------
    feat = jnp.dot(h3.astype(jnp.bfloat16), wf_ref[...],
                   preferred_element_type=f32)
    feat = jnp.maximum(feat + bf_ref[...], 0.0)       # (nb, 512)

    # --- fused actor|critic head (f32 weights, full-precision matmul) -------
    o_ref[...] = jnp.dot(feat, wh_ref[...], preferred_element_type=f32,
                         precision=lax.Precision.HIGHEST) + bh


def _full_spec(shape):
    return pl.BlockSpec(shape, lambda: (0,) * len(shape))


def build_ac_call(n, c, h, w):
    (oh1, ow1), (oh2, ow2), (oh3, ow3) = conv_geometry(h, w)
    # TODO(synk): inputs whose final conv map is larger than 1x1 would need an
    # extra in-kernel repack to reproduce PyTorch's NCHW flatten order.
    assert oh3 == 1 and ow3 == 1, "fused kernel assumes a 1x1 final conv map"
    assert ow1 == S2 * (ow2 - 1) + K2, "exact conv2 coverage assumed"

    kq = K1 * QWIN * c                 # quad patch width (640 for c=4)
    m1 = n * oh1 * ow2                 # conv1-quad GEMM rows
    m2 = oh2 * ow2 * n                 # conv2 GEMM rows
    kern = functools.partial(_ac_fused_kernel, nb=n, oh1=oh1, oh2=oh2, ow2=ow2)

    in_shapes = [
        (m1, kq),                      # p1q  (bf16) conv1 quad patches
        (kq, 4 * C1),                  # w1q  (bf16) banded quad conv1 weight
        (K2 * K2 * C1, C2),            # w2   (bf16)
        (K3 * K3 * C2, C3),            # w3   (bf16)
        (C3, FC),                      # wf   (bf16)
        (FC, HEAD_PAD),                # wh   (f32) fused actor|critic head
        (4, HEAD_PAD),                 # packed small biases (f32)
        (1, FC),                       # bf   (f32)
    ]
    flops = 2 * (m1 * kq * 4 * C1 + m2 * (K2 * K2 * C1) * C2
                 + oh2 * ow2 * n * C2 * C3 + n * C3 * FC + n * FC * HEAD_PAD)
    bytes_accessed = (2 * (m1 * kq + kq * 4 * C1 + K2 * K2 * C1 * C2
                           + K3 * K3 * C2 * C3 + C3 * FC)
                      + 4 * (FC * HEAD_PAD + 4 * HEAD_PAD + FC + n * HEAD_PAD))

    return pl.pallas_call(
        kern,
        out_shape=jax.ShapeDtypeStruct((n, HEAD_PAD), jnp.float32),
        in_specs=[_full_spec(s) for s in in_shapes],
        out_specs=_full_spec((n, HEAD_PAD)),
        scratch_shapes=[pltpu.VMEM((m2, K2 * K2 * C1), jnp.float32)],  # conv2 patches
        cost_estimate=pl.CostEstimate(flops=flops, transcendentals=0,
                                      bytes_accessed=bytes_accessed),
    )


# ------------------------- conv1 patch extraction (XLA) --------------------- #

def quad_patches(x_nhwc, oh1, nq):
    """conv1 'quad' patch matrix, emitted in bf16.

    Row r = (sample, output row y, quad q) where quad q covers conv1 output
    columns x = 2q .. 2q+3; columns are the flattened (K1, QWIN, Cin) union
    input window starting at input column S1*S2*q.
    """
    n, h, w, c = x_nhwc.shape
    per_q = []
    for q in range(nq):
        col0 = S1 * S2 * q
        win = x_nhwc[:, :, col0:col0 + QWIN, :]                 # (N, H, QWIN, C)
        rows = jnp.stack([win[:, S1 * y:S1 * y + K1] for y in range(oh1)],
                         axis=1)                                # (N, oh1, K1, QWIN, C)
        per_q.append(rows)
    p = jnp.stack(per_q, axis=2)                                # (N, oh1, nq, K1, QWIN, C)
    return p.reshape(n * oh1 * nq, K1 * QWIN * c).astype(jnp.bfloat16)


# ----------------------------- parameter creation --------------------------- #

def orthogonal_(rng, shape, gain):
    """Mimics torch.nn.init.orthogonal_ (flattened to 2D, sign-corrected QR)."""
    rows = shape[0]
    cols = int(np.prod(shape[1:]))
    a = rng.standard_normal((max(rows, cols), min(rows, cols)))
    q, r = np.linalg.qr(a)
    q = q * np.sign(np.diag(r))
    if rows < cols:
        q = q.T
    return (gain * q[:rows, :cols].reshape(shape)).astype(np.float32)


def make_torch_params(in_channels, conv_out, action_dim, seed=0):
    """PyTorch-layout float32 parameters (biases zero, per the module's init)."""
    rng = np.random.default_rng(seed)
    g = float(np.sqrt(2.0))  # nn.init.calculate_gain('relu')
    z = lambda *s: np.zeros(s, np.float32)
    return {
        "c1_w": orthogonal_(rng, (C1, in_channels, K1, K1), g), "c1_b": z(C1),
        "c2_w": orthogonal_(rng, (C2, C1, K2, K2), g),          "c2_b": z(C2),
        "c3_w": orthogonal_(rng, (C3, C2, K3, K3), g),          "c3_b": z(C3),
        "fc_w": orthogonal_(rng, (FC, conv_out), g),            "fc_b": z(FC),
        "a_w":  orthogonal_(rng, (action_dim, FC), 0.01),       "a_b": z(action_dim),
        "v_w":  orthogonal_(rng, (1, FC), 1.0),                 "v_b": z(1),
    }


def prepare_kernel_params(tp, action_dim):
    assert action_dim + 1 <= HEAD_PAD
    c1 = tp["c1_w"] / 255.0                   # fold x/255 into conv1
    cout, cin, kh, kw = c1.shape

    # Banded "quad" conv1 weight: 4 copies of conv1, each shifted by S1 input
    # columns inside the QWIN-wide union window, so the GEMM emits 128 lanes =
    # (4 consecutive output columns) x 32 channels per row.
    w1q = np.zeros((kh * QWIN * cin, 4 * cout), np.float32)
    for i in range(kh):
        for xb in range(4):
            for j in range(kw):
                jj = j + S1 * xb
                rows = (i * QWIN + jj) * cin + np.arange(cin)
                w1q[rows, xb * cout:(xb + 1) * cout] = c1[:, :, i, j].T
    b1q = np.tile(tp["c1_b"], 4)

    def conv_gemm_w(wt):                      # (Cout,Cin,K,K) -> (K*K*Cin, Cout)
        return np.transpose(wt, (2, 3, 1, 0)).reshape(-1, wt.shape[0])

    wh = np.zeros((FC, HEAD_PAD), np.float32)            # fused actor|critic
    wh[:, :action_dim] = tp["a_w"].T
    wh[:, action_dim] = tp["v_w"][0]
    bh = np.zeros(HEAD_PAD, np.float32)
    bh[:action_dim] = tp["a_b"]
    bh[action_dim] = tp["v_b"][0]

    bsm = np.zeros((4, HEAD_PAD), np.float32)            # packed small biases
    bsm[0, :] = b1q
    bsm[1, :C2] = tp["c2_b"]
    bsm[2, :C3] = tp["c3_b"]
    bsm[3, :] = bh

    bf16 = lambda a: jnp.asarray(a, jnp.bfloat16)
    return {"w1q": bf16(w1q),
            "w2": bf16(conv_gemm_w(tp["c2_w"])),
            "w3": bf16(conv_gemm_w(tp["c3_w"])),
            "wf": bf16(tp["fc_w"].T),
            "wh": jnp.asarray(wh, jnp.float32),          # f32: actor gain 0.01
            "bsm": jnp.asarray(bsm, jnp.float32),
            "bf": jnp.asarray(tp["fc_b"].reshape(1, FC), jnp.float32)}


# -------------------------------- forward pass ------------------------------ #

def ac_forward(x_nchw, kp, action_dim):
    """x_nchw: (N, C, H, W) raw-pixel-scale input.  Returns (logits, value)."""
    n, c, h, w = x_nchw.shape
    (oh1, _), (_, ow2), _ = conv_geometry(h, w)
    x = jnp.transpose(x_nchw.astype(jnp.float32), (0, 2, 3, 1))   # NHWC
    p1q = quad_patches(x, oh1, ow2)   # bf16; only activation DMA into the kernel
    out = build_ac_call(n, c, h, w)(
        p1q, kp["w1q"], kp["w2"], kp["w3"], kp["wf"], kp["wh"],
        kp["bsm"], kp["bf"])
    logits = out[:, :action_dim]
    value = out[:, action_dim:action_dim + 1]
    # TODO(synk): FixedCategorical sampling / log_probs are distribution
    # helpers around the logits, not tensor ops; we return the logits.
    # TODO(synk): the use_batchnorm=True branch (BatchNorm2d/1d) is not implemented.
    return logits, value


def ac_reference(x_nchw, tp, action_dim):
    """Pure-JAX f32 reference of the PyTorch module (same parameters)."""
    n = x_nchw.shape[0]
    x = jnp.transpose(x_nchw.astype(jnp.float32), (0, 2, 3, 1)) / 255.0

    def conv(hh, wt, b, stride):
        wio = jnp.transpose(jnp.asarray(wt), (2, 3, 1, 0))   # HWIO
        y = lax.conv_general_dilated(hh, wio, (stride, stride), "VALID",
                                     dimension_numbers=("NHWC", "HWIO", "NHWC"))
        return jnp.maximum(y + b.reshape(1, 1, 1, -1), 0.0)

    hh = conv(x, tp["c1_w"], tp["c1_b"], S1)
    hh = conv(hh, tp["c2_w"], tp["c2_b"], S2)
    hh = conv(hh, tp["c3_w"], tp["c3_b"], S3)
    flat = jnp.transpose(hh, (0, 3, 1, 2)).reshape(n, -1)
    feat = jnp.maximum(flat @ tp["fc_w"].T + tp["fc_b"], 0.0)
    logits = feat @ tp["a_w"].T + tp["a_b"]
    value = feat @ tp["v_w"].T + tp["v_b"]
    return logits, value


# ------------------------------------ main ---------------------------------- #

if __name__ == "__main__":
    # Shapes consistent with the module: C=4 frames, 36x36 spatial
    #   conv1 (k8,s4): 36 -> 8 ; conv2 (k4,s2): 8 -> 3 ; conv3 (k3,s1): 3 -> 1
    n, c, h, w = 2, 4, 36, 36
    action_dim = 6

    (_, _), (_, _), (oh3, ow3) = conv_geometry(h, w)
    conv_out = C3 * oh3 * ow3
    tparams = make_torch_params(c, conv_out, action_dim, seed=0)
    kparams = prepare_kernel_params(tparams, action_dim)

    key = jax.random.PRNGKey(0)
    x = jax.random.uniform(key, (n, c, h, w), dtype=jnp.float32,
                           minval=0.0, maxval=255.0)

    fwd = jax.jit(functools.partial(ac_forward, action_dim=action_dim))
    logits, value = fwd(x, kparams)
    jax.block_until_ready((logits, value))

    assert logits.shape == (n, action_dim), logits.shape
    assert value.shape == (n, 1), value.shape
    assert bool(jnp.all(jnp.isfinite(logits))) and bool(jnp.all(jnp.isfinite(value)))

    # Validate against an independent pure-JAX f32 reference of the module
    # (bf16 MXU operands in the kernel => loose tolerance).
    ref_logits, ref_value = jax.jit(
        functools.partial(ac_reference, action_dim=action_dim))(x, tparams)
    np.testing.assert_allclose(np.asarray(logits), np.asarray(ref_logits),
                               rtol=5e-2, atol=5e-2)
    np.testing.assert_allclose(np.asarray(value), np.asarray(ref_value),
                               rtol=5e-2, atol=5e-2)

    print("KERNEL_OK")
</pallas_src>

<mosaic_0001>
module attributes {stable_mosaic.version = 11 : i64} {
  func.func @_ac_fused_kernel(%arg0: memref<48x640xbf16, #tpu.memory_space<vmem>>, %arg1: memref<640x128xbf16, #tpu.memory_space<vmem>>, %arg2: memref<512x64xbf16, #tpu.memory_space<vmem>>, %arg3: memref<576x32xbf16, #tpu.memory_space<vmem>>, %arg4: memref<32x512xbf16, #tpu.memory_space<vmem>>, %arg5: memref<512x128xf32, #tpu.memory_space<vmem>>, %arg6: memref<4x128xf32, #tpu.memory_space<vmem>>, %arg7: memref<1x512xf32, #tpu.memory_space<vmem>>, %arg8: memref<2x128xf32, #tpu.memory_space<vmem>>, %arg9: memref<18x512xf32, #tpu.memory_space<vmem>>) attributes {dimension_semantics = [], scalar_prefetch = 0 : i64, scratch_operands = 1 : i64, tpu.core_type = #tpu.core_type<tc>} {
    %c0 = arith.constant 0 : index
    %c0_0 = arith.constant 0 : index
    %0 = vector.load %arg6[%c0, %c0_0] : memref<4x128xf32, #tpu.memory_space<vmem>>, vector<1x128xf32>
    %c1 = arith.constant 1 : index
    %c0_1 = arith.constant 0 : index
    %1 = vector.load %arg6[%c1, %c0_1] : memref<4x128xf32, #tpu.memory_space<vmem>>, vector<1x64xf32>
    %c2 = arith.constant 2 : index
    %c0_2 = arith.constant 0 : index
    %2 = vector.load %arg6[%c2, %c0_2] : memref<4x128xf32, #tpu.memory_space<vmem>>, vector<1x32xf32>
    %c3 = arith.constant 3 : index
    %c0_3 = arith.constant 0 : index
    %3 = vector.load %arg6[%c3, %c0_3] : memref<4x128xf32, #tpu.memory_space<vmem>>, vector<1x128xf32>
    %c0_4 = arith.constant 0 : index
    %c0_5 = arith.constant 0 : index
    %4 = vector.load %arg0[%c0_4, %c0_5] : memref<48x640xbf16, #tpu.memory_space<vmem>>, vector<48x640xbf16>
    %c0_6 = arith.constant 0 : index
    %c0_7 = arith.constant 0 : index
    %5 = vector.load %arg1[%c0_6, %c0_7] : memref<640x128xbf16, #tpu.memory_space<vmem>>, vector<640x128xbf16>
    %cst = arith.constant dense<0.000000e+00> : vector<48x128xf32>
    %6 = tpu.matmul %4, %5, %cst {dimension_numbers = #tpu.dot_dimension_numbers<[1], [0], [0], [1], [0, 0, 1, 1], [], []>} : vector<48x640xbf16>, vector<640x128xbf16>, vector<48x128xf32> -> vector<48x128xf32>
    %7 = vector.broadcast %0 : vector<1x128xf32> to vector<48x128xf32>
    %8 = arith.addf %6, %7 : vector<48x128xf32>
    %cst_8 = arith.constant 0.000000e+00 : f32
    %9 = vector.broadcast %cst_8 : f32 to vector<48x128xf32>
    %10 = arith.maximumf %8, %9 : vector<48x128xf32>
    %11 = vector.extract_strided_slice %10 {offsets = [0, 0], sizes = [1, 128], strides = [1, 1]} : vector<48x128xf32> to vector<1x128xf32>
    %c0_9 = arith.constant 0 : index
    %c0_10 = arith.constant 0 : index
    %12 = vector.load %arg9[%c0_9, %c0_10] : memref<18x512xf32, #tpu.memory_space<vmem>>, vector<1x128xf32>
    tpu.vector_store %arg9[%c0_9, %c0_10], %11 {strides = array<i32>} : memref<18x512xf32, #tpu.memory_space<vmem>>, vector<1x128xf32>,
    %13 = vector.extract_strided_slice %10 {offsets = [1, 0], sizes = [1, 128], strides = [1, 1]} : vector<48x128xf32> to vector<1x128xf32>
    %c2_11 = arith.constant 2 : index
    %c0_12 = arith.constant 0 : index
    %14 = vector.load %arg9[%c2_11, %c0_12] : memref<18x512xf32, #tpu.memory_space<vmem>>, vector<1x128xf32>
    tpu.vector_store %arg9[%c2_11, %c0_12], %13 {strides = array<i32>} : memref<18x512xf32, #tpu.memory_space<vmem>>, vector<1x128xf32>,
    %15 = vector.extract_strided_slice %10 {offsets = [2, 0], sizes = [1, 128], strides = [1, 1]} : vector<48x128xf32> to vector<1x128xf32>
    %c4 = arith.constant 4 : index
    %c0_13 = arith.constant 0 : index
    %16 = vector.load %arg9[%c4, %c0_13] : memref<18x512xf32, #tpu.memory_space<vmem>>, vector<1x128xf32>
    tpu.vector_store %arg9[%c4, %c0_13], %15 {strides = array<i32>} : memref<18x512xf32, #tpu.memory_space<vmem>>, vector<1x128xf32>,
    %17 = vector.extract_strided_slice %10 {offsets = [3, 0], sizes = [1, 128], strides = [1, 1]} : vector<48x128xf32> to vector<1x128xf32>
    %c0_14 = arith.constant 0 : index
    %c128 = arith.constant 128 : index
    %18 = vector.load %arg9[%c0_14, %c128] : memref<18x512xf32, #tpu.memory_space<vmem>>, vector<1x128xf32>
    tpu.vector_store %arg9[%c0_14, %c128], %17 {strides = array<i32>} : memref<18x512xf32, #tpu.memory_space<vmem>>, vector<1x128xf32>,
    %19 = vector.extract_strided_slice %10 {offsets = [4, 0], sizes = [1, 128], strides = [1, 1]} : vector<48x128xf32> to vector<1x128xf32>
    %c2_15 = arith.constant 2 : index
    %c128_16 = arith.constant 128 : index
    %20 = vector.load %arg9[%c2_15, %c128_16] : memref<18x512xf32, #tpu.memory_space<vmem>>, vector<1x128xf32>
    tpu.vector_store %arg9[%c2_15, %c128_16], %19 {strides = array<i32>} : memref<18x512xf32, #tpu.memory_space<vmem>>, vector<1x128xf32>,
    %21 = vector.extract_strided_slice %10 {offsets = [5, 0], sizes = [1, 128], strides = [1, 1]} : vector<48x128xf32> to vector<1x128xf32>
    %c4_17 = arith.constant 4 : index
    %c128_18 = arith.constant 128 : index
    %22 = vector.load %arg9[%c4_17, %c128_18] : memref<18x512xf32, #tpu.memory_space<vmem>>, vector<1x128xf32>
    tpu.vector_store %arg9[%c4_17, %c128_18], %21 {strides = array<i32>} : memref<18x512xf32, #tpu.memory_space<vmem>>, vector<1x128xf32>,
    %23 = vector.extract_strided_slice %10 {offsets = [6, 0], sizes = [1, 128], strides = [1, 1]} : vector<48x128xf32> to vector<1x128xf32>
    %c0_19 = arith.constant 0 : index
    %c256 = arith.constant 256 : index
    %24 = vector.load %arg9[%c0_19, %c256] : memref<18x512xf32, #tpu.memory_space<vmem>>, vector<1x128xf32>
    tpu.vector_store %arg9[%c0_19, %c256], %23 {strides = array<i32>} : memref<18x512xf32, #tpu.memory_space<vmem>>, vector<1x128xf32>,
    %25 = vector.extract_strided_slice %10 {offsets = [7, 0], sizes = [1, 128], strides = [1, 1]} : vector<48x128xf32> to vector<1x128xf32>
    %c2_20 = arith.constant 2 : index
    %c256_21 = arith.constant 256 : index
    %26 = vector.load %arg9[%c2_20, %c256_21] : memref<18x512xf32, #tpu.memory_space<vmem>>, vector<1x128xf32>
    tpu.vector_store %arg9[%c2_20, %c256_21], %25 {strides = array<i32>} : memref<18x512xf32, #tpu.memory_space<vmem>>, vector<1x128xf32>,
    %27 = vector.extract_strided_slice %10 {offsets = [8, 0], sizes = [1, 128], strides = [1, 1]} : vector<48x128xf32> to vector<1x128xf32>
    %c4_22 = arith.constant 4 : index
    %c256_23 = arith.constant 256 : index
    %28 = vector.load %arg9[%c4_22, %c256_23] : memref<18x512xf32, #tpu.memory_space<vmem>>, vector<1x128xf32>
    tpu.vector_store %arg9[%c4_22, %c256_23], %27 {strides = array<i32>} : memref<18x512xf32, #tpu.memory_space<vmem>>, vector<1x128xf32>,
    %29 = vector.extract_strided_slice %10 {offsets = [9, 0], sizes = [1, 128], strides = [1, 1]} : vector<48x128xf32> to vector<1x128xf32>
    %c0_24 = arith.constant 0 : index
    %c384 = arith.constant 384 : index
    %30 = vector.load %arg9[%c0_24, %c384] : memref<18x512xf32, #tpu.memory_space<vmem>>, vector<1x128xf32>
    tpu.vector_store %arg9[%c0_24, %c384], %29 {strides = array<i32>} : memref<18x512xf32, #tpu.memory_space<vmem>>, vector<1x128xf32>,
    %31 = vector.extract_strided_slice %10 {offsets = [10, 0], sizes = [1, 128], strides = [1, 1]} : vector<48x128xf32> to vector<1x128xf32>
    %c2_25 = arith.constant 2 : index
    %c384_26 = arith.constant 384 : index
    %32 = vector.load %arg9[%c2_25, %c384_26] : memref<18x512xf32, #tpu.memory_space<vmem>>, vector<1x128xf32>
    tpu.vector_store %arg9[%c2_25, %c384_26], %31 {strides = array<i32>} : memref<18x512xf32, #tpu.memory_space<vmem>>, vector<1x128xf32>,
    %33 = vector.extract_strided_slice %10 {offsets = [11, 0], sizes = [1, 128], strides = [1, 1]} : vector<48x128xf32> to vector<1x128xf32>
    %c4_27 = arith.constant 4 : index
    %c384_28 = arith.constant 384 : index
    %34 = vector.load %arg9[%c4_27, %c384_28] : memref<18x512xf32, #tpu.memory_space<vmem>>, vector<1x128xf32>
    tpu.vector_store %arg9[%c4_27, %c384_28], %33 {strides = array<i32>} : memref<18x512xf32, #tpu.memory_space<vmem>>, vector<1x128xf32>,
    %35 = vector.extract_strided_slice %10 {offsets = [6, 0], sizes = [1, 128], strides = [1, 1]} : vector<48x128xf32> to vector<1x128xf32>
    %c6 = arith.constant 6 : index
    %c0_29 = arith.constant 0 : index
    %36 = vector.load %arg9[%c6, %c0_29] : memref<18x512xf32, #tpu.memory_space<vmem>>, vector<1x128xf32>
    tpu.vector_store %arg9[%c6, %c0_29], %35 {strides = array<i32>} : memref<18x512xf32, #tpu.memory_space<vmem>>, vector<1x128xf32>,
    %37 = vector.extract_strided_slice %10 {offsets = [7, 0], sizes = [1, 128], strides = [1, 1]} : vector<48x128xf32> to vector<1x128xf32>
    %c8 = arith.constant 8 : index
    %c0_30 = arith.constant 0 : index
    %38 = vector.load %arg9[%c8, %c0_30] : memref<18x512xf32, #tpu.memory_space<vmem>>, vector<1x128xf32>
    tpu.vector_store %arg9[%c8, %c0_30], %37 {strides = array<i32>} : memref<18x512xf32, #tpu.memory_space<vmem>>, vector<1x128xf32>,
    %39 = vector.extract_strided_slice %10 {offsets = [8, 0], sizes = [1, 128], strides = [1, 1]} : vector<48x128xf32> to vector<1x128xf32>
    %c10 = arith.constant 10 : index
    %c0_31 = arith.constant 0 : index
    %40 = vector.load %arg9[%c10, %c0_31] : memref<18x512xf32, #tpu.memory_space<vmem>>, vector<1x128xf32>
    tpu.vector_store %arg9[%c10, %c0_31], %39 {strides = array<i32>} : memref<18x512xf32, #tpu.memory_space<vmem>>, vector<1x128xf32>,
    %41 = vector.extract_strided_slice %10 {offsets = [9, 0], sizes = [1, 128], strides = [1, 1]} : vector<48x128xf32> to vector<1x128xf32>
    %c6_32 = arith.constant 6 : index
    %c128_33 = arith.constant 128 : index
    %42 = vector.load %arg9[%c6_32, %c128_33] : memref<18x512xf32, #tpu.memory_space<vmem>>, vector<1x128xf32>
    tpu.vector_store %arg9[%c6_32, %c128_33], %41 {strides = array<i32>} : memref<18x512xf32, #tpu.memory_space<vmem>>, vector<1x128xf32>,
    %43 = vector.extract_strided_slice %10 {offsets = [10, 0], sizes = [1, 128], strides = [1, 1]} : vector<48x128xf32> to vector<1x128xf32>
    %c8_34 = arith.constant 8 : index
    %c128_35 = arith.constant 128 : index
    %44 = vector.load %arg9[%c8_34, %c128_35] : memref<18x512xf32, #tpu.memory_space<vmem>>, vector<1x128xf32>
    tpu.vector_store %arg9[%c8_34, %c128_35], %43 {strides = array<i32>} : memref<18x512xf32, #tpu.memory_space<vmem>>, vector<1x128xf32>,
    %45 = vector.extract_strided_slice %10 {offsets = [11, 0], sizes = [1, 128], strides = [1, 1]} : vector<48x128xf32> to vector<1x128xf32>
    %c10_36 = arith.constant 10 : index
    %c128_37 = arith.constant 128 : index
    %46 = vector.load %arg9[%c10_36, %c128_37] : memref<18x512xf32, #tpu.memory_space<vmem>>, vector<1x128xf32>
    tpu.vector_store %arg9[%c10_36, %c128_37], %45 {strides = array<i32>} : memref<18x512xf32, #tpu.memory_space<vmem>>, vector<1x128xf32>,
    %47 = vector.extract_strided_slice %10 {offsets = [12, 0], sizes = [1, 128], strides = [1, 1]} : vector<48x128xf32> to vector<1x128xf32>
    %c6_38 = arith.constant 6 : index
    %c256_39 = arith.constant 256 : index
    %48 = vector.load %arg9[%c6_38, %c256_39] : memref<18x512xf32, #tpu.memory_space<vmem>>, vector<1x128xf32>
    tpu.vector_store %arg9[%c6_38, %c256_39], %47 {strides = array<i32>} : memref<18x512xf32, #tpu.memory_space<vmem>>, vector<1x128xf32>,
    %49 = vector.extract_strided_slice %10 {offsets = [13, 0], sizes = [1, 128], strides = [1, 1]} : vector<48x128xf32> to vector<1x128xf32>
    %c8_40 = arith.constant 8 : index
    %c256_41 = arith.constant 256 : index
    %50 = vector.load %arg9[%c8_40, %c256_41] : memref<18x512xf32, #tpu.memory_space<vmem>>, vector<1x128xf32>
    tpu.vector_store %arg9[%c8_40, %c256_41], %49 {strides = array<i32>} : memref<18x512xf32, #tpu.memory_space<vmem>>, vector<1x128xf32>,
    %51 = vector.extract_strided_slice %10 {offsets = [14, 0], sizes = [1, 128], strides = [1, 1]} : vector<48x128xf32> to vector<1x128xf32>
    %c10_42 = arith.constant 10 : index
    %c256_43 = arith.constant 256 : index
    %52 = vector.load %arg9[%c10_42, %c256_43] : memref<18x512xf32, #tpu.memory_space<vmem>>, vector<1x128xf32>
    tpu.vector_store %arg9[%c10_42, %c256_43], %51 {strides = array<i32>} : memref<18x512xf32, #tpu.memory_space<vmem>>, vector<1x128xf32>,
    %53 = vector.extract_strided_slice %10 {offsets = [15, 0], sizes = [1, 128], strides = [1, 1]} : vector<48x128xf32> to vector<1x128xf32>
    %c6_44 = arith.constant 6 : index
    %c384_45 = arith.constant 384 : index
    %54 = vector.load %arg9[%c6_44, %c384_45] : memref<18x512xf32, #tpu.memory_space<vmem>>, vector<1x128xf32>
    tpu.vector_store %arg9[%c6_44, %c384_45], %53 {strides = array<i32>} : memref<18x512xf32, #tpu.memory_space<vmem>>, vector<1x128xf32>,
    %55 = vector.extract_strided_slice %10 {offsets = [16, 0], sizes = [1, 128], strides = [1, 1]} : vector<48x128xf32> to vector<1x128xf32>
    %c8_46 = arith.constant 8 : index
    %c384_47 = arith.constant 384 : index
    %56 = vector.load %arg9[%c8_46, %c384_47] : memref<18x512xf32, #tpu.memory_space<vmem>>, vector<1x128xf32>
    tpu.vector_store %arg9[%c8_46, %c384_47], %55 {strides = array<i32>} : memref<18x512xf32, #tpu.memory_space<vmem>>, vector<1x128xf32>,
    %57 = vector.extract_strided_slice %10 {offsets = [17, 0], sizes = [1, 128], strides = [1, 1]} : vector<48x128xf32> to vector<1x128xf32>
    %c10_48 = arith.constant 10 : index
    %c384_49 = arith.constant 384 : index
    %58 = vector.load %arg9[%c10_48, %c384_49] : memref<18x512xf32, #tpu.memory_space<vmem>>, vector<1x128xf32>
    tpu.vector_store %arg9[%c10_48, %c384_49], %57 {strides = array<i32>} : memref<18x512xf32, #tpu.memory_space<vmem>>, vector<1x128xf32>,
    %59 = vector.extract_strided_slice %10 {offsets = [12, 0], sizes = [1, 128], strides = [1, 1]} : vector<48x128xf32> to vector<1x128xf32>
    %c12 = arith.constant 12 : index
    %c0_50 = arith.constant 0 : index
    %60 = vector.load %arg9[%c12, %c0_50] : memref<18x512xf32, #tpu.memory_space<vmem>>, vector<1x128xf32>
    tpu.vector_store %arg9[%c12, %c0_50], %59 {strides = array<i32>} : memref<18x512xf32, #tpu.memory_space<vmem>>, vector<1x128xf32>,
    %61 = vector.extract_strided_slice %10 {offsets = [13, 0], sizes = [1, 128], strides = [1, 1]} : vector<48x128xf32> to vector<1x128xf32>
    %c14 = arith.constant 14 : index
    %c0_51 = arith.constant 0 : index
    %62 = vector.load %arg9[%c14, %c0_51] : memref<18x512xf32, #tpu.memory_space<vmem>>, vector<1x128xf32>
    tpu.vector_store %arg9[%c14, %c0_51], %61 {strides = array<i32>} : memref<18x512xf32, #tpu.memory_space<vmem>>, vector<1x128xf32>,
    %63 = vector.extract_strided_slice %10 {offsets = [14, 0], sizes = [1, 128], strides = [1, 1]} : vector<48x128xf32> to vector<1x128xf32>
    %c16 = arith.constant 16 : index
    %c0_52 = arith.constant 0 : index
    %64 = vector.load %arg9[%c16, %c0_52] : memref<18x512xf32, #tpu.memory_space<vmem>>, vector<1x128xf32>
    tpu.vector_store %arg9[%c16, %c0_52], %63 {strides = array<i32>} : memref<18x512xf32, #tpu.memory_space<vmem>>, vector<1x128xf32>,
    %65 = vector.extract_strided_slice %10 {offsets = [15, 0], sizes = [1, 128], strides = [1, 1]} : vector<48x128xf32> to vector<1x128xf32>
    %c12_53 = arith.constant 12 : index
    %c128_54 = arith.constant 128 : index
    %66 = vector.load %arg9[%c12_53, %c128_54] : memref<18x512xf32, #tpu.memory_space<vmem>>, vector<1x128xf32>
    tpu.vector_store %arg9[%c12_53, %c128_54], %65 {strides = array<i32>} : memref<18x512xf32, #tpu.memory_space<vmem>>, vector<1x128xf32>,
    %67 = vector.extract_strided_slice %10 {offsets = [16, 0], sizes = [1, 128], strides = [1, 1]} : vector<48x128xf32> to vector<1x128xf32>
    %c14_55 = arith.constant 14 : index
    %c128_56 = arith.constant 128 : index
    %68 = vector.load %arg9[%c14_55, %c128_56] : memref<18x512xf32, #tpu.memory_space<vmem>>, vector<1x128xf32>
    tpu.vector_store %arg9[%c14_55, %c128_56], %67 {strides = array<i32>} : memref<18x512xf32, #tpu.memory_space<vmem>>, vector<1x128xf32>,
    %69 = vector.extract_strided_slice %10 {offsets = [17, 0], sizes = [1, 128], strides = [1, 1]} : vector<48x128xf32> to vector<1x128xf32>
    %c16_57 = arith.constant 16 : index
    %c128_58 = arith.constant 128 : index
    %70 = vector.load %arg9[%c16_57, %c128_58] : memref<18x512xf32, #tpu.memory_space<vmem>>, vector<1x128xf32>
    tpu.vector_store %arg9[%c16_57, %c128_58], %69 {strides = array<i32>} : memref<18x512xf32, #tpu.memory_space<vmem>>, vector<1x128xf32>,
    %71 = vector.extract_strided_slice %10 {offsets = [18, 0], sizes = [1, 128], strides = [1, 1]} : vector<48x128xf32> to vector<1x128xf32>
    %c12_59 = arith.constant 12 : index
    %c256_60 = arith.constant 256 : index
    %72 = vector.load %arg9[%c12_59, %c256_60] : memref<18x512xf32, #tpu.memory_space<vmem>>, vector<1x128xf32>
    tpu.vector_store %arg9[%c12_59, %c256_60], %71 {strides = array<i32>} : memref<18x512xf32, #tpu.memory_space<vmem>>, vector<1x128xf32>,
    %73 = vector.extract_strided_slice %10 {offsets = [19, 0], sizes = [1, 128], strides = [1, 1]} : vector<48x128xf32> to vector<1x128xf32>
    %c14_61 = arith.constant 14 : index
    %c256_62 = arith.constant 256 : index
    %74 = vector.load %arg9[%c14_61, %c256_62] : memref<18x512xf32, #tpu.memory_space<vmem>>, vector<1x128xf32>
    tpu.vector_store %arg9[%c14_61, %c256_62], %73 {strides = array<i32>} : memref<18x512xf32, #tpu.memory_space<vmem>>, vector<1x128xf32>,
    %75 = vector.extract_strided_slice %10 {offsets = [20, 0], sizes = [1, 128], strides = [1, 1]} : vector<48x128xf32> to vector<1x128xf32>
    %c16_63 = arith.constant 16 : index
    %c256_64 = arith.constant 256 : index
    %76 = vector.load %arg9[%c16_63, %c256_64] : memref<18x512xf32, #tpu.memory_space<vmem>>, vector<1x128xf32>
    tpu.vector_store %arg9[%c16_63, %c256_64], %75 {strides = array<i32>} : memref<18x512xf32, #tpu.memory_space<vmem>>, vector<1x128xf32>,
    %77 = vector.extract_strided_slice %10 {offsets = [21, 0], sizes = [1, 128], strides = [1, 1]} : vector<48x128xf32> to vector<1x128xf32>
    %c12_65 = arith.constant 12 : index
    %c384_66 = arith.constant 384 : index
    %78 = vector.load %arg9[%c12_65, %c384_66] : memref<18x512xf32, #tpu.memory_space<vmem>>, vector<1x128xf32>
    tpu.vector_store %arg9[%c12_65, %c384_66], %77 {strides = array<i32>} : memref<18x512xf32, #tpu.memory_space<vmem>>, vector<1x128xf32>,
    %79 = vector.extract_strided_slice %10 {offsets = [22, 0], sizes = [1, 128], strides = [1, 1]} : vector<48x128xf32> to vector<1x128xf32>
    %c14_67 = arith.constant 14 : index
    %c384_68 = arith.constant 384 : index
    %80 = vector.load %arg9[%c14_67, %c384_68] : memref<18x512xf32, #tpu.memory_space<vmem>>, vector<1x128xf32>
    tpu.vector_store %arg9[%c14_67, %c384_68], %79 {strides = array<i32>} : memref<18x512xf32, #tpu.memory_space<vmem>>, vector<1x128xf32>,
    %81 = vector.extract_strided_slice %10 {offsets = [23, 0], sizes = [1, 128], strides = [1, 1]} : vector<48x128xf32> to vector<1x128xf32>
    %c16_69 = arith.constant 16 : index
    %c384_70 = arith.constant 384 : index
    %82 = vector.load %arg9[%c16_69, %c384_70] : memref<18x512xf32, #tpu.memory_space<vmem>>, vector<1x128xf32>
    tpu.vector_store %arg9[%c16_69, %c384_70], %81 {strides = array<i32>} : memref<18x512xf32, #tpu.memory_space<vmem>>, vector<1x128xf32>,
    %83 = vector.extract_strided_slice %10 {offsets = [24, 0], sizes = [1, 128], strides = [1, 1]} : vector<48x128xf32> to vector<1x128xf32>
    %c1_71 = arith.constant 1 : index
    %c0_72 = arith.constant 0 : index
    %84 = vector.load %arg9[%c1_71, %c0_72] : memref<18x512xf32, #tpu.memory_space<vmem>>, vector<1x128xf32>
    tpu.vector_store %arg9[%c1_71, %c0_72], %83 {strides = array<i32>} : memref<18x512xf32, #tpu.memory_space<vmem>>, vector<1x128xf32>,
    %85 = vector.extract_strided_slice %10 {offsets = [25, 0], sizes = [1, 128], strides = [1, 1]} : vector<48x128xf32> to vector<1x128xf32>
    %c3_73 = arith.constant 3 : index
    %c0_74 = arith.constant 0 : index
    %86 = vector.load %arg9[%c3_73, %c0_74] : memref<18x512xf32, #tpu.memory_space<vmem>>, vector<1x128xf32>
    tpu.vector_store %arg9[%c3_73, %c0_74], %85 {strides = array<i32>} : memref<18x512xf32, #tpu.memory_space<vmem>>, vector<1x128xf32>,
    %87 = vector.extract_strided_slice %10 {offsets = [26, 0], sizes = [1, 128], strides = [1, 1]} : vector<48x128xf32> to vector<1x128xf32>
    %c5 = arith.constant 5 : index
    %c0_75 = arith.constant 0 : index
    %88 = vector.load %arg9[%c5, %c0_75] : memref<18x512xf32, #tpu.memory_space<vmem>>, vector<1x128xf32>
    tpu.vector_store %arg9[%c5, %c0_75], %87 {strides = array<i32>} : memref<18x512xf32, #tpu.memory_space<vmem>>, vector<1x128xf32>,
    %89 = vector.extract_strided_slice %10 {offsets = [27, 0], sizes = [1, 128], strides = [1, 1]} : vector<48x128xf32> to vector<1x128xf32>
    %c1_76 = arith.constant 1 : index
    %c128_77 = arith.constant 128 : index
    %90 = vector.load %arg9[%c1_76, %c128_77] : memref<18x512xf32, #tpu.memory_space<vmem>>, vector<1x128xf32>
    tpu.vector_store %arg9[%c1_76, %c128_77], %89 {strides = array<i32>} : memref<18x512xf32, #tpu.memory_space<vmem>>, vector<1x128xf32>,
    %91 = vector.extract_strided_slice %10 {offsets = [28, 0], sizes = [1, 128], strides = [1, 1]} : vector<48x128xf32> to vector<1x128xf32>
    %c3_78 = arith.constant 3 : index
    %c128_79 = arith.constant 128 : index
    %92 = vector.load %arg9[%c3_78, %c128_79] : memref<18x512xf32, #tpu.memory_space<vmem>>, vector<1x128xf32>
    tpu.vector_store %arg9[%c3_78, %c128_79], %91 {strides = array<i32>} : memref<18x512xf32, #tpu.memory_space<vmem>>, vector<1x128xf32>,
    %93 = vector.extract_strided_slice %10 {offsets = [29, 0], sizes = [1, 128], strides = [1, 1]} : vector<48x128xf32> to vector<1x128xf32>
    %c5_80 = arith.constant 5 : index
    %c128_81 = arith.constant 128 : index
    %94 = vector.load %arg9[%c5_80, %c128_81] : memref<18x512xf32, #tpu.memory_space<vmem>>, vector<1x128xf32>
    tpu.vector_store %arg9[%c5_80, %c128_81], %93 {strides = array<i32>} : memref<18x512xf32, #tpu.memory_space<vmem>>, vector<1x128xf32>,
    %95 = vector.extract_strided_slice %10 {offsets = [30, 0], sizes = [1, 128], strides = [1, 1]} : vector<48x128xf32> to vector<1x128xf32>
    %c1_82 = arith.constant 1 : index
    %c256_83 = arith.constant 256 : index
    %96 = vector.load %arg9[%c1_82, %c256_83] : memref<18x512xf32, #tpu.memory_space<vmem>>, vector<1x128xf32>
    tpu.vector_store %arg9[%c1_82, %c256_83], %95 {strides = array<i32>} : memref<18x512xf32, #tpu.memory_space<vmem>>, vector<1x128xf32>,
    %97 = vector.extract_strided_slice %10 {offsets = [31, 0], sizes = [1, 128], strides = [1, 1]} : vector<48x128xf32> to vector<1x128xf32>
    %c3_84 = arith.constant 3 : index
    %c256_85 = arith.constant 256 : index
    %98 = vector.load %arg9[%c3_84, %c256_85] : memref<18x512xf32, #tpu.memory_space<vmem>>, vector<1x128xf32>
    tpu.vector_store %arg9[%c3_84, %c256_85], %97 {strides = array<i32>} : memref<18x512xf32, #tpu.memory_space<vmem>>, vector<1x128xf32>,
    %99 = vector.extract_strided_slice %10 {offsets = [32, 0], sizes = [1, 128], strides = [1, 1]} : vector<48x128xf32> to vector<1x128xf32>
    %c5_86 = arith.constant 5 : index
    %c256_87 = arith.constant 256 : index
    %100 = vector.load %arg9[%c5_86, %c256_87] : memref<18x512xf32, #tpu.memory_space<vmem>>, vector<1x128xf32>
    tpu.vector_store %arg9[%c5_86, %c256_87], %99 {strides = array<i32>} : memref<18x512xf32, #tpu.memory_space<vmem>>, vector<1x128xf32>,
    %101 = vector.extract_strided_slice %10 {offsets = [33, 0], sizes = [1, 128], strides = [1, 1]} : vector<48x128xf32> to vector<1x128xf32>
    %c1_88 = arith.constant 1 : index
    %c384_89 = arith.constant 384 : index
    %102 = vector.load %arg9[%c1_88, %c384_89] : memref<18x512xf32, #tpu.memory_space<vmem>>, vector<1x128xf32>
    tpu.vector_store %arg9[%c1_88, %c384_89], %101 {strides = array<i32>} : memref<18x512xf32, #tpu.memory_space<vmem>>, vector<1x128xf32>,
    %103 = vector.extract_strided_slice %10 {offsets = [34, 0], sizes = [1, 128], strides = [1, 1]} : vector<48x128xf32> to vector<1x128xf32>
    %c3_90 = arith.constant 3 : index
    %c384_91 = arith.constant 384 : index
    %104 = vector.load %arg9[%c3_90, %c384_91] : memref<18x512xf32, #tpu.memory_space<vmem>>, vector<1x128xf32>
    tpu.vector_store %arg9[%c3_90, %c384_91], %103 {strides = array<i32>} : memref<18x512xf32, #tpu.memory_space<vmem>>, vector<1x128xf32>,
    %105 = vector.extract_strided_slice %10 {offsets = [35, 0], sizes = [1, 128], strides = [1, 1]} : vector<48x128xf32> to vector<1x128xf32>
    %c5_92 = arith.constant 5 : index
    %c384_93 = arith.constant 384 : index
    %106 = vector.load %arg9[%c5_92, %c384_93] : memref<18x512xf32, #tpu.memory_space<vmem>>, vector<1x128xf32>
    tpu.vector_store %arg9[%c5_92, %c384_93], %105 {strides = array<i32>} : memref<18x512xf32, #tpu.memory_space<vmem>>, vector<1x128xf32>,
    %107 = vector.extract_strided_slice %10 {offsets = [30, 0], sizes = [1, 128], strides = [1, 1]} : vector<48x128xf32> to vector<1x128xf32>
    %c7 = arith.constant 7 : index
    %c0_94 = arith.constant 0 : index
    %108 = vector.load %arg9[%c7, %c0_94] : memref<18x512xf32, #tpu.memory_space<vmem>>, vector<1x128xf32>
    tpu.vector_store %arg9[%c7, %c0_94], %107 {strides = array<i32>} : memref<18x512xf32, #tpu.memory_space<vmem>>, vector<1x128xf32>,
    %109 = vector.extract_strided_slice %10 {offsets = [31, 0], sizes = [1, 128], strides = [1, 1]} : vector<48x128xf32> to vector<1x128xf32>
    %c9 = arith.constant 9 : index
    %c0_95 = arith.constant 0 : index
    %110 = vector.load %arg9[%c9, %c0_95] : memref<18x512xf32, #tpu.memory_space<vmem>>, vector<1x128xf32>
    tpu.vector_store %arg9[%c9, %c0_95], %109 {strides = array<i32>} : memref<18x512xf32, #tpu.memory_space<vmem>>, vector<1x128xf32>,
    %111 = vector.extract_strided_slice %10 {offsets = [32, 0], sizes = [1, 128], strides = [1, 1]} : vector<48x128xf32> to vector<1x128xf32>
    %c11 = arith.constant 11 : index
    %c0_96 = arith.constant 0 : index
    %112 = vector.load %arg9[%c11, %c0_96] : memref<18x512xf32, #tpu.memory_space<vmem>>, vector<1x128xf32>
    tpu.vector_store %arg9[%c11, %c0_96], %111 {strides = array<i32>} : memref<18x512xf32, #tpu.memory_space<vmem>>, vector<1x128xf32>,
    %113 = vector.extract_strided_slice %10 {offsets = [33, 0], sizes = [1, 128], strides = [1, 1]} : vector<48x128xf32> to vector<1x128xf32>
    %c7_97 = arith.constant 7 : index
    %c128_98 = arith.constant 128 : index
    %114 = vector.load %arg9[%c7_97, %c128_98] : memref<18x512xf32, #tpu.memory_space<vmem>>, vector<1x128xf32>
    tpu.vector_store %arg9[%c7_97, %c128_98], %113 {strides = array<i32>} : memref<18x512xf32, #tpu.memory_space<vmem>>, vector<1x128xf32>,
    %115 = vector.extract_strided_slice %10 {offsets = [34, 0], sizes = [1, 128], strides = [1, 1]} : vector<48x128xf32> to vector<1x128xf32>
    %c9_99 = arith.constant 9 : index
    %c128_100 = arith.constant 128 : index
    %116 = vector.load %arg9[%c9_99, %c128_100] : memref<18x512xf32, #tpu.memory_space<vmem>>, vector<1x128xf32>
    tpu.vector_store %arg9[%c9_99, %c128_100], %115 {strides = array<i32>} : memref<18x512xf32, #tpu.memory_space<vmem>>, vector<1x128xf32>,
    %117 = vector.extract_strided_slice %10 {offsets = [35, 0], sizes = [1, 128], strides = [1, 1]} : vector<48x128xf32> to vector<1x128xf32>
    %c11_101 = arith.constant 11 : index
    %c128_102 = arith.constant 128 : index
    %118 = vector.load %arg9[%c11_101, %c128_102] : memref<18x512xf32, #tpu.memory_space<vmem>>, vector<1x128xf32>
    tpu.vector_store %arg9[%c11_101, %c128_102], %117 {strides = array<i32>} : memref<18x512xf32, #tpu.memory_space<vmem>>, vector<1x128xf32>,
    %119 = vector.extract_strided_slice %10 {offsets = [36, 0], sizes = [1, 128], strides = [1, 1]} : vector<48x128xf32> to vector<1x128xf32>
    %c7_103 = arith.constant 7 : index
    %c256_104 = arith.constant 256 : index
    %120 = vector.load %arg9[%c7_103, %c256_104] : memref<18x512xf32, #tpu.memory_space<vmem>>, vector<1x128xf32>
    tpu.vector_store %arg9[%c7_103, %c256_104], %119 {strides = array<i32>} : memref<18x512xf32, #tpu.memory_space<vmem>>, vector<1x128xf32>,
    %121 = vector.extract_strided_slice %10 {offsets = [37, 0], sizes = [1, 128], strides = [1, 1]} : vector<48x128xf32> to vector<1x128xf32>
    %c9_105 = arith.constant 9 : index
    %c256_106 = arith.constant 256 : index
    %122 = vector.load %arg9[%c9_105, %c256_106] : memref<18x512xf32, #tpu.memory_space<vmem>>, vector<1x128xf32>
    tpu.vector_store %arg9[%c9_105, %c256_106], %121 {strides = array<i32>} : memref<18x512xf32, #tpu.memory_space<vmem>>, vector<1x128xf32>,
    %123 = vector.extract_strided_slice %10 {offsets = [38, 0], sizes = [1, 128], strides = [1, 1]} : vector<48x128xf32> to vector<1x128xf32>
    %c11_107 = arith.constant 11 : index
    %c256_108 = arith.constant 256 : index
    %124 = vector.load %arg9[%c11_107, %c256_108] : memref<18x512xf32, #tpu.memory_space<vmem>>, vector<1x128xf32>
    tpu.vector_store %arg9[%c11_107, %c256_108], %123 {strides = array<i32>} : memref<18x512xf32, #tpu.memory_space<vmem>>, vector<1x128xf32>,
    %125 = vector.extract_strided_slice %10 {offsets = [39, 0], sizes = [1, 128], strides = [1, 1]} : vector<48x128xf32> to vector<1x128xf32>
    %c7_109 = arith.constant 7 : index
    %c384_110 = arith.constant 384 : index
    %126 = vector.load %arg9[%c7_109, %c384_110] : memref<18x512xf32, #tpu.memory_space<vmem>>, vector<1x128xf32>
    tpu.vector_store %arg9[%c7_109, %c384_110], %125 {strides = array<i32>} : memref<18x512xf32, #tpu.memory_space<vmem>>, vector<1x128xf32>,
    %127 = vector.extract_strided_slice %10 {offsets = [40, 0], sizes = [1, 128], strides = [1, 1]} : vector<48x128xf32> to vector<1x128xf32>
    %c9_111 = arith.constant 9 : index
    %c384_112 = arith.constant 384 : index
    %128 = vector.load %arg9[%c9_111, %c384_112] : memref<18x512xf32, #tpu.memory_space<vmem>>, vector<1x128xf32>
    tpu.vector_store %arg9[%c9_111, %c384_112], %127 {strides = array<i32>} : memref<18x512xf32, #tpu.memory_space<vmem>>, vector<1x128xf32>,
    %129 = vector.extract_strided_slice %10 {offsets = [41, 0], sizes = [1, 128], strides = [1, 1]} : vector<48x128xf32> to vector<1x128xf32>
    %c11_113 = arith.constant 11 : index
    %c384_114 = arith.constant 384 : index
    %130 = vector.load %arg9[%c11_113, %c384_114] : memref<18x512xf32, #tpu.memory_space<vmem>>, vector<1x128xf32>
    tpu.vector_store %arg9[%c11_113, %c384_114], %129 {strides = array<i32>} : memref<18x512xf32, #tpu.memory_space<vmem>>, vector<1x128xf32>,
    %131 = vector.extract_strided_slice %10 {offsets = [36, 0], sizes = [1, 128], strides = [1, 1]} : vector<48x128xf32> to vector<1x128xf32>
    %c13 = arith.constant 13 : index
    %c0_115 = arith.constant 0 : index
    %132 = vector.load %arg9[%c13, %c0_115] : memref<18x512xf32, #tpu.memory_space<vmem>>, vector<1x128xf32>
    tpu.vector_store %arg9[%c13, %c0_115], %131 {strides = array<i32>} : memref<18x512xf32, #tpu.memory_space<vmem>>, vector<1x128xf32>,
    %133 = vector.extract_strided_slice %10 {offsets = [37, 0], sizes = [1, 128], strides = [1, 1]} : vector<48x128xf32> to vector<1x128xf32>
    %c15 = arith.constant 15 : index
    %c0_116 = arith.constant 0 : index
    %134 = vector.load %arg9[%c15, %c0_116] : memref<18x512xf32, #tpu.memory_space<vmem>>, vector<1x128xf32>
    tpu.vector_store %arg9[%c15, %c0_116], %133 {strides = array<i32>} : memref<18x512xf32, #tpu.memory_space<vmem>>, vector<1x128xf32>,
    %135 = vector.extract_strided_slice %10 {offsets = [38, 0], sizes = [1, 128], strides = [1, 1]} : vector<48x128xf32> to vector<1x128xf32>
    %c17 = arith.constant 17 : index
    %c0_117 = arith.constant 0 : index
    %136 = vector.load %arg9[%c17, %c0_117] : memref<18x512xf32, #tpu.memory_space<vmem>>, vector<1x128xf32>
    tpu.vector_store %arg9[%c17, %c0_117], %135 {strides = array<i32>} : memref<18x512xf32, #tpu.memory_space<vmem>>, vector<1x128xf32>,
    %137 = vector.extract_strided_slice %10 {offsets = [39, 0], sizes = [1, 128], strides = [1, 1]} : vector<48x128xf32> to vector<1x128xf32>
    %c13_118 = arith.constant 13 : index
    %c128_119 = arith.constant 128 : index
    %138 = vector.load %arg9[%c13_118, %c128_119] : memref<18x512xf32, #tpu.memory_space<vmem>>, vector<1x128xf32>
    tpu.vector_store %arg9[%c13_118, %c128_119], %137 {strides = array<i32>} : memref<18x512xf32, #tpu.memory_space<vmem>>, vector<1x128xf32>,
    %139 = vector.extract_strided_slice %10 {offsets = [40, 0], sizes = [1, 128], strides = [1, 1]} : vector<48x128xf32> to vector<1x128xf32>
    %c15_120 = arith.constant 15 : index
    %c128_121 = arith.constant 128 : index
    %140 = vector.load %arg9[%c15_120, %c128_121] : memref<18x512xf32, #tpu.memory_space<vmem>>, vector<1x128xf32>
    tpu.vector_store %arg9[%c15_120, %c128_121], %139 {strides = array<i32>} : memref<18x512xf32, #tpu.memory_space<vmem>>, vector<1x128xf32>,
    %141 = vector.extract_strided_slice %10 {offsets = [41, 0], sizes = [1, 128], strides = [1, 1]} : vector<48x128xf32> to vector<1x128xf32>
    %c17_122 = arith.constant 17 : index
    %c128_123 = arith.constant 128 : index
    %142 = vector.load %arg9[%c17_122, %c128_123] : memref<18x512xf32, #tpu.memory_space<vmem>>, vector<1x128xf32>
    tpu.vector_store %arg9[%c17_122, %c128_123], %141 {strides = array<i32>} : memref<18x512xf32, #tpu.memory_space<vmem>>, vector<1x128xf32>,
    %143 = vector.extract_strided_slice %10 {offsets = [42, 0], sizes = [1, 128], strides = [1, 1]} : vector<48x128xf32> to vector<1x128xf32>
    %c13_124 = arith.constant 13 : index
    %c256_125 = arith.constant 256 : index
    %144 = vector.load %arg9[%c13_124, %c256_125] : memref<18x512xf32, #tpu.memory_space<vmem>>, vector<1x128xf32>
    tpu.vector_store %arg9[%c13_124, %c256_125], %143 {strides = array<i32>} : memref<18x512xf32, #tpu.memory_space<vmem>>, vector<1x128xf32>,
    %145 = vector.extract_strided_slice %10 {offsets = [43, 0], sizes = [1, 128], strides = [1, 1]} : vector<48x128xf32> to vector<1x128xf32>
    %c15_126 = arith.constant 15 : index
    %c256_127 = arith.constant 256 : index
    %146 = vector.load %arg9[%c15_126, %c256_127] : memref<18x512xf32, #tpu.memory_space<vmem>>, vector<1x128xf32>
    tpu.vector_store %arg9[%c15_126, %c256_127], %145 {strides = array<i32>} : memref<18x512xf32, #tpu.memory_space<vmem>>, vector<1x128xf32>,
    %147 = vector.extract_strided_slice %10 {offsets = [44, 0], sizes = [1, 128], strides = [1, 1]} : vector<48x128xf32> to vector<1x128xf32>
    %c17_128 = arith.constant 17 : index
    %c256_129 = arith.constant 256 : index
    %148 = vector.load %arg9[%c17_128, %c256_129] : memref<18x512xf32, #tpu.memory_space<vmem>>, vector<1x128xf32>
    tpu.vector_store %arg9[%c17_128, %c256_129], %147 {strides = array<i32>} : memref<18x512xf32, #tpu.memory_space<vmem>>, vector<1x128xf32>,
    %149 = vector.extract_strided_slice %10 {offsets = [45, 0], sizes = [1, 128], strides = [1, 1]} : vector<48x128xf32> to vector<1x128xf32>
    %c13_130 = arith.constant 13 : index
    %c384_131 = arith.constant 384 : index
    %150 = vector.load %arg9[%c13_130, %c384_131] : memref<18x512xf32, #tpu.memory_space<vmem>>, vector<1x128xf32>
    tpu.vector_store %arg9[%c13_130, %c384_131], %149 {strides = array<i32>} : memref<18x512xf32, #tpu.memory_space<vmem>>, vector<1x128xf32>,
    %151 = vector.extract_strided_slice %10 {offsets = [46, 0], sizes = [1, 128], strides = [1, 1]} : vector<48x128xf32> to vector<1x128xf32>
    %c15_132 = arith.constant 15 : index
    %c384_133 = arith.constant 384 : index
    %152 = vector.load %arg9[%c15_132, %c384_133] : memref<18x512xf32, #tpu.memory_space<vmem>>, vector<1x128xf32>
    tpu.vector_store %arg9[%c15_132, %c384_133], %151 {strides = array<i32>} : memref<18x512xf32, #tpu.memory_space<vmem>>, vector<1x128xf32>,
    %153 = vector.extract_strided_slice %10 {offsets = [47, 0], sizes = [1, 128], strides = [1, 1]} : vector<48x128xf32> to vector<1x128xf32>
    %c17_134 = arith.constant 17 : index
    %c384_135 = arith.constant 384 : index
    %154 = vector.load %arg9[%c17_134, %c384_135] : memref<18x512xf32, #tpu.memory_space<vmem>>, vector<1x128xf32>
    tpu.vector_store %arg9[%c17_134, %c384_135], %153 {strides = array<i32>} : memref<18x512xf32, #tpu.memory_space<vmem>>, vector<1x128xf32>,
    %c0_136 = arith.constant 0 : index
    %c0_137 = arith.constant 0 : index
    %155 = vector.load %arg9[%c0_136, %c0_137] : memref<18x512xf32, #tpu.memory_space<vmem>>, vector<18x512xf32>
    %156 = arith.truncf %155 : vector<18x512xf32> to vector<18x512xbf16>
    %c0_138 = arith.constant 0 : index
    %c0_139 = arith.constant 0 : index
    %157 = vector.load %arg2[%c0_138, %c0_139] : memref<512x64xbf16, #tpu.memory_space<vmem>>, vector<512x64xbf16>
    %cst_140 = arith.constant dense<0.000000e+00> : vector<18x64xf32>
    %158 = tpu.matmul %156, %157, %cst_140 {dimension_numbers = #tpu.dot_dimension_numbers<[1], [0], [0], [1], [0, 0, 1, 1], [], []>} : vector<18x512xbf16>, vector<512x64xbf16>, vector<18x64xf32> -> vector<18x64xf32>
    %159 = vector.broadcast %1 : vector<1x64xf32> to vector<18x64xf32>
    %160 = arith.addf %158, %159 : vector<18x64xf32>
    %cst_141 = arith.constant 0.000000e+00 : f32
    %161 = vector.broadcast %cst_141 : f32 to vector<18x64xf32>
    %162 = arith.maximumf %160, %161 : vector<18x64xf32>
    %163 = arith.truncf %162 : vector<18x64xf32> to vector<18x64xbf16>
    %cst_142 = arith.constant 0.000000e+00 : f32
    %164 = vector.broadcast %cst_142 : f32 to vector<2x32xf32>
    %165 = vector.extract_strided_slice %163 {offsets = [0, 0], sizes = [2, 64], strides = [1, 1]} : vector<18x64xbf16> to vector<2x64xbf16>
    %c0_143 = arith.constant 0 : index
    %c0_144 = arith.constant 0 : index
    %166 = vector.load %arg3[%c0_143, %c0_144] : memref<576x32xbf16, #tpu.memory_space<vmem>>, vector<64x32xbf16>
    %cst_145 = arith.constant dense<0.000000e+00> : vector<2x32xf32>
    %167 = tpu.matmul %165, %166, %cst_145 {dimension_numbers = #tpu.dot_dimension_numbers<[1], [0], [0], [1], [0, 0, 1, 1], [], []>} : vector<2x64xbf16>, vector<64x32xbf16>, vector<2x32xf32> -> vector<2x32xf32>
    %168 = arith.addf %164, %167 : vector<2x32xf32>
    %169 = vector.extract_strided_slice %163 {offsets = [2, 0], sizes = [2, 64], strides = [1, 1]} : vector<18x64xbf16> to vector<2x64xbf16>
    %c64 = arith.constant 64 : index
    %c0_146 = arith.constant 0 : index
    %170 = vector.load %arg3[%c64, %c0_146] : memref<576x32xbf16, #tpu.memory_space<vmem>>, vector<64x32xbf16>
    %cst_147 = arith.constant dense<0.000000e+00> : vector<2x32xf32>
    %171 = tpu.matmul %169, %170, %cst_147 {dimension_numbers = #tpu.dot_dimension_numbers<[1], [0], [0], [1], [0, 0, 1, 1], [], []>} : vector<2x64xbf16>, vector<64x32xbf16>, vector<2x32xf32> -> vector<2x32xf32>
    %172 = arith.addf %168, %171 : vector<2x32xf32>
    %173 = vector.extract_strided_slice %163 {offsets = [4, 0], sizes = [2, 64], strides = [1, 1]} : vector<18x64xbf16> to vector<2x64xbf16>
    %c128_148 = arith.constant 128 : index
    %c0_149 = arith.constant 0 : index
    %174 = vector.load %arg3[%c128_148, %c0_149] : memref<576x32xbf16, #tpu.memory_space<vmem>>, vector<64x32xbf16>
    %cst_150 = arith.constant dense<0.000000e+00> : vector<2x32xf32>
    %175 = tpu.matmul %173, %174, %cst_150 {dimension_numbers = #tpu.dot_dimension_numbers<[1], [0], [0], [1], [0, 0, 1, 1], [], []>} : vector<2x64xbf16>, vector<64x32xbf16>, vector<2x32xf32> -> vector<2x32xf32>
    %176 = arith.addf %172, %175 : vector<2x32xf32>
    %177 = vector.extract_strided_slice %163 {offsets = [6, 0], sizes = [2, 64], strides = [1, 1]} : vector<18x64xbf16> to vector<2x64xbf16>
    %c192 = arith.constant 192 : index
    %c0_151 = arith.constant 0 : index
    %178 = vector.load %arg3[%c192, %c0_151] : memref<576x32xbf16, #tpu.memory_space<vmem>>, vector<64x32xbf16>
    %cst_152 = arith.constant dense<0.000000e+00> : vector<2x32xf32>
    %179 = tpu.matmul %177, %178, %cst_152 {dimension_numbers = #tpu.dot_dimension_numbers<[1], [0], [0], [1], [0, 0, 1, 1], [], []>} : vector<2x64xbf16>, vector<64x32xbf16>, vector<2x32xf32> -> vector<2x32xf32>
    %180 = arith.addf %176, %179 : vector<2x32xf32>
    %181 = vector.extract_strided_slice %163 {offsets = [8, 0], sizes = [2, 64], strides = [1, 1]} : vector<18x64xbf16> to vector<2x64xbf16>
    %c256_153 = arith.constant 256 : index
    %c0_154 = arith.constant 0 : index
    %182 = vector.load %arg3[%c256_153, %c0_154] : memref<576x32xbf16, #tpu.memory_space<vmem>>, vector<64x32xbf16>
    %cst_155 = arith.constant dense<0.000000e+00> : vector<2x32xf32>
    %183 = tpu.matmul %181, %182, %cst_155 {dimension_numbers = #tpu.dot_dimension_numbers<[1], [0], [0], [1], [0, 0, 1, 1], [], []>} : vector<2x64xbf16>, vector<64x32xbf16>, vector<2x32xf32> -> vector<2x32xf32>
    %184 = arith.addf %180, %183 : vector<2x32xf32>
    %185 = vector.extract_strided_slice %163 {offsets = [10, 0], sizes = [2, 64], strides = [1, 1]} : vector<18x64xbf16> to vector<2x64xbf16>
    %c320 = arith.constant 320 : index
    %c0_156 = arith.constant 0 : index
    %186 = vector.load %arg3[%c320, %c0_156] : memref<576x32xbf16, #tpu.memory_space<vmem>>, vector<64x32xbf16>
    %cst_157 = arith.constant dense<0.000000e+00> : vector<2x32xf32>
    %187 = tpu.matmul %185, %186, %cst_157 {dimension_numbers = #tpu.dot_dimension_numbers<[1], [0], [0], [1], [0, 0, 1, 1], [], []>} : vector<2x64xbf16>, vector<64x32xbf16>, vector<2x32xf32> -> vector<2x32xf32>
    %188 = arith.addf %184, %187 : vector<2x32xf32>
    %189 = vector.extract_strided_slice %163 {offsets = [12, 0], sizes = [2, 64], strides = [1, 1]} : vector<18x64xbf16> to vector<2x64xbf16>
    %c384_158 = arith.constant 384 : index
    %c0_159 = arith.constant 0 : index
    %190 = vector.load %arg3[%c384_158, %c0_159] : memref<576x32xbf16, #tpu.memory_space<vmem>>, vector<64x32xbf16>
    %cst_160 = arith.constant dense<0.000000e+00> : vector<2x32xf32>
    %191 = tpu.matmul %189, %190, %cst_160 {dimension_numbers = #tpu.dot_dimension_numbers<[1], [0], [0], [1], [0, 0, 1, 1], [], []>} : vector<2x64xbf16>, vector<64x32xbf16>, vector<2x32xf32> -> vector<2x32xf32>
    %192 = arith.addf %188, %191 : vector<2x32xf32>
    %193 = vector.extract_strided_slice %163 {offsets = [14, 0], sizes = [2, 64], strides = [1, 1]} : vector<18x64xbf16> to vector<2x64xbf16>
    %c448 = arith.constant 448 : index
    %c0_161 = arith.constant 0 : index
    %194 = vector.load %arg3[%c448, %c0_161] : memref<576x32xbf16, #tpu.memory_space<vmem>>, vector<64x32xbf16>
    %cst_162 = arith.constant dense<0.000000e+00> : vector<2x32xf32>
    %195 = tpu.matmul %193, %194, %cst_162 {dimension_numbers = #tpu.dot_dimension_numbers<[1], [0], [0], [1], [0, 0, 1, 1], [], []>} : vector<2x64xbf16>, vector<64x32xbf16>, vector<2x32xf32> -> vector<2x32xf32>
    %196 = arith.addf %192, %195 : vector<2x32xf32>
    %197 = vector.extract_strided_slice %163 {offsets = [16, 0], sizes = [2, 64], strides = [1, 1]} : vector<18x64xbf16> to vector<2x64xbf16>
    %c512 = arith.constant 512 : index
    %c0_163 = arith.constant 0 : index
    %198 = vector.load %arg3[%c512, %c0_163] : memref<576x32xbf16, #tpu.memory_space<vmem>>, vector<64x32xbf16>
    %cst_164 = arith.constant dense<0.000000e+00> : vector<2x32xf32>
    %199 = tpu.matmul %197, %198, %cst_164 {dimension_numbers = #tpu.dot_dimension_numbers<[1], [0], [0], [1], [0, 0, 1, 1], [], []>} : vector<2x64xbf16>, vector<64x32xbf16>, vector<2x32xf32> -> vector<2x32xf32>
    %200 = arith.addf %196, %199 : vector<2x32xf32>
    %201 = vector.broadcast %2 : vector<1x32xf32> to vector<2x32xf32>
    %202 = arith.addf %200, %201 : vector<2x32xf32>
    %cst_165 = arith.constant 0.000000e+00 : f32
    %203 = vector.broadcast %cst_165 : f32 to vector<2x32xf32>
    %204 = arith.maximumf %202, %203 : vector<2x32xf32>
    %205 = arith.truncf %204 : vector<2x32xf32> to vector<2x32xbf16>
    %c0_166 = arith.constant 0 : index
    %c0_167 = arith.constant 0 : index
    %206 = vector.load %arg4[%c0_166, %c0_167] : memref<32x512xbf16, #tpu.memory_space<vmem>>, vector<32x512xbf16>
    %cst_168 = arith.constant dense<0.000000e+00> : vector<2x512xf32>
    %207 = tpu.matmul %205, %206, %cst_168 {dimension_numbers = #tpu.dot_dimension_numbers<[1], [0], [0], [1], [0, 0, 1, 1], [], []>} : vector<2x32xbf16>, vector<32x512xbf16>, vector<2x512xf32> -> vector<2x512xf32>
    %c0_169 = arith.constant 0 : index
    %c0_170 = arith.constant 0 : index
    %208 = vector.load %arg7[%c0_169, %c0_170] : memref<1x512xf32, #tpu.memory_space<vmem>>, vector<1x512xf32>
    %209 = vector.broadcast %208 : vector<1x512xf32> to vector<2x512xf32>
    %210 = arith.addf %207, %209 : vector<2x512xf32>
    %cst_171 = arith.constant 0.000000e+00 : f32
    %211 = vector.broadcast %cst_171 : f32 to vector<2x512xf32>
    %212 = arith.maximumf %210, %211 : vector<2x512xf32>
    %c0_172 = arith.constant 0 : index
    %c0_173 = arith.constant 0 : index
    %213 = vector.load %arg5[%c0_172, %c0_173] : memref<512x128xf32, #tpu.memory_space<vmem>>, vector<512x128xf32>
    %cst_174 = arith.constant dense<0.000000e+00> : vector<2x128xf32>
    %214 = tpu.matmul %212, %213, %cst_174 {dimension_numbers = #tpu.dot_dimension_numbers<[1], [0], [0], [1], [0, 0, 1, 1], [], []>, precision = #tpu.contract_precision<fp32>} : vector<2x512xf32>, vector<512x128xf32>, vector<2x128xf32> -> vector<2x128xf32>
    %215 = vector.broadcast %3 : vector<1x128xf32> to vector<2x128xf32>
    %216 = arith.addf %214, %215 : vector<2x128xf32>
    %c0_175 = arith.constant 0 : index
    %c0_176 = arith.constant 0 : index
    %217 = vector.load %arg8[%c0_175, %c0_176] : memref<2x128xf32, #tpu.memory_space<vmem>>, vector<2x128xf32>
    tpu.vector_store %arg8[%c0_175, %c0_176], %216 {strides = array<i32>} : memref<2x128xf32, #tpu.memory_space<vmem>>, vector<2x128xf32>,
    return
  }
}

</mosaic_0001>

<llo_original>
// kernel: ac_forward.1
$region0: #{ac_forward.1}
  #allocation0 [shape = 'u32[]', space=smem, size = 0x4, offset = 0x4, fixed_abs, tag = 'smem constant byte address 0x4 - core index']
  #allocation1 [shape = 'u32[144,128]{1,0:T(1,128)}', space=vmem, size = 0x12000, scoped, tag = 'internal scratch']
  #allocation2 [shape = 'f32[18,512]{1,0:T(8,128)}', space=vmem, size = 0xc000, scoped, tag = 'scratch operand']
  %s0 = inlined_call_operand.vmem [shape: bf16[48,640], index: 0, kind: input, shape index: {}]
  %s1 = inlined_call_operand.vmem [shape: bf16[640,128], index: 1, kind: input, shape index: {}]
  %s2 = inlined_call_operand.vmem [shape: bf16[512,64], index: 2, kind: input, shape index: {}]
  %s3 = inlined_call_operand.vmem [shape: bf16[576,32], index: 3, kind: input, shape index: {}]
  %s4 = inlined_call_operand.vmem [shape: bf16[32,512], index: 4, kind: input, shape index: {}]
  %s5 = inlined_call_operand.vmem [shape: f32[512,128], index: 5, kind: input, shape index: {}]
  %s6 = inlined_call_operand.vmem [shape: f32[4,128], index: 6, kind: input, shape index: {}]
  %s7 = inlined_call_operand.vmem [shape: f32[1,512], index: 7, kind: input, shape index: {}]
  %s8 = inlined_call_operand.vmem [shape: f32[2,128], index: 8, kind: output, shape index: {}]
  %s9 = sld [smem:[#allocation0]]
  $region42: #{ac_forward.1} parent=0
    _
  %s11 = ssub.s32 1, %s9
  %s12 = scalar_select 0, %s11, %s9
  // Predicated region
  $region2: #{ac_forward.1} parent=0 // pred_check
    _
  $region3: #{ac_forward.1} parent=0 // pred_check_branch
    %14 = sbr.rel (0) target = $region5
  $region4: #{ac_forward.1} parent=0 // pred_region
    _
  $region5: #{ac_forward.1} parent=0 // pred_fallthru
    _
  // Predicated region
  $region6: #{ac_forward.1} parent=0 // pred_check
    _
  $region7: #{ac_forward.1} parent=0 // pred_check_branch
    %16 = sbr.rel (0) target = $region9
  $region8: #{ac_forward.1} parent=0 // pred_region
    _
  $region9: #{ac_forward.1} parent=0 // pred_fallthru
    _
  // Predicated region
  $region10: #{ac_forward.1} parent=0 // pred_check
    _
  $region11: #{ac_forward.1} parent=0 // pred_check_branch
    %18 = sbr.rel (0) target = $region13
  $region12: #{ac_forward.1} parent=0 // pred_region
    _
  $region13: #{ac_forward.1} parent=0 // pred_fallthru
    _
  // Predicated region
  $region14: #{ac_forward.1} parent=0 // pred_check
    _
  $region15: #{ac_forward.1} parent=0 // pred_check_branch
    %20 = sbr.rel (0) target = $region17
  $region16: #{ac_forward.1} parent=0 // pred_region
    _
  $region17: #{ac_forward.1} parent=0 // pred_fallthru
    _
  // Predicated region
  $region18: #{ac_forward.1} parent=0 // pred_check
    _
  $region19: #{ac_forward.1} parent=0 // pred_check_branch
    %22 = sbr.rel (0) target = $region21
  $region20: #{ac_forward.1} parent=0 // pred_region
    _
  $region21: #{ac_forward.1} parent=0 // pred_fallthru
    _
  // Predicated region
  $region22: #{ac_forward.1} parent=0 // pred_check
    _
  $region23: #{ac_forward.1} parent=0 // pred_check_branch
    %24 = sbr.rel (0) target = $region25
  $region24: #{ac_forward.1} parent=0 // pred_region
    _
  $region25: #{ac_forward.1} parent=0 // pred_fallthru
    _
  // Predicated region
  $region26: #{ac_forward.1} parent=0 // pred_check
    _
  $region27: #{ac_forward.1} parent=0 // pred_check_branch
    %26 = sbr.rel (0) target = $region29
  $region28: #{ac_forward.1} parent=0 // pred_region
    _
  $region29: #{ac_forward.1} parent=0 // pred_fallthru
    _
  // Predicated region
  $region30: #{ac_forward.1} parent=0 // pred_check
    _
  $region31: #{ac_forward.1} parent=0 // pred_check_branch
    %28 = sbr.rel (0) target = $region33
  $region32: #{ac_forward.1} parent=0 // pred_region
    _
  $region33: #{ac_forward.1} parent=0 // pred_fallthru
    _
  %v30 = vld [vmem:[%s6] sm:$0x1]
  %v31 = vld [vmem:[%s6 + $0x1] sm:$0x1]
  %v32 = vld [vmem:[%s6 + $0x2] sm:$0x1]
  %v33 = vld [vmem:[%s6 + $0x3] sm:$0x1]
  %v34 = vld [vmem:[%s0] sm:$0xff]
  %v35 = vld [vmem:[%s0 + $0x8] sm:$0xff]
  %v36 = vld [vmem:[%s0 + $0x10] sm:$0xf]
  %v37 = vld [vmem:[%s0 + $0x14] sm:$0xff]
  %v38 = vld [vmem:[%s0 + $0x1c] sm:$0xff]
  %v39 = vld [vmem:[%s0 + $0x24] sm:$0xf]
  %v40 = vld [vmem:[%s0 + $0x28] sm:$0xff]
  %v41 = vld [vmem:[%s0 + $0x30] sm:$0xff]
  %v42 = vld [vmem:[%s0 + $0x38] sm:$0xf]
  %v43 = vld [vmem:[%s0 + $0x3c] sm:$0xff]
  %v44 = vld [vmem:[%s0 + $0x44] sm:$0xff]
  %v45 = vld [vmem:[%s0 + $0x4c] sm:$0xf]
  %v46 = vld [vmem:[%s0 + $0x50] sm:$0xff]
  %v47 = vld [vmem:[%s0 + $0x58] sm:$0xff]
  %v48 = vld [vmem:[%s0 + $0x60] sm:$0xf]
  %v49 = vld [vmem:[%s0 + $0x64] sm:$0xff]
  %v50 = vld [vmem:[%s0 + $0x6c] sm:$0xff]
  %v51 = vld [vmem:[%s0 + $0x74] sm:$0xf]
  %v52 = vld [vmem:[%s1] sm:$0xf]
  %v53 = vld [vmem:[%s1 + $0x4] sm:$0xf]
  %v54 = vld [vmem:[%s1 + $0x8] sm:$0xf]
  %v55 = vld [vmem:[%s1 + $0xc] sm:$0xf]
  %v56 = vld [vmem:[%s1 + $0x10] sm:$0xf]
  %v57 = vld [vmem:[%s1 + $0x14] sm:$0xf]
  %v58 = vld [vmem:[%s1 + $0x18] sm:$0xf]
  %v59 = vld [vmem:[%s1 + $0x1c] sm:$0xf]
  %v60 = vld [vmem:[%s1 + $0x20] sm:$0xf]
  %v61 = vld [vmem:[%s1 + $0x24] sm:$0xf]
  %v62 = vld [vmem:[%s1 + $0x28] sm:$0xf]
  %v63 = vld [vmem:[%s1 + $0x2c] sm:$0xf]
  %v64 = vld [vmem:[%s1 + $0x30] sm:$0xf]
  %v65 = vld [vmem:[%s1 + $0x34] sm:$0xf]
  %v66 = vld [vmem:[%s1 + $0x38] sm:$0xf]
  %v67 = vld [vmem:[%s1 + $0x3c] sm:$0xf]
  %v68 = vld [vmem:[%s1 + $0x40] sm:$0xf]
  %v69 = vld [vmem:[%s1 + $0x44] sm:$0xf]
  %v70 = vld [vmem:[%s1 + $0x48] sm:$0xf]
  %v71 = vld [vmem:[%s1 + $0x4c] sm:$0xf]
  %v72 = vld [vmem:[%s1 + $0x50] sm:$0xf]
  %v73 = vld [vmem:[%s1 + $0x54] sm:$0xf]
  %v74 = vld [vmem:[%s1 + $0x58] sm:$0xf]
  %v75 = vld [vmem:[%s1 + $0x5c] sm:$0xf]
  %v76 = vld [vmem:[%s1 + $0x60] sm:$0xf]
  %v77 = vld [vmem:[%s1 + $0x64] sm:$0xf]
  %v78 = vld [vmem:[%s1 + $0x68] sm:$0xf]
  %v79 = vld [vmem:[%s1 + $0x6c] sm:$0xf]
  %v80 = vld [vmem:[%s1 + $0x70] sm:$0xf]
  %v81 = vld [vmem:[%s1 + $0x74] sm:$0xf]
  %v82 = vld [vmem:[%s1 + $0x78] sm:$0xf]
  %v83 = vld [vmem:[%s1 + $0x7c] sm:$0xf]
  %v84 = vld [vmem:[%s1 + $0x80] sm:$0xf]
  %v85 = vld [vmem:[%s1 + $0x84] sm:$0xf]
  %v86 = vld [vmem:[%s1 + $0x88] sm:$0xf]
  %v87 = vld [vmem:[%s1 + $0x8c] sm:$0xf]
  %v88 = vld [vmem:[%s1 + $0x90] sm:$0xf]
  %v89 = vld [vmem:[%s1 + $0x94] sm:$0xf]
  %v90 = vld [vmem:[%s1 + $0x98] sm:$0xf]
  %v91 = vld [vmem:[%s1 + $0x9c] sm:$0xf]
  %v92 = vld [vmem:[%s1 + $0xa0] sm:$0xf]
  %v93 = vld [vmem:[%s1 + $0xa4] sm:$0xf]
  %v94 = vld [vmem:[%s1 + $0xa8] sm:$0xf]
  %v95 = vld [vmem:[%s1 + $0xac] sm:$0xf]
  %v96 = vld [vmem:[%s1 + $0xb0] sm:$0xf]
  %v97 = vld [vmem:[%s1 + $0xb4] sm:$0xf]
  %v98 = vld [vmem:[%s1 + $0xb8] sm:$0xf]
  %v99 = vld [vmem:[%s1 + $0xbc] sm:$0xf]
  %v100 = vld [vmem:[%s1 + $0xc0] sm:$0xf]
  %v101 = vld [vmem:[%s1 + $0xc4] sm:$0xf]
  %v102 = vld [vmem:[%s1 + $0xc8] sm:$0xf]
  %v103 = vld [vmem:[%s1 + $0xcc] sm:$0xf]
  %v104 = vld [vmem:[%s1 + $0xd0] sm:$0xf]
  %v105 = vld [vmem:[%s1 + $0xd4] sm:$0xf]
  %v106 = vld [vmem:[%s1 + $0xd8] sm:$0xf]
  %v107 = vld [vmem:[%s1 + $0xdc] sm:$0xf]
  %v108 = vld [vmem:[%s1 + $0xe0] sm:$0xf]
  %v109 = vld [vmem:[%s1 + $0xe4] sm:$0xf]
  %v110 = vld [vmem:[%s1 + $0xe8] sm:$0xf]
  %v111 = vld [vmem:[%s1 + $0xec] sm:$0xf]
  %v112 = vld [vmem:[%s1 + $0xf0] sm:$0xf]
  %v113 = vld [vmem:[%s1 + $0xf4] sm:$0xf]
  %v114 = vld [vmem:[%s1 + $0xf8] sm:$0xf]
  %v115 = vld [vmem:[%s1 + $0xfc] sm:$0xf]
  %v116 = vld [vmem:[%s1 + $0x100] sm:$0xf]
  %v117 = vld [vmem:[%s1 + $0x104] sm:$0xf]
  %v118 = vld [vmem:[%s1 + $0x108] sm:$0xf]
  %v119 = vld [vmem:[%s1 + $0x10c] sm:$0xf]
  %v120 = vld [vmem:[%s1 + $0x110] sm:$0xf]
  %v121 = vld [vmem:[%s1 + $0x114] sm:$0xf]
  %v122 = vld [vmem:[%s1 + $0x118] sm:$0xf]
  %v123 = vld [vmem:[%s1 + $0x11c] sm:$0xf]
  %v124 = vld [vmem:[%s1 + $0x120] sm:$0xf]
  %v125 = vld [vmem:[%s1 + $0x124] sm:$0xf]
  %v126 = vld [vmem:[%s1 + $0x128] sm:$0xf]
  %v127 = vld [vmem:[%s1 + $0x12c] sm:$0xf]
  %v128 = vld [vmem:[%s1 + $0x130] sm:$0xf]
  %v129 = vld [vmem:[%s1 + $0x134] sm:$0xf]
  %v130 = vld [vmem:[%s1 + $0x138] sm:$0xf]
  %v131 = vld [vmem:[%s1 + $0x13c] sm:$0xf]
  %v132 = vlaneseq
  %v133 = vshrl.u32 %v132, 7
  %v134 = vsub.s32 0, %v133
  %v135 = vrot.slane %v30, %v134
  %v154 = vunpack.c.l.b16 %v34
  %v155 = vunpack.c.h.b16 %v34
  %v156 = vunpack.c.l.b16 %v35
  %v157 = vunpack.c.h.b16 %v35
  %v158 = vunpack.c.l.b16 %v36
  %v159 = vunpack.c.l.b16 %v37
  %v160 = vunpack.c.h.b16 %v37
  %v161 = vunpack.c.l.b16 %v38
  %v162 = vunpack.c.h.b16 %v38
  %v163 = vunpack.c.l.b16 %v39
  %v164 = vunpack.c.l.b16 %v40
  %v165 = vunpack.c.h.b16 %v40
  %v166 = vunpack.c.l.b16 %v41
  %v167 = vunpack.c.h.b16 %v41
  %v168 = vunpack.c.l.b16 %v42
  %v169 = vunpack.c.l.b16 %v43
  %v170 = vunpack.c.h.b16 %v43
  %v171 = vunpack.c.l.b16 %v44
  %v172 = vunpack.c.h.b16 %v44
  %v173 = vunpack.c.l.b16 %v45
  %v174 = vunpack.c.l.b16 %v46
  %v175 = vunpack.c.h.b16 %v46
  %v176 = vunpack.c.l.b16 %v47
  %v177 = vunpack.c.h.b16 %v47
  %v178 = vunpack.c.l.b16 %v48
  %v179 = vunpack.c.l.b16 %v49
  %v180 = vunpack.c.h.b16 %v49
  %v181 = vunpack.c.l.b16 %v50
  %v182 = vunpack.c.h.b16 %v50
  %v183 = vunpack.c.l.b16 %v51
  %v184 = vpack.c.b16 %v159, %v154
  %v185 = vpack.c.b16 %v160, %v155
  %v186 = vpack.c.b16 %v161, %v156
  %v187 = vpack.c.b16 %v162, %v157
  %v188 = vpack.c.b16 %v163, %v158
  %v189 = vpack.c.b16 %v169, %v164
  %v190 = vpack.c.b16 %v170, %v165
  %v191 = vpack.c.b16 %v171, %v166
  %v192 = vpack.c.b16 %v172, %v167
  %v193 = vpack.c.b16 %v173, %v168
  %v194 = vpack.c.b16 %v179, %v174
  %v195 = vpack.c.b16 %v180, %v175
  %v196 = vpack.c.b16 %v181, %v176
  %v197 = vpack.c.b16 %v182, %v177
  %v198 = vpack.c.b16 %v183, %v178
  %v294 = vunpack.c.l.b16 %v52
  %v295 = vunpack.c.l.b16 %v53
  %v296 = vunpack.c.l.b16 %v54
  %v297 = vunpack.c.l.b16 %v55
  %v298 = vunpack.c.l.b16 %v56
  %v299 = vunpack.c.l.b16 %v57
  %v300 = vunpack.c.l.b16 %v58
  %v301 = vunpack.c.l.b16 %v59
  %v302 = vunpack.c.l.b16 %v60
  %v303 = vunpack.c.l.b16 %v61
  %v304 = vunpack.c.l.b16 %v62
  %v305 = vunpack.c.l.b16 %v63
  %v306 = vunpack.c.l.b16 %v64
  %v307 = vunpack.c.l.b16 %v65
  %v308 = vunpack.c.l.b16 %v66
  %v309 = vunpack.c.l.b16 %v67
  %v310 = vunpack.c.l.b16 %v68
  %v311 = vunpack.c.l.b16 %v69
  %v312 = vunpack.c.l.b16 %v70
  %v313 = vunpack.c.l.b16 %v71
  %v314 = vunpack.c.l.b16 %v72
  %v315 = vunpack.c.l.b16 %v73
  %v316 = vunpack.c.l.b16 %v74
  %v317 = vunpack.c.l.b16 %v75
  %v318 = vunpack.c.l.b16 %v76
  %v319 = vunpack.c.l.b16 %v77
  %v320 = vunpack.c.l.b16 %v78
  %v321 = vunpack.c.l.b16 %v79
  %v322 = vunpack.c.l.b16 %v80
  %v323 = vunpack.c.l.b16 %v81
  %v324 = vunpack.c.l.b16 %v82
  %v325 = vunpack.c.l.b16 %v83
  %v326 = vunpack.c.l.b16 %v84
  %v327 = vunpack.c.l.b16 %v85
  %v328 = vunpack.c.l.b16 %v86
  %v329 = vunpack.c.l.b16 %v87
  %v330 = vunpack.c.l.b16 %v88
  %v331 = vunpack.c.l.b16 %v89
  %v332 = vunpack.c.l.b16 %v90
  %v333 = vunpack.c.l.b16 %v91
  %v334 = vunpack.c.l.b16 %v92
  %v335 = vunpack.c.l.b16 %v93
  %v336 = vunpack.c.l.b16 %v94
  %v337 = vunpack.c.l.b16 %v95
  %v338 = vunpack.c.l.b16 %v96
  %v339 = vunpack.c.l.b16 %v97
  %v340 = vunpack.c.l.b16 %v98
  %v341 = vunpack.c.l.b16 %v99
  %v342 = vunpack.c.l.b16 %v100
  %v343 = vunpack.c.l.b16 %v101
  %v344 = vunpack.c.l.b16 %v102
  %v345 = vunpack.c.l.b16 %v103
  %v346 = vunpack.c.l.b16 %v104
  %v347 = vunpack.c.l.b16 %v105
  %v348 = vunpack.c.l.b16 %v106
  %v349 = vunpack.c.l.b16 %v107
  %v350 = vunpack.c.l.b16 %v108
  %v351 = vunpack.c.l.b16 %v109
  %v352 = vunpack.c.l.b16 %v110
  %v353 = vunpack.c.l.b16 %v111
  %v354 = vunpack.c.l.b16 %v112
  %v355 = vunpack.c.l.b16 %v113
  %v356 = vunpack.c.l.b16 %v114
  %v357 = vunpack.c.l.b16 %v115
  %v358 = vunpack.c.l.b16 %v116
  %v359 = vunpack.c.l.b16 %v117
  %v360 = vunpack.c.l.b16 %v118
  %v361 = vunpack.c.l.b16 %v119
  %v362 = vunpack.c.l.b16 %v120
  %v363 = vunpack.c.l.b16 %v121
  %v364 = vunpack.c.l.b16 %v122
  %v365 = vunpack.c.l.b16 %v123
  %v366 = vunpack.c.l.b16 %v124
  %v367 = vunpack.c.l.b16 %v125
  %v368 = vunpack.c.l.b16 %v126
  %v369 = vunpack.c.l.b16 %v127
  %v370 = vunpack.c.l.b16 %v128
  %v371 = vunpack.c.l.b16 %v129
  %v372 = vunpack.c.l.b16 %v130
  %v373 = vunpack.c.l.b16 %v131
  %v374 = vpack.c.b16 %v295, %v294
  %v375 = vpack.c.b16 %v297, %v296
  %v376 = vpack.c.b16 %v299, %v298
  %v377 = vpack.c.b16 %v301, %v300
  %v378 = vpack.c.b16 %v303, %v302
  %v379 = vpack.c.b16 %v305, %v304
  %v380 = vpack.c.b16 %v307, %v306
  %v381 = vpack.c.b16 %v309, %v308
  %v382 = vpack.c.b16 %v311, %v310
  %v383 = vpack.c.b16 %v313, %v312
  %v384 = vpack.c.b16 %v315, %v314
  %v385 = vpack.c.b16 %v317, %v316
  %v386 = vpack.c.b16 %v319, %v318
  %v387 = vpack.c.b16 %v321, %v320
  %v388 = vpack.c.b16 %v323, %v322
  %v389 = vpack.c.b16 %v325, %v324
  %v390 = vpack.c.b16 %v327, %v326
  %v391 = vpack.c.b16 %v329, %v328
  %v392 = vpack.c.b16 %v331, %v330
  %v393 = vpack.c.b16 %v333, %v332
  %v394 = vpack.c.b16 %v335, %v334
  %v395 = vpack.c.b16 %v337, %v336
  %v396 = vpack.c.b16 %v339, %v338
  %v397 = vpack.c.b16 %v341, %v340
  %v398 = vpack.c.b16 %v343, %v342
  %v399 = vpack.c.b16 %v345, %v344
  %v400 = vpack.c.b16 %v347, %v346
  %v401 = vpack.c.b16 %v349, %v348
  %v402 = vpack.c.b16 %v351, %v350
  %v403 = vpack.c.b16 %v353, %v352
  %v404 = vpack.c.b16 %v355, %v354
  %v405 = vpack.c.b16 %v357, %v356
  %v406 = vpack.c.b16 %v359, %v358
  %v407 = vpack.c.b16 %v361, %v360
  %v408 = vpack.c.b16 %v363, %v362
  %v409 = vpack.c.b16 %v365, %v364
  %v410 = vpack.c.b16 %v367, %v366
  %v411 = vpack.c.b16 %v369, %v368
  %v412 = vpack.c.b16 %v371, %v370
  %v413 = vpack.c.b16 %v373, %v372
  %454 = vmatprep.subr.bf16.mxu0 0
  %455 = vmatpush1.bf16.msra.mxu0 %v374
  %456 = vmatprep.subr.bf16.mxu0 0
  %457 = vmatpush1.bf16.msra.mxu0 %v375
  %458 = vmatprep.subr.bf16.mxu0 0
  %459 = vmatpush1.bf16.msra.mxu0 %v376
  %460 = vmatprep.subr.bf16.mxu0 0
  %461 = vmatpush1.bf16.msra.mxu0 %v377
  %462 = vmatprep.subr.bf16.mxu0 0
  %463 = vmatpush1.bf16.msra.mxu0 %v378
  %464 = vmatprep.subr.bf16.mxu0 0
  %465 = vmatpush1.bf16.msra.mxu0 %v379
  %466 = vmatprep.subr.bf16.mxu0 0
  %467 = vmatpush1.bf16.msra.mxu0 %v380
  %468 = vmatprep.subr.bf16.mxu0 0
  %469 = vmatpush1.bf16.msra.mxu0 %v381
  %470 = vmatprep.subr.bf16.mxu0 0
  %471 = vmatpush1.bf16.msra.mxu0 %v382
  %472 = vmatprep.subr.bf16.mxu0 0
  %473 = vmatpush1.bf16.msra.mxu0 %v383
  %474 = vmatprep.subr.bf16.mxu0 0
  %475 = vmatpush1.bf16.msra.mxu0 %v384
  %476 = vmatprep.subr.bf16.mxu0 0
  %477 = vmatpush1.bf16.msra.mxu0 %v385
  %478 = vmatprep.subr.bf16.mxu0 0
  %479 = vmatpush1.bf16.msra.mxu0 %v386
  %480 = vmatprep.subr.bf16.mxu0 0
  %481 = vmatpush1.bf16.msra.mxu0 %v387
  %482 = vmatprep.subr.bf16.mxu0 0
  %483 = vmatpush1.bf16.msra.mxu0 %v388
  %484 = vmatprep.subr.bf16.mxu0 0
  %485 = vmatpush1.bf16.msra.mxu0 %v389
  %486 = vmatprep.mubr.bf16.mxu0 %v185
  %487 = vmatmul.mubr.bf16.gmra.mrb[0].mxu0 %v184
  %v488 = vpop.f32.mrb[0].mxu0
  %v489 = vadd.f32 %v135, %v488
  %v490 = vpop.f32.mrb[0].mxu0
  %v491 = vpop.f32.mrb[0].mxu0
  %v492 = vadd.f32 %v135, %v491
  %v493 = vpop.f32.mrb[0].mxu0
  %494 = vmatprep.mubr.bf16.mxu0 %v190
  %495 = vmatmul.mubr.bf16.gmra.mrb[0].mxu0 %v189
  %v496 = vpop.f32.mrb[0].mxu0
  %v497 = vadd.f32 %v135, %v496
  %v498 = vpop.f32.mrb[0].mxu0
  %v499 = vpop.f32.mrb[0].mxu0
  %v500 = vadd.f32 %v135, %v499
  %v501 = vpop.f32.mrb[0].mxu0
  %502 = vmatprep.mubr.bf16.mxu0 %v195
  %503 = vmatmul.mubr.bf16.gmra.mrb[0].mxu0 %v194
  %v504 = vpop.f32.mrb[0].mxu0
  %v505 = vadd.f32 %v135, %v504
  %v506 = vpop.f32.mrb[0].mxu0
  %v507 = vpop.f32.mrb[0].mxu0
  %v508 = vadd.f32 %v135, %v507
  %v509 = vpop.f32.mrb[0].mxu0
  %510 = vdwg.mxu0
  %511 = vmatprep.subr.bf16.mxu0 0
  %512 = vmatpush1.bf16.msra.mxu0 %v390
  %513 = vmatprep.subr.bf16.mxu0 0
  %514 = vmatpush1.bf16.msra.mxu0 %v391
  %515 = vmatprep.subr.bf16.mxu0 0
  %516 = vmatpush1.bf16.msra.mxu0 %v392
  %517 = vmatprep.subr.bf16.mxu0 0
  %518 = vmatpush1.bf16.msra.mxu0 %v393
  %519 = vmatprep.subr.bf16.mxu0 0
  %520 = vmatpush1.bf16.msra.mxu0 %v394
  %521 = vmatprep.subr.bf16.mxu0 0
  %522 = vmatpush1.bf16.msra.mxu0 %v395
  %523 = vmatprep.subr.bf16.mxu0 0
  %524 = vmatpush1.bf16.msra.mxu0 %v396
  %525 = vmatprep.subr.bf16.mxu0 0
  %526 = vmatpush1.bf16.msra.mxu0 %v397
  %527 = vmatprep.subr.bf16.mxu0 0
  %528 = vmatpush1.bf16.msra.mxu0 %v398
  %529 = vmatprep.subr.bf16.mxu0 0
  %530 = vmatpush1.bf16.msra.mxu0 %v399
  %531 = vmatprep.subr.bf16.mxu0 0
  %532 = vmatpush1.bf16.msra.mxu0 %v400
  %533 = vmatprep.subr.bf16.mxu0 0
  %534 = vmatpush1.bf16.msra.mxu0 %v401
  %535 = vmatprep.subr.bf16.mxu0 0
  %536 = vmatpush1.bf16.msra.mxu0 %v402
  %537 = vmatprep.subr.bf16.mxu0 0
  %538 = vmatpush1.bf16.msra.mxu0 %v403
  %539 = vmatprep.subr.bf16.mxu0 0
  %540 = vmatpush1.bf16.msra.mxu0 %v404
  %541 = vmatprep.subr.bf16.mxu0 0
  %542 = vmatpush1.bf16.msra.mxu0 %v405
  %543 = vmatprep.mubr.bf16.mxu0 %v187
  %544 = vmatmul.mubr.bf16.gmra.mrb[0].mxu0 %v186
  %v545 = vpop.f32.mrb[0].mxu0
  %v546 = vadd.f32 %v489, %v545
  %v547 = vpop.f32.mrb[0].mxu0
  %v548 = vpop.f32.mrb[0].mxu0
  %v549 = vadd.f32 %v492, %v548
  %v550 = vpop.f32.mrb[0].mxu0
  %551 = vmatprep.mubr.bf16.mxu0 %v192
  %552 = vmatmul.mubr.bf16.gmra.mrb[0].mxu0 %v191
  %v553 = vpop.f32.mrb[0].mxu0
  %v554 = vadd.f32 %v497, %v553
  %v555 = vpop.f32.mrb[0].mxu0
  %v556 = vpop.f32.mrb[0].mxu0
  %v557 = vadd.f32 %v500, %v556
  %v558 = vpop.f32.mrb[0].mxu0
  %559 = vmatprep.mubr.bf16.mxu0 %v197
  %560 = vmatmul.mubr.bf16.gmra.mrb[0].mxu0 %v196
  %v561 = vpop.f32.mrb[0].mxu0
  %v562 = vadd.f32 %v505, %v561
  %v563 = vpop.f32.mrb[0].mxu0
  %v564 = vpop.f32.mrb[0].mxu0
  %v565 = vadd.f32 %v508, %v564
  %v566 = vpop.f32.mrb[0].mxu0
  %567 = vdwg.mxu0
  %568 = vmatprep.subr.bf16.mxu0 0
  %569 = vmatpush1.bf16.msra.mxu0 %v406
  %570 = vmatprep.subr.bf16.mxu0 0
  %571 = vmatpush1.bf16.msra.mxu0 %v407
  %572 = vmatprep.subr.bf16.mxu0 0
  %573 = vmatpush1.bf16.msra.mxu0 %v408
  %574 = vmatprep.subr.bf16.mxu0 0
  %575 = vmatpush1.bf16.msra.mxu0 %v409
  %576 = vmatprep.subr.bf16.mxu0 0
  %577 = vmatpush1.bf16.msra.mxu0 %v410
  %578 = vmatprep.subr.bf16.mxu0 0
  %579 = vmatpush1.bf16.msra.mxu0 %v411
  %580 = vmatprep.subr.bf16.mxu0 0
  %581 = vmatpush1.bf16.msra.mxu0 %v412
  %582 = vmatprep.subr.bf16.mxu0 0
  %583 = vmatpush1.bf16.msra.mxu0 %v413
  %584 = vmatprep.subr.bf16.mxu0 0
  %585 = vmatpush1.bf16.msra.mxu0 0
  %586 = vmatprep.subr.bf16.mxu0 0
  %587 = vmatpush1.bf16.msra.mxu0 0
  %588 = vmatprep.subr.bf16.mxu0 0
  %589 = vmatpush1.bf16.msra.mxu0 0
  %590 = vmatprep.subr.bf16.mxu0 0
  %591 = vmatpush1.bf16.msra.mxu0 0
  %592 = vmatprep.subr.bf16.mxu0 0
  %593 = vmatpush1.bf16.msra.mxu0 0
  %594 = vmatprep.subr.bf16.mxu0 0
  %595 = vmatpush1.bf16.msra.mxu0 0
  %596 = vmatprep.subr.bf16.mxu0 0
  %597 = vmatpush1.bf16.msra.mxu0 0
  %598 = vmatprep.subr.bf16.mxu0 0
  %599 = vmatpush1.bf16.msra.mxu0 0
  %600 = vmatprep.mubr.bf16.mxu0 0
  %601 = vmatmul.mubr.bf16.gmra.mrb[0].mxu0 %v188
  %v602 = vpop.f32.mrb[0].mxu0
  %v603 = vadd.f32 %v546, %v602
  %v604 = vpop.f32.mrb[0].mxu0
  %v605 = vpop.f32.mrb[0].mxu0
  %v606 = vadd.f32 %v549, %v605
  %v607 = vpop.f32.mrb[0].mxu0
  %608 = vmatprep.mubr.bf16.mxu0 0
  %609 = vmatmul.mubr.bf16.gmra.mrb[0].mxu0 %v193
  %v610 = vpop.f32.mrb[0].mxu0
  %v611 = vadd.f32 %v554, %v610
  %v612 = vpop.f32.mrb[0].mxu0
  %v613 = vpop.f32.mrb[0].mxu0
  %v614 = vadd.f32 %v557, %v613
  %v615 = vpop.f32.mrb[0].mxu0
  %616 = vmatprep.mubr.bf16.mxu0 0
  %617 = vmatmul.mubr.bf16.gmra.mrb[0].mxu0 %v198
  %v618 = vpop.f32.mrb[0].mxu0
  %v619 = vadd.f32 %v562, %v618
  %v620 = vpop.f32.mrb[0].mxu0
  %v621 = vpop.f32.mrb[0].mxu0
  %v622 = vadd.f32 %v565, %v621
  %v623 = vpop.f32.mrb[0].mxu0
  %624 = vdwg.mxu0
  %v625 = vmax.f32 %v603, 0.0
  %v626 = vmax.f32 %v606, 0.0
  %v627 = vmax.f32 %v611, 0.0
  %v628 = vmax.f32 %v614, 0.0
  %v629 = vmax.f32 %v619, 0.0
  %v630 = vmax.f32 %v622, 0.0
  %631 = vst [vmem:[#allocation2] sm:$0x1] %v625
  %v633 = vrot.slane %v625, 1
  %635 = vst [vmem:[#allocation2 + $0x2] sm:$0x1] %v633
  %v636 = vrot.slane %v625, 2
  %638 = vst [vmem:[#allocation2 + $0x4] sm:$0x1] %v636
  %v639 = vrot.slane %v625, 3
  %641 = vst [vmem:[#allocation2 + $0x8] sm:$0x1] %v639
  %v642 = vrot.slane %v625, 4
  %644 = vst [vmem:[#allocation2 + $0xa] sm:$0x1] %v642
  %v645 = vrot.slane %v625, 5
  %647 = vst [vmem:[#allocation2 + $0xc] sm:$0x1] %v645
  %v648 = vrot.slane %v625, 6
  %650 = vst [vmem:[#allocation2 + $0x10] sm:$0x1] %v648
  %v651 = vrot.slane %v625, 7
  %653 = vst [vmem:[#allocation2 + $0x12] sm:$0x1] %v651
  %654 = vst [vmem:[#allocation2 + $0x14] sm:$0x1] %v626
  %v656 = vrot.slane %v626, 1
  %658 = vst [vmem:[#allocation2 + $0x18] sm:$0x1] %v656
  %v659 = vrot.slane %v626, 2
  %661 = vst [vmem:[#allocation2 + $0x1a] sm:$0x1] %v659
  %v662 = vrot.slane %v626, 3
  %664 = vst [vmem:[#allocation2 + $0x1c] sm:$0x1] %v662
  %665 = vst [vmem:[#allocation2 + $0x6] sm:$0x1] %v648
  %666 = vst [vmem:[#allocation2 + $0x20] sm:$0x1] %v651
  %667 = vst [vmem:[#allocation2 + $0x22] sm:$0x1] %v626
  %668 = vst [vmem:[#allocation2 + $0xe] sm:$0x1] %v656
  %669 = vst [vmem:[#allocation2 + $0x28] sm:$0x1] %v659
  %670 = vst [vmem:[#allocation2 + $0x2a] sm:$0x1] %v662
  %v671 = vrot.slane %v626, 4
  %673 = vst [vmem:[#allocation2 + $0x16] sm:$0x1] %v671
  %v674 = vrot.slane %v626, 5
  %676 = vst [vmem:[#allocation2 + $0x30] sm:$0x1] %v674
  %v677 = vrot.slane %v626, 6
  %679 = vst [vmem:[#allocation2 + $0x32] sm:$0x1] %v677
  %v680 = vrot.slane %v626, 7
  %682 = vst [vmem:[#allocation2 + $0x1e] sm:$0x1] %v680
  %683 = vst [vmem:[#allocation2 + $0x38] sm:$0x1] %v627
  %v685 = vrot.slane %v627, 1
  %687 = vst [vmem:[#allocation2 + $0x3a] sm:$0x1] %v685
  %688 = vst [vmem:[#allocation2 + $0x24] sm:$0x1] %v671
  %689 = vst [vmem:[#allocation2 + $0x26] sm:$0x1] %v674
  %690 = vst [vmem:[#allocation2 + $0x40] sm:$0x1] %v677
  %691 = vst [vmem:[#allocation2 + $0x2c] sm:$0x1] %v680
  %692 = vst [vmem:[#allocation2 + $0x2e] sm:$0x1] %v627
  %693 = vst [vmem:[#allocation2 + $0x48] sm:$0x1] %v685
  %v694 = vrot.slane %v627, 2
  %696 = vst [vmem:[#allocation2 + $0x34] sm:$0x1] %v694
  %v697 = vrot.slane %v627, 3
  %699 = vst [vmem:[#allocation2 + $0x36] sm:$0x1] %v697
  %v700 = vrot.slane %v627, 4
  %702 = vst [vmem:[#allocation2 + $0x50] sm:$0x1] %v700
  %v703 = vrot.slane %v627, 5
  %705 = vst [vmem:[#allocation2 + $0x3c] sm:$0x1] %v703
  %v706 = vrot.slane %v627, 6
  %708 = vst [vmem:[#allocation2 + $0x3e] sm:$0x1] %v706
  %v709 = vrot.slane %v627, 7
  %711 = vst [vmem:[#allocation2 + $0x58] sm:$0x1] %v709
  %712 = vst [vmem:[#allocation2 + $0x1] sm:$0x1] %v628
  %v714 = vrot.slane %v628, 1
  %716 = vst [vmem:[#allocation2 + $0x3] sm:$0x1] %v714
  %v717 = vrot.slane %v628, 2
  %719 = vst [vmem:[#allocation2 + $0x5] sm:$0x1] %v717
  %v720 = vrot.slane %v628, 3
  %722 = vst [vmem:[#allocation2 + $0x9] sm:$0x1] %v720
  %v723 = vrot.slane %v628, 4
  %725 = vst [vmem:[#allocation2 + $0xb] sm:$0x1] %v723
  %v726 = vrot.slane %v628, 5
  %728 = vst [vmem:[#allocation2 + $0xd] sm:$0x1] %v726
  %v729 = vrot.slane %v628, 6
  %731 = vst [vmem:[#allocation2 + $0x11] sm:$0x1] %v729
  %v732 = vrot.slane %v628, 7
  %734 = vst [vmem:[#allocation2 + $0x13] sm:$0x1] %v732
  %735 = vst [vmem:[#allocation2 + $0x15] sm:$0x1] %v629
  %v737 = vrot.slane %v629, 1
  %739 = vst [vmem:[#allocation2 + $0x19] sm:$0x1] %v737
  %v740 = vrot.slane %v629, 2
  %742 = vst [vmem:[#allocation2 + $0x1b] sm:$0x1] %v740
  %v743 = vrot.slane %v629, 3
  %745 = vst [vmem:[#allocation2 + $0x1d] sm:$0x1] %v743
  %746 = vst [vmem:[#allocation2 + $0x7] sm:$0x1] %v729
  %747 = vst [vmem:[#allocation2 + $0x21] sm:$0x1] %v732
  %748 = vst [vmem:[#allocation2 + $0x23] sm:$0x1] %v629
  %749 = vst [vmem:[#allocation2 + $0xf] sm:$0x1] %v737
  %750 = vst [vmem:[#allocation2 + $0x29] sm:$0x1] %v740
  %751 = vst [vmem:[#allocation2 + $0x2b] sm:$0x1] %v743
  %v752 = vrot.slane %v629, 4
  %754 = vst [vmem:[#allocation2 + $0x17] sm:$0x1] %v752
  %v755 = vrot.slane %v629, 5
  %757 = vst [vmem:[#allocation2 + $0x31] sm:$0x1] %v755
  %v758 = vrot.slane %v629, 6
  %760 = vst [vmem:[#allocation2 + $0x33] sm:$0x1] %v758
  %v761 = vrot.slane %v629, 7
  %763 = vst [vmem:[#allocation2 + $0x1f] sm:$0x1] %v761
  %764 = vst [vmem:[#allocation2 + $0x39] sm:$0x1] %v630
  %v766 = vrot.slane %v630, 1
  %768 = vst [vmem:[#allocation2 + $0x3b] sm:$0x1] %v766
  %769 = vst [vmem:[#allocation2 + $0x25] sm:$0x1] %v752
  %770 = vst [vmem:[#allocation2 + $0x27] sm:$0x1] %v755
  %771 = vst [vmem:[#allocation2 + $0x41] sm:$0x1] %v758
  %772 = vst [vmem:[#allocation2 + $0x2d] sm:$0x1] %v761
  %773 = vst [vmem:[#allocation2 + $0x2f] sm:$0x1] %v630
  %774 = vst [vmem:[#allocation2 + $0x49] sm:$0x1] %v766
  %v775 = vrot.slane %v630, 2
  %777 = vst [vmem:[#allocation2 + $0x35] sm:$0x1] %v775
  %v778 = vrot.slane %v630, 3
  %780 = vst [vmem:[#allocation2 + $0x37] sm:$0x1] %v778
  %v781 = vrot.slane %v630, 4
  %783 = vst [vmem:[#allocation2 + $0x51] sm:$0x1] %v781
  %v784 = vrot.slane %v630, 5
  %786 = vst [vmem:[#allocation2 + $0x3d] sm:$0x1] %v784
  %v787 = vrot.slane %v630, 6
  %789 = vst [vmem:[#allocation2 + $0x3f] sm:$0x1] %v787
  %v790 = vrot.slane %v630, 7
  %792 = vst [vmem:[#allocation2 + $0x59] sm:$0x1] %v790
  %v793 = vld [vmem:[#allocation2] sm:$0xff]
  %v794 = vld [vmem:[#allocation2 + $0x8] sm:$0xff]
  %v795 = vld [vmem:[#allocation2 + $0x10] sm:$0xff]
  %v796 = vld [vmem:[#allocation2 + $0x18] sm:$0xff]
  %v797 = vld [vmem:[#allocation2 + $0x20] sm:$0xff]
  %v798 = vld [vmem:[#allocation2 + $0x28] sm:$0xff]
  %v799 = vld [vmem:[#allocation2 + $0x30] sm:$0xff]
  %v800 = vld [vmem:[#allocation2 + $0x38] sm:$0xff]
  %v801 = vld [vmem:[#allocation2 + $0x40] sm:$0x3]
  %v802 = vld [vmem:[#allocation2 + $0x48] sm:$0x3]
  %v803 = vld [vmem:[#allocation2 + $0x50] sm:$0x3]
  %v804 = vld [vmem:[#allocation2 + $0x58] sm:$0x3]
  %v805 = vpack.c.bf16 %v797, %v793
  %v806 = vpack.c.bf16 %v798, %v794
  %v807 = vpack.c.bf16 %v799, %v795
  %v808 = vpack.c.bf16 %v800, %v796
  %v809 = vpack.c.bf16 %v801, %v801
  %v810 = vpack.c.bf16 %v802, %v802
  %v811 = vpack.c.bf16 %v803, %v803
  %v812 = vpack.c.bf16 %v804, %v804
  %v813 = vld [vmem:[%s2] sm:$0xf]
  %v814 = vld [vmem:[%s2 + $0x4] sm:$0xf]
  %v815 = vld [vmem:[%s2 + $0x8] sm:$0xf]
  %v816 = vld [vmem:[%s2 + $0xc] sm:$0xf]
  %v817 = vld [vmem:[%s2 + $0x10] sm:$0xf]
  %v818 = vld [vmem:[%s2 + $0x14] sm:$0xf]
  %v819 = vld [vmem:[%s2 + $0x18] sm:$0xf]
  %v820 = vld [vmem:[%s2 + $0x1c] sm:$0xf]
  %v821 = vld [vmem:[%s2 + $0x20] sm:$0xf]
  %v822 = vld [vmem:[%s2 + $0x24] sm:$0xf]
  %v823 = vld [vmem:[%s2 + $0x28] sm:$0xf]
  %v824 = vld [vmem:[%s2 + $0x2c] sm:$0xf]
  %v825 = vld [vmem:[%s2 + $0x30] sm:$0xf]
  %v826 = vld [vmem:[%s2 + $0x34] sm:$0xf]
  %v827 = vld [vmem:[%s2 + $0x38] sm:$0xf]
  %v828 = vld [vmem:[%s2 + $0x3c] sm:$0xf]
  %v829 = vld [vmem:[%s2 + $0x40] sm:$0xf]
  %v830 = vld [vmem:[%s2 + $0x44] sm:$0xf]
  %v831 = vld [vmem:[%s2 + $0x48] sm:$0xf]
  %v832 = vld [vmem:[%s2 + $0x4c] sm:$0xf]
  %v833 = vld [vmem:[%s2 + $0x50] sm:$0xf]
  %v834 = vld [vmem:[%s2 + $0x54] sm:$0xf]
  %v835 = vld [vmem:[%s2 + $0x58] sm:$0xf]
  %v836 = vld [vmem:[%s2 + $0x5c] sm:$0xf]
  %v837 = vld [vmem:[%s2 + $0x60] sm:$0xf]
  %v838 = vld [vmem:[%s2 + $0x64] sm:$0xf]
  %v839 = vld [vmem:[%s2 + $0x68] sm:$0xf]
  %v840 = vld [vmem:[%s2 + $0x6c] sm:$0xf]
  %v841 = vld [vmem:[%s2 + $0x70] sm:$0xf]
  %v842 = vld [vmem:[%s2 + $0x74] sm:$0xf]
  %v843 = vld [vmem:[%s2 + $0x78] sm:$0xf]
  %v844 = vld [vmem:[%s2 + $0x7c] sm:$0xf]
  %v845 = vld [vmem:[%s2 + $0x80] sm:$0xf]
  %v846 = vld [vmem:[%s2 + $0x84] sm:$0xf]
  %v847 = vld [vmem:[%s2 + $0x88] sm:$0xf]
  %v848 = vld [vmem:[%s2 + $0x8c] sm:$0xf]
  %v849 = vld [vmem:[%s2 + $0x90] sm:$0xf]
  %v850 = vld [vmem:[%s2 + $0x94] sm:$0xf]
  %v851 = vld [vmem:[%s2 + $0x98] sm:$0xf]
  %v852 = vld [vmem:[%s2 + $0x9c] sm:$0xf]
  %v853 = vld [vmem:[%s2 + $0xa0] sm:$0xf]
  %v854 = vld [vmem:[%s2 + $0xa4] sm:$0xf]
  %v855 = vld [vmem:[%s2 + $0xa8] sm:$0xf]
  %v856 = vld [vmem:[%s2 + $0xac] sm:$0xf]
  %v857 = vld [vmem:[%s2 + $0xb0] sm:$0xf]
  %v858 = vld [vmem:[%s2 + $0xb4] sm:$0xf]
  %v859 = vld [vmem:[%s2 + $0xb8] sm:$0xf]
  %v860 = vld [vmem:[%s2 + $0xbc] sm:$0xf]
  %v861 = vld [vmem:[%s2 + $0xc0] sm:$0xf]
  %v862 = vld [vmem:[%s2 + $0xc4] sm:$0xf]
  %v863 = vld [vmem:[%s2 + $0xc8] sm:$0xf]
  %v864 = vld [vmem:[%s2 + $0xcc] sm:$0xf]
  %v865 = vld [vmem:[%s2 + $0xd0] sm:$0xf]
  %v866 = vld [vmem:[%s2 + $0xd4] sm:$0xf]
  %v867 = vld [vmem:[%s2 + $0xd8] sm:$0xf]
  %v868 = vld [vmem:[%s2 + $0xdc] sm:$0xf]
  %v869 = vld [vmem:[%s2 + $0xe0] sm:$0xf]
  %v870 = vld [vmem:[%s2 + $0xe4] sm:$0xf]
  %v871 = vld [vmem:[%s2 + $0xe8] sm:$0xf]
  %v872 = vld [vmem:[%s2 + $0xec] sm:$0xf]
  %v873 = vld [vmem:[%s2 + $0xf0] sm:$0xf]
  %v874 = vld [vmem:[%s2 + $0xf4] sm:$0xf]
  %v875 = vld [vmem:[%s2 + $0xf8] sm:$0xf]
  %v876 = vld [vmem:[%s2 + $0xfc] sm:$0xf]
  %v877 = vlaneseq
  %v878 = vshrl.u32 %v877, 7
  %v879 = vsub.s32 0, %v878
  %v880 = vrot.slane %v31, %v879
  %v945 = vunpack.c.l.b16 %v813
  %v946 = vunpack.c.l.b16 %v814
  %v947 = vunpack.c.l.b16 %v815
  %v948 = vunpack.c.l.b16 %v816
  %v949 = vunpack.c.l.b16 %v817
  %v950 = vunpack.c.l.b16 %v818
  %v951 = vunpack.c.l.b16 %v819
  %v952 = vunpack.c.l.b16 %v820
  %v953 = vunpack.c.l.b16 %v821
  %v954 = vunpack.c.l.b16 %v822
  %v955 = vunpack.c.l.b16 %v823
  %v956 = vunpack.c.l.b16 %v824
  %v957 = vunpack.c.l.b16 %v825
  %v958 = vunpack.c.l.b16 %v826
  %v959 = vunpack.c.l.b16 %v827
  %v960 = vunpack.c.l.b16 %v828
  %v961 = vunpack.c.l.b16 %v829
  %v962 = vunpack.c.l.b16 %v830
  %v963 = vunpack.c.l.b16 %v831
  %v964 = vunpack.c.l.b16 %v832
  %v965 = vunpack.c.l.b16 %v833
  %v966 = vunpack.c.l.b16 %v834
  %v967 = vunpack.c.l.b16 %v835
  %v968 = vunpack.c.l.b16 %v836
  %v969 = vunpack.c.l.b16 %v837
  %v970 = vunpack.c.l.b16 %v838
  %v971 = vunpack.c.l.b16 %v839
  %v972 = vunpack.c.l.b16 %v840
  %v973 = vunpack.c.l.b16 %v841
  %v974 = vunpack.c.l.b16 %v842
  %v975 = vunpack.c.l.b16 %v843
  %v976 = vunpack.c.l.b16 %v844
  %v977 = vunpack.c.l.b16 %v845
  %v978 = vunpack.c.l.b16 %v846
  %v979 = vunpack.c.l.b16 %v847
  %v980 = vunpack.c.l.b16 %v848
  %v981 = vunpack.c.l.b16 %v849
  %v982 = vunpack.c.l.b16 %v850
  %v983 = vunpack.c.l.b16 %v851
  %v984 = vunpack.c.l.b16 %v852
  %v985 = vunpack.c.l.b16 %v853
  %v986 = vunpack.c.l.b16 %v854
  %v987 = vunpack.c.l.b16 %v855
  %v988 = vunpack.c.l.b16 %v856
  %v989 = vunpack.c.l.b16 %v857
  %v990 = vunpack.c.l.b16 %v858
  %v991 = vunpack.c.l.b16 %v859
  %v992 = vunpack.c.l.b16 %v860
  %v993 = vunpack.c.l.b16 %v861
  %v994 = vunpack.c.l.b16 %v862
  %v995 = vunpack.c.l.b16 %v863
  %v996 = vunpack.c.l.b16 %v864
  %v997 = vunpack.c.l.b16 %v865
  %v998 = vunpack.c.l.b16 %v866
  %v999 = vunpack.c.l.b16 %v867
  %v1000 = vunpack.c.l.b16 %v868
  %v1001 = vunpack.c.l.b16 %v869
  %v1002 = vunpack.c.l.b16 %v870
  %v1003 = vunpack.c.l.b16 %v871
  %v1004 = vunpack.c.l.b16 %v872
  %v1005 = vunpack.c.l.b16 %v873
  %v1006 = vunpack.c.l.b16 %v874
  %v1007 = vunpack.c.l.b16 %v875
  %v1008 = vunpack.c.l.b16 %v876
  %v1009 = vpack.c.b16 %v946, %v945
  %v1010 = vpack.c.b16 %v948, %v947
  %v1011 = vpack.c.b16 %v950, %v949
  %v1012 = vpack.c.b16 %v952, %v951
  %v1013 = vpack.c.b16 %v954, %v953
  %v1014 = vpack.c.b16 %v956, %v955
  %v1015 = vpack.c.b16 %v958, %v957
  %v1016 = vpack.c.b16 %v960, %v959
  %v1017 = vpack.c.b16 %v962, %v961
  %v1018 = vpack.c.b16 %v964, %v963
  %v1019 = vpack.c.b16 %v966, %v965
  %v1020 = vpack.c.b16 %v968, %v967
  %v1021 = vpack.c.b16 %v970, %v969
  %v1022 = vpack.c.b16 %v972, %v971
  %v1023 = vpack.c.b16 %v974, %v973
  %v1024 = vpack.c.b16 %v976, %v975
  %v1025 = vpack.c.b16 %v978, %v977
  %v1026 = vpack.c.b16 %v980, %v979
  %v1027 = vpack.c.b16 %v982, %v981
  %v1028 = vpack.c.b16 %v984, %v983
  %v1029 = vpack.c.b16 %v986, %v985
  %v1030 = vpack.c.b16 %v988, %v987
  %v1031 = vpack.c.b16 %v990, %v989
  %v1032 = vpack.c.b16 %v992, %v991
  %v1033 = vpack.c.b16 %v994, %v993
  %v1034 = vpack.c.b16 %v996, %v995
  %v1035 = vpack.c.b16 %v998, %v997
  %v1036 = vpack.c.b16 %v1000, %v999
  %v1037 = vpack.c.b16 %v1002, %v1001
  %v1038 = vpack.c.b16 %v1004, %v1003
  %v1039 = vpack.c.b16 %v1006, %v1005
  %v1040 = vpack.c.b16 %v1008, %v1007
  %1073 = vmatprep.subr.bf16.mxu0 0
  %1074 = vmatpush1.bf16.msra.mxu0 %v1009
  %1075 = vmatprep.subr.bf16.mxu0 0
  %1076 = vmatpush1.bf16.msra.mxu0 %v1010
  %1077 = vmatprep.subr.bf16.mxu0 0
  %1078 = vmatpush1.bf16.msra.mxu0 %v1011
  %1079 = vmatprep.subr.bf16.mxu0 0
  %1080 = vmatpush1.bf16.msra.mxu0 %v1012
  %1081 = vmatprep.subr.bf16.mxu0 0
  %1082 = vmatpush1.bf16.msra.mxu0 %v1013
  %1083 = vmatprep.subr.bf16.mxu0 0
  %1084 = vmatpush1.bf16.msra.mxu0 %v1014
  %1085 = vmatprep.subr.bf16.mxu0 0
  %1086 = vmatpush1.bf16.msra.mxu0 %v1015
  %1087 = vmatprep.subr.bf16.mxu0 0
  %1088 = vmatpush1.bf16.msra.mxu0 %v1016
  %1089 = vmatprep.subr.bf16.mxu0 0
  %1090 = vmatpush1.bf16.msra.mxu0 %v1017
  %1091 = vmatprep.subr.bf16.mxu0 0
  %1092 = vmatpush1.bf16.msra.mxu0 %v1018
  %1093 = vmatprep.subr.bf16.mxu0 0
  %1094 = vmatpush1.bf16.msra.mxu0 %v1019
  %1095 = vmatprep.subr.bf16.mxu0 0
  %1096 = vmatpush1.bf16.msra.mxu0 %v1020
  %1097 = vmatprep.subr.bf16.mxu0 0
  %1098 = vmatpush1.bf16.msra.mxu0 %v1021
  %1099 = vmatprep.subr.bf16.mxu0 0
  %1100 = vmatpush1.bf16.msra.mxu0 %v1022
  %1101 = vmatprep.subr.bf16.mxu0 0
  %1102 = vmatpush1.bf16.msra.mxu0 %v1023
  %1103 = vmatprep.subr.bf16.mxu0 0
  %1104 = vmatpush1.bf16.msra.mxu0 %v1024
  %1105 = vmatprep.mubr.bf16.mxu0 %v806
  %1106 = vmatmul.mubr.bf16.gmra.mrb[0].mxu0 %v805
  %v1107 = vpop.f32.mrb[0].mxu0
  %v1108 = vadd.f32 %v880, %v1107
  %v1109 = vpop.f32.mrb[0].mxu0
  %v1110 = vpop.f32.mrb[0].mxu0
  %v1111 = vadd.f32 %v880, %v1110
  %v1112 = vpop.f32.mrb[0].mxu0
  %1113 = vmatprep.mubr.bf16.mxu0 %v810
  %1114 = vmatmul.mubr.bf16.gmra.mrb[0].mxu0 %v809
  %v1115 = vpop.f32.mrb[0].mxu0
  %v1116 = vadd.f32 %v880, %v1115
  %v1117 = vpop.f32.mrb[0].mxu0
  %v1118 = vpop.f32.mrb[0].mxu0
  %v1119 = vpop.f32.mrb[0].mxu0
  %1120 = vdwg.mxu0
  %1121 = vmatprep.subr.bf16.mxu0 0
  %1122 = vmatpush1.bf16.msra.mxu0 %v1025
  %1123 = vmatprep.subr.bf16.mxu0 0
  %1124 = vmatpush1.bf16.msra.mxu0 %v1026
  %1125 = vmatprep.subr.bf16.mxu0 0
  %1126 = vmatpush1.bf16.msra.mxu0 %v1027
  %1127 = vmatprep.subr.bf16.mxu0 0
  %1128 = vmatpush1.bf16.msra.mxu0 %v1028
  %1129 = vmatprep.subr.bf16.mxu0 0
  %1130 = vmatpush1.bf16.msra.mxu0 %v1029
  %1131 = vmatprep.subr.bf16.mxu0 0
  %1132 = vmatpush1.bf16.msra.mxu0 %v1030
  %1133 = vmatprep.subr.bf16.mxu0 0
  %1134 = vmatpush1.bf16.msra.mxu0 %v1031
  %1135 = vmatprep.subr.bf16.mxu0 0
  %1136 = vmatpush1.bf16.msra.mxu0 %v1032
  %1137 = vmatprep.subr.bf16.mxu0 0
  %1138 = vmatpush1.bf16.msra.mxu0 %v1033
  %1139 = vmatprep.subr.bf16.mxu0 0
  %1140 = vmatpush1.bf16.msra.mxu0 %v1034
  %1141 = vmatprep.subr.bf16.mxu0 0
  %1142 = vmatpush1.bf16.msra.mxu0 %v1035
  %1143 = vmatprep.subr.bf16.mxu0 0
  %1144 = vmatpush1.bf16.msra.mxu0 %v1036
  %1145 = vmatprep.subr.bf16.mxu0 0
  %1146 = vmatpush1.bf16.msra.mxu0 %v1037
  %1147 = vmatprep.subr.bf16.mxu0 0
  %1148 = vmatpush1.bf16.msra.mxu0 %v1038
  %1149 = vmatprep.subr.bf16.mxu0 0
  %1150 = vmatpush1.bf16.msra.mxu0 %v1039
  %1151 = vmatprep.subr.bf16.mxu0 0
  %1152 = vmatpush1.bf16.msra.mxu0 %v1040
  %1153 = vmatprep.mubr.bf16.mxu0 %v808
  %1154 = vmatmul.mubr.bf16.gmra.mrb[0].mxu0 %v807
  %v1155 = vpop.f32.mrb[0].mxu0
  %v1156 = vadd.f32 %v1108, %v1155
  %v1157 = vpop.f32.mrb[0].mxu0
  %v1158 = vpop.f32.mrb[0].mxu0
  %v1159 = vadd.f32 %v1111, %v1158
  %v1160 = vpop.f32.mrb[0].mxu0
  %1161 = vmatprep.mubr.bf16.mxu0 %v812
  %1162 = vmatmul.mubr.bf16.gmra.mrb[0].mxu0 %v811
  %v1163 = vpop.f32.mrb[0].mxu0
  %v1164 = vadd.f32 %v1116, %v1163
  %v1165 = vpop.f32.mrb[0].mxu0
  %v1166 = vpop.f32.mrb[0].mxu0
  %v1167 = vpop.f32.mrb[0].mxu0
  %1168 = vdwg.mxu0
  %v1169 = vmax.f32 %v1156, 0.0
  %v1170 = vmax.f32 %v1159, 0.0
  %v1171 = vmax.f32 %v1164, 0.0
  %v1172 = vpack.c.bf16 %v1170, %v1169
  %v1173 = vpack.c.bf16 %v1171, %v1171
  %v1174 = vld [vmem:[%s3] sm:$0xf]
  %v1175 = vld [vmem:[%s3 + $0x4] sm:$0xf]
  %v1176 = vld [vmem:[%s3 + $0x8] sm:$0xf]
  %v1177 = vld [vmem:[%s3 + $0xc] sm:$0xf]
  %v1178 = vld [vmem:[%s3 + $0x10] sm:$0xf]
  %v1179 = vld [vmem:[%s3 + $0x14] sm:$0xf]
  %v1180 = vld [vmem:[%s3 + $0x18] sm:$0xf]
  %v1181 = vld [vmem:[%s3 + $0x1c] sm:$0xf]
  %v1182 = vld [vmem:[%s3 + $0x20] sm:$0xf]
  %v1183 = vld [vmem:[%s3 + $0x24] sm:$0xf]
  %v1184 = vld [vmem:[%s3 + $0x28] sm:$0xf]
  %v1185 = vld [vmem:[%s3 + $0x2c] sm:$0xf]
  %v1186 = vld [vmem:[%s3 + $0x30] sm:$0xf]
  %v1187 = vld [vmem:[%s3 + $0x34] sm:$0xf]
  %v1188 = vld [vmem:[%s3 + $0x38] sm:$0xf]
  %v1189 = vld [vmem:[%s3 + $0x3c] sm:$0xf]
  %v1191 = vrot.slane %v1172, 1
  %v1200 = vunpack.c.l.b16 %v1182
  %v1201 = vunpack.c.l.b16 %v1183
  %v1202 = vunpack.c.l.b16 %v1184
  %v1203 = vunpack.c.l.b16 %v1185
  %v1204 = vunpack.c.l.b16 %v1186
  %v1205 = vunpack.c.l.b16 %v1187
  %v1206 = vunpack.c.l.b16 %v1188
  %v1207 = vunpack.c.l.b16 %v1189
  %v1208 = vpack.c.b16 %v1201, %v1200
  %v1209 = vpack.c.b16 %v1203, %v1202
  %v1210 = vpack.c.b16 %v1205, %v1204
  %v1211 = vpack.c.b16 %v1207, %v1206
  %vm1216 = vcmask 523264
  %v1218 = vsel %vm1216, %v1191, 0
  %1220 = vmatprep.subr.bf16.mxu0 0
  %1221 = vmatpush1.bf16.msra.mxu0 %v1208
  %1222 = vmatprep.subr.bf16.mxu0 0
  %1223 = vmatpush1.bf16.msra.mxu0 %v1209
  %1224 = vmatprep.subr.bf16.mxu0 0
  %1225 = vmatpush1.bf16.msra.mxu0 %v1210
  %1226 = vmatprep.subr.bf16.mxu0 0
  %1227 = vmatpush1.bf16.msra.mxu0 %v1211
  %1228 = vmatprep.subr.bf16.mxu0 0
  %1229 = vmatpush1.bf16.msra.mxu0 0
  %1230 = vmatprep.subr.bf16.mxu0 0
  %1231 = vmatpush1.bf16.msra.mxu0 0
  %1232 = vmatprep.subr.bf16.mxu0 0
  %1233 = vmatpush1.bf16.msra.mxu0 0
  %1234 = vmatprep.subr.bf16.mxu0 0
  %1235 = vmatpush1.bf16.msra.mxu0 0
  %1236 = vmatprep.subr.bf16.mxu0 0
  %1237 = vmatpush1.bf16.msra.mxu0 0
  %1238 = vmatprep.subr.bf16.mxu0 0
  %1239 = vmatpush1.bf16.msra.mxu0 0
  %1240 = vmatprep.subr.bf16.mxu0 0
  %1241 = vmatpush1.bf16.msra.mxu0 0
  %1242 = vmatprep.subr.bf16.mxu0 0
  %1243 = vmatpush1.bf16.msra.mxu0 0
  %1244 = vmatprep.subr.bf16.mxu0 0
  %1245 = vmatpush1.bf16.msra.mxu0 0
  %1246 = vmatprep.subr.bf16.mxu0 0
  %1247 = vmatpush1.bf16.msra.mxu0 0
  %1248 = vmatprep.subr.bf16.mxu0 0
  %1249 = vmatpush1.bf16.msra.mxu0 0
  %1250 = vmatprep.subr.bf16.mxu0 0
  %1251 = vmatpush1.bf16.msra.mxu0 0
  %1252 = vmatprep.mubr.bf16.mxu0 0
  %1253 = vmatmul.mubr.bf16.gmra.mrb[0].mxu0 %v1218
  %v1254 = vpop.f32.mrb[0].mxu0
  %v1255 = vadd.f32 0.0, %v1254
  %v1256 = vpop.f32.mrb[0].mxu0
  %v1257 = vpop.f32.mrb[0].mxu0
  %v1258 = vpop.f32.mrb[0].mxu0
  %1259 = vdwg.mxu0
  %v1268 = vunpack.c.l.b16 %v1174
  %v1269 = vunpack.c.l.b16 %v1175
  %v1270 = vunpack.c.l.b16 %v1176
  %v1271 = vunpack.c.l.b16 %v1177
  %v1272 = vunpack.c.l.b16 %v1178
  %v1273 = vunpack.c.l.b16 %v1179
  %v1274 = vunpack.c.l.b16 %v1180
  %v1275 = vunpack.c.l.b16 %v1181
  %v1276 = vpack.c.b16 %v1269, %v1268
  %v1277 = vpack.c.b16 %v1271, %v1270
  %v1278 = vpack.c.b16 %v1273, %v1272
  %v1279 = vpack.c.b16 %v1275, %v1274
  %v1285 = vsel %vm1216, %v1172, 0
  %1287 = vmatprep.subr.bf16.mxu0 0
  %1288 = vmatpush1.bf16.msra.mxu0 %v1276
  %1289 = vmatprep.subr.bf16.mxu0 0
  %1290 = vmatpush1.bf16.msra.mxu0 %v1277
  %1291 = vmatprep.subr.bf16.mxu0 0
  %1292 = vmatpush1.bf16.msra.mxu0 %v1278
  %1293 = vmatprep.subr.bf16.mxu0 0
  %1294 = vmatpush1.bf16.msra.mxu0 %v1279
  %1295 = vmatprep.subr.bf16.mxu0 0
  %1296 = vmatpush1.bf16.msra.mxu0 0
  %1297 = vmatprep.subr.bf16.mxu0 0
  %1298 = vmatpush1.bf16.msra.mxu0 0
  %1299 = vmatprep.subr.bf16.mxu0 0
  %1300 = vmatpush1.bf16.msra.mxu0 0
  %1301 = vmatprep.subr.bf16.mxu0 0
  %1302 = vmatpush1.bf16.msra.mxu0 0
  %1303 = vmatprep.subr.bf16.mxu0 0
  %1304 = vmatpush1.bf16.msra.mxu0 0
  %1305 = vmatprep.subr.bf16.mxu0 0
  %1306 = vmatpush1.bf16.msra.mxu0 0
  %1307 = vmatprep.subr.bf16.mxu0 0
  %1308 = vmatpush1.bf16.msra.mxu0 0
  %1309 = vmatprep.subr.bf16.mxu0 0
  %1310 = vmatpush1.bf16.msra.mxu0 0
  %1311 = vmatprep.subr.bf16.mxu0 0
  %1312 = vmatpush1.bf16.msra.mxu0 0
  %1313 = vmatprep.subr.bf16.mxu0 0
  %1314 = vmatpush1.bf16.msra.mxu0 0
  %1315 = vmatprep.subr.bf16.mxu0 0
  %1316 = vmatpush1.bf16.msra.mxu0 0
  %1317 = vmatprep.subr.bf16.mxu0 0
  %1318 = vmatpush1.bf16.msra.mxu0 0
  %1319 = vmatprep.mubr.bf16.mxu0 0
  %1320 = vmatmul.mubr.bf16.gmra.mrb[0].mxu0 %v1285
  %v1321 = vpop.f32.mrb[0].mxu0
  %v1322 = vadd.f32 %v1255, %v1321
  %v1323 = vpop.f32.mrb[0].mxu0
  %v1324 = vpop.f32.mrb[0].mxu0
  %v1325 = vpop.f32.mrb[0].mxu0
  %1326 = vdwg.mxu0
  %v1327 = vld [vmem:[%s3 + $0x40] sm:$0xf]
  %v1328 = vld [vmem:[%s3 + $0x44] sm:$0xf]
  %v1329 = vld [vmem:[%s3 + $0x48] sm:$0xf]
  %v1330 = vld [vmem:[%s3 + $0x4c] sm:$0xf]
  %v1331 = vld [vmem:[%s3 + $0x50] sm:$0xf]
  %v1332 = vld [vmem:[%s3 + $0x54] sm:$0xf]
  %v1333 = vld [vmem:[%s3 + $0x58] sm:$0xf]
  %v1334 = vld [vmem:[%s3 + $0x5c] sm:$0xf]
  %v1335 = vrot.slane %v1172, 2
  %v1344 = vunpack.c.l.b16 %v1327
  %v1345 = vunpack.c.l.b16 %v1328
  %v1346 = vunpack.c.l.b16 %v1329
  %v1347 = vunpack.c.l.b16 %v1330
  %v1348 = vunpack.c.l.b16 %v1331
  %v1349 = vunpack.c.l.b16 %v1332
  %v1350 = vunpack.c.l.b16 %v1333
  %v1351 = vunpack.c.l.b16 %v1334
  %v1352 = vpack.c.b16 %v1345, %v1344
  %v1353 = vpack.c.b16 %v1347, %v1346
  %v1354 = vpack.c.b16 %v1349, %v1348
  %v1355 = vpack.c.b16 %v1351, %v1350
  %v1361 = vsel %vm1216, %v1335, 0
  %1363 = vmatprep.subr.bf16.mxu0 0
  %1364 = vmatpush1.bf16.msra.mxu0 %v1352
  %1365 = vmatprep.subr.bf16.mxu0 0
  %1366 = vmatpush1.bf16.msra.mxu0 %v1353
  %1367 = vmatprep.subr.bf16.mxu0 0
  %1368 = vmatpush1.bf16.msra.mxu0 %v1354
  %1369 = vmatprep.subr.bf16.mxu0 0
  %1370 = vmatpush1.bf16.msra.mxu0 %v1355
  %1371 = vmatprep.subr.bf16.mxu0 0
  %1372 = vmatpush1.bf16.msra.mxu0 0
  %1373 = vmatprep.subr.bf16.mxu0 0
  %1374 = vmatpush1.bf16.msra.mxu0 0
  %1375 = vmatprep.subr.bf16.mxu0 0
  %1376 = vmatpush1.bf16.msra.mxu0 0
  %1377 = vmatprep.subr.bf16.mxu0 0
  %1378 = vmatpush1.bf16.msra.mxu0 0
  %1379 = vmatprep.subr.bf16.mxu0 0
  %1380 = vmatpush1.bf16.msra.mxu0 0
  %1381 = vmatprep.subr.bf16.mxu0 0
  %1382 = vmatpush1.bf16.msra.mxu0 0
  %1383 = vmatprep.subr.bf16.mxu0 0
  %1384 = vmatpush1.bf16.msra.mxu0 0
  %1385 = vmatprep.subr.bf16.mxu0 0
  %1386 = vmatpush1.bf16.msra.mxu0 0
  %1387 = vmatprep.subr.bf16.mxu0 0
  %1388 = vmatpush1.bf16.msra.mxu0 0
  %1389 = vmatprep.subr.bf16.mxu0 0
  %1390 = vmatpush1.bf16.msra.mxu0 0
  %1391 = vmatprep.subr.bf16.mxu0 0
  %1392 = vmatpush1.bf16.msra.mxu0 0
  %1393 = vmatprep.subr.bf16.mxu0 0
  %1394 = vmatpush1.bf16.msra.mxu0 0
  %1395 = vmatprep.mubr.bf16.mxu0 0
  %1396 = vmatmul.mubr.bf16.gmra.mrb[0].mxu0 %v1361
  %v1397 = vpop.f32.mrb[0].mxu0
  %v1398 = vadd.f32 0.0, %v1397
  %v1399 = vpop.f32.mrb[0].mxu0
  %v1400 = vpop.f32.mrb[0].mxu0
  %v1401 = vpop.f32.mrb[0].mxu0
  %1402 = vdwg.mxu0
  %v1403 = vadd.f32 %v1322, %v1398
  %v1404 = vld [vmem:[%s3 + $0x60] sm:$0xf]
  %v1405 = vld [vmem:[%s3 + $0x64] sm:$0xf]
  %v1406 = vld [vmem:[%s3 + $0x68] sm:$0xf]
  %v1407 = vld [vmem:[%s3 + $0x6c] sm:$0xf]
  %v1408 = vld [vmem:[%s3 + $0x70] sm:$0xf]
  %v1409 = vld [vmem:[%s3 + $0x74] sm:$0xf]
  %v1410 = vld [vmem:[%s3 + $0x78] sm:$0xf]
  %v1411 = vld [vmem:[%s3 + $0x7c] sm:$0xf]
  %v1412 = vrot.slane %v1172, 3
  %v1421 = vunpack.c.l.b16 %v1404
  %v1422 = vunpack.c.l.b16 %v1405
  %v1423 = vunpack.c.l.b16 %v1406
  %v1424 = vunpack.c.l.b16 %v1407
  %v1425 = vunpack.c.l.b16 %v1408
  %v1426 = vunpack.c.l.b16 %v1409
  %v1427 = vunpack.c.l.b16 %v1410
  %v1428 = vunpack.c.l.b16 %v1411
  %v1429 = vpack.c.b16 %v1422, %v1421
  %v1430 = vpack.c.b16 %v1424, %v1423
  %v1431 = vpack.c.b16 %v1426, %v1425
  %v1432 = vpack.c.b16 %v1428, %v1427
  %v1438 = vsel %vm1216, %v1412, 0
  %1440 = vmatprep.subr.bf16.mxu0 0
  %1441 = vmatpush1.bf16.msra.mxu0 %v1429
  %1442 = vmatprep.subr.bf16.mxu0 0
  %1443 = vmatpush1.bf16.msra.mxu0 %v1430
  %1444 = vmatprep.subr.bf16.mxu0 0
  %1445 = vmatpush1.bf16.msra.mxu0 %v1431
  %1446 = vmatprep.subr.bf16.mxu0 0
  %1447 = vmatpush1.bf16.msra.mxu0 %v1432
  %1448 = vmatprep.subr.bf16.mxu0 0
  %1449 = vmatpush1.bf16.msra.mxu0 0
  %1450 = vmatprep.subr.bf16.mxu0 0
  %1451 = vmatpush1.bf16.msra.mxu0 0
  %1452 = vmatprep.subr.bf16.mxu0 0
  %1453 = vmatpush1.bf16.msra.mxu0 0
  %1454 = vmatprep.subr.bf16.mxu0 0
  %1455 = vmatpush1.bf16.msra.mxu0 0
  %1456 = vmatprep.subr.bf16.mxu0 0
  %1457 = vmatpush1.bf16.msra.mxu0 0
  %1458 = vmatprep.subr.bf16.mxu0 0
  %1459 = vmatpush1.bf16.msra.mxu0 0
  %1460 = vmatprep.subr.bf16.mxu0 0
  %1461 = vmatpush1.bf16.msra.mxu0 0
  %1462 = vmatprep.subr.bf16.mxu0 0
  %1463 = vmatpush1.bf16.msra.mxu0 0
  %1464 = vmatprep.subr.bf16.mxu0 0
  %1465 = vmatpush1.bf16.msra.mxu0 0
  %1466 = vmatprep.subr.bf16.mxu0 0
  %1467 = vmatpush1.bf16.msra.mxu0 0
  %1468 = vmatprep.subr.bf16.mxu0 0
  %1469 = vmatpush1.bf16.msra.mxu0 0
  %1470 = vmatprep.subr.bf16.mxu0 0
  %1471 = vmatpush1.bf16.msra.mxu0 0
  %1472 = vmatprep.mubr.bf16.mxu0 0
  %1473 = vmatmul.mubr.bf16.gmra.mrb[0].mxu0 %v1438
  %v1474 = vpop.f32.mrb[0].mxu0
  %v1475 = vadd.f32 0.0, %v1474
  %v1476 = vpop.f32.mrb[0].mxu0
  %v1477 = vpop.f32.mrb[0].mxu0
  %v1478 = vpop.f32.mrb[0].mxu0
  %1479 = vdwg.mxu0
  %v1480 = vadd.f32 %v1403, %v1475
  %v1481 = vld [vmem:[%s3 + $0x80] sm:$0xf]
  %v1482 = vld [vmem:[%s3 + $0x84] sm:$0xf]
  %v1483 = vld [vmem:[%s3 + $0x88] sm:$0xf]
  %v1484 = vld [vmem:[%s3 + $0x8c] sm:$0xf]
  %v1485 = vld [vmem:[%s3 + $0x90] sm:$0xf]
  %v1486 = vld [vmem:[%s3 + $0x94] sm:$0xf]
  %v1487 = vld [vmem:[%s3 + $0x98] sm:$0xf]
  %v1488 = vld [vmem:[%s3 + $0x9c] sm:$0xf]
  %v1489 = vrot.slane %v1172, 4
  %v1498 = vunpack.c.l.b16 %v1481
  %v1499 = vunpack.c.l.b16 %v1482
  %v1500 = vunpack.c.l.b16 %v1483
  %v1501 = vunpack.c.l.b16 %v1484
  %v1502 = vunpack.c.l.b16 %v1485
  %v1503 = vunpack.c.l.b16 %v1486
  %v1504 = vunpack.c.l.b16 %v1487
  %v1505 = vunpack.c.l.b16 %v1488
  %v1506 = vpack.c.b16 %v1499, %v1498
  %v1507 = vpack.c.b16 %v1501, %v1500
  %v1508 = vpack.c.b16 %v1503, %v1502
  %v1509 = vpack.c.b16 %v1505, %v1504
  %v1515 = vsel %vm1216, %v1489, 0
  %1517 = vmatprep.subr.bf16.mxu0 0
  %1518 = vmatpush1.bf16.msra.mxu0 %v1506
  %1519 = vmatprep.subr.bf16.mxu0 0
  %1520 = vmatpush1.bf16.msra.mxu0 %v1507
  %1521 = vmatprep.subr.bf16.mxu0 0
  %1522 = vmatpush1.bf16.msra.mxu0 %v1508
  %1523 = vmatprep.subr.bf16.mxu0 0
  %1524 = vmatpush1.bf16.msra.mxu0 %v1509
  %1525 = vmatprep.subr.bf16.mxu0 0
  %1526 = vmatpush1.bf16.msra.mxu0 0
  %1527 = vmatprep.subr.bf16.mxu0 0
  %1528 = vmatpush1.bf16.msra.mxu0 0
  %1529 = vmatprep.subr.bf16.mxu0 0
  %1530 = vmatpush1.bf16.msra.mxu0 0
  %1531 = vmatprep.subr.bf16.mxu0 0
  %1532 = vmatpush1.bf16.msra.mxu0 0
  %1533 = vmatprep.subr.bf16.mxu0 0
  %1534 = vmatpush1.bf16.msra.mxu0 0
  %1535 = vmatprep.subr.bf16.mxu0 0
  %1536 = vmatpush1.bf16.msra.mxu0 0
  %1537 = vmatprep.subr.bf16.mxu0 0
  %1538 = vmatpush1.bf16.msra.mxu0 0
  %1539 = vmatprep.subr.bf16.mxu0 0
  %1540 = vmatpush1.bf16.msra.mxu0 0
  %1541 = vmatprep.subr.bf16.mxu0 0
  %1542 = vmatpush1.bf16.msra.mxu0 0
  %1543 = vmatprep.subr.bf16.mxu0 0
  %1544 = vmatpush1.bf16.msra.mxu0 0
  %1545 = vmatprep.subr.bf16.mxu0 0
  %1546 = vmatpush1.bf16.msra.mxu0 0
  %1547 = vmatprep.subr.bf16.mxu0 0
  %1548 = vmatpush1.bf16.msra.mxu0 0
  %1549 = vmatprep.mubr.bf16.mxu0 0
  %1550 = vmatmul.mubr.bf16.gmra.mrb[0].mxu0 %v1515
  %v1551 = vpop.f32.mrb[0].mxu0
  %v1552 = vadd.f32 0.0, %v1551
  %v1553 = vpop.f32.mrb[0].mxu0
  %v1554 = vpop.f32.mrb[0].mxu0
  %v1555 = vpop.f32.mrb[0].mxu0
  %1556 = vdwg.mxu0
  %v1557 = vadd.f32 %v1480, %v1552
  %v1558 = vld [vmem:[%s3 + $0xa0] sm:$0xf]
  %v1559 = vld [vmem:[%s3 + $0xa4] sm:$0xf]
  %v1560 = vld [vmem:[%s3 + $0xa8] sm:$0xf]
  %v1561 = vld [vmem:[%s3 + $0xac] sm:$0xf]
  %v1562 = vld [vmem:[%s3 + $0xb0] sm:$0xf]
  %v1563 = vld [vmem:[%s3 + $0xb4] sm:$0xf]
  %v1564 = vld [vmem:[%s3 + $0xb8] sm:$0xf]
  %v1565 = vld [vmem:[%s3 + $0xbc] sm:$0xf]
  %v1566 = vrot.slane %v1172, 5
  %v1575 = vunpack.c.l.b16 %v1558
  %v1576 = vunpack.c.l.b16 %v1559
  %v1577 = vunpack.c.l.b16 %v1560
  %v1578 = vunpack.c.l.b16 %v1561
  %v1579 = vunpack.c.l.b16 %v1562
  %v1580 = vunpack.c.l.b16 %v1563
  %v1581 = vunpack.c.l.b16 %v1564
  %v1582 = vunpack.c.l.b16 %v1565
  %v1583 = vpack.c.b16 %v1576, %v1575
  %v1584 = vpack.c.b16 %v1578, %v1577
  %v1585 = vpack.c.b16 %v1580, %v1579
  %v1586 = vpack.c.b16 %v1582, %v1581
  %v1592 = vsel %vm1216, %v1566, 0
  %1594 = vmatprep.subr.bf16.mxu0 0
  %1595 = vmatpush1.bf16.msra.mxu0 %v1583
  %1596 = vmatprep.subr.bf16.mxu0 0
  %1597 = vmatpush1.bf16.msra.mxu0 %v1584
  %1598 = vmatprep.subr.bf16.mxu0 0
  %1599 = vmatpush1.bf16.msra.mxu0 %v1585
  %1600 = vmatprep.subr.bf16.mxu0 0
  %1601 = vmatpush1.bf16.msra.mxu0 %v1586
  %1602 = vmatprep.subr.bf16.mxu0 0
  %1603 = vmatpush1.bf16.msra.mxu0 0
  %1604 = vmatprep.subr.bf16.mxu0 0
  %1605 = vmatpush1.bf16.msra.mxu0 0
  %1606 = vmatprep.subr.bf16.mxu0 0
  %1607 = vmatpush1.bf16.msra.mxu0 0
  %1608 = vmatprep.subr.bf16.mxu0 0
  %1609 = vmatpush1.bf16.msra.mxu0 0
  %1610 = vmatprep.subr.bf16.mxu0 0
  %1611 = vmatpush1.bf16.msra.mxu0 0
  %1612 = vmatprep.subr.bf16.mxu0 0
  %1613 = vmatpush1.bf16.msra.mxu0 0
  %1614 = vmatprep.subr.bf16.mxu0 0
  %1615 = vmatpush1.bf16.msra.mxu0 0
  %1616 = vmatprep.subr.bf16.mxu0 0
  %1617 = vmatpush1.bf16.msra.mxu0 0
  %1618 = vmatprep.subr.bf16.mxu0 0
  %1619 = vmatpush1.bf16.msra.mxu0 0
  %1620 = vmatprep.subr.bf16.mxu0 0
  %1621 = vmatpush1.bf16.msra.mxu0 0
  %1622 = vmatprep.subr.bf16.mxu0 0
  %1623 = vmatpush1.bf16.msra.mxu0 0
  %1624 = vmatprep.subr.bf16.mxu0 0
  %1625 = vmatpush1.bf16.msra.mxu0 0
  %1626 = vmatprep.mubr.bf16.mxu0 0
  %1627 = vmatmul.mubr.bf16.gmra.mrb[0].mxu0 %v1592
  %v1628 = vpop.f32.mrb[0].mxu0
  %v1629 = vadd.f32 0.0, %v1628
  %v1630 = vpop.f32.mrb[0].mxu0
  %v1631 = vpop.f32.mrb[0].mxu0
  %v1632 = vpop.f32.mrb[0].mxu0
  %1633 = vdwg.mxu0
  %v1634 = vadd.f32 %v1557, %v1629
  %v1635 = vld [vmem:[%s3 + $0xc0] sm:$0xf]
  %v1636 = vld [vmem:[%s3 + $0xc4] sm:$0xf]
  %v1637 = vld [vmem:[%s3 + $0xc8] sm:$0xf]
  %v1638 = vld [vmem:[%s3 + $0xcc] sm:$0xf]
  %v1639 = vld [vmem:[%s3 + $0xd0] sm:$0xf]
  %v1640 = vld [vmem:[%s3 + $0xd4] sm:$0xf]
  %v1641 = vld [vmem:[%s3 + $0xd8] sm:$0xf]
  %v1642 = vld [vmem:[%s3 + $0xdc] sm:$0xf]
  %v1643 = vrot.slane %v1172, 6
  %v1652 = vunpack.c.l.b16 %v1635
  %v1653 = vunpack.c.l.b16 %v1636
  %v1654 = vunpack.c.l.b16 %v1637
  %v1655 = vunpack.c.l.b16 %v1638
  %v1656 = vunpack.c.l.b16 %v1639
  %v1657 = vunpack.c.l.b16 %v1640
  %v1658 = vunpack.c.l.b16 %v1641
  %v1659 = vunpack.c.l.b16 %v1642
  %v1660 = vpack.c.b16 %v1653, %v1652
  %v1661 = vpack.c.b16 %v1655, %v1654
  %v1662 = vpack.c.b16 %v1657, %v1656
  %v1663 = vpack.c.b16 %v1659, %v1658
  %v1669 = vsel %vm1216, %v1643, 0
  %1671 = vmatprep.subr.bf16.mxu0 0
  %1672 = vmatpush1.bf16.msra.mxu0 %v1660
  %1673 = vmatprep.subr.bf16.mxu0 0
  %1674 = vmatpush1.bf16.msra.mxu0 %v1661
  %1675 = vmatprep.subr.bf16.mxu0 0
  %1676 = vmatpush1.bf16.msra.mxu0 %v1662
  %1677 = vmatprep.subr.bf16.mxu0 0
  %1678 = vmatpush1.bf16.msra.mxu0 %v1663
  %1679 = vmatprep.subr.bf16.mxu0 0
  %1680 = vmatpush1.bf16.msra.mxu0 0
  %1681 = vmatprep.subr.bf16.mxu0 0
  %1682 = vmatpush1.bf16.msra.mxu0 0
  %1683 = vmatprep.subr.bf16.mxu0 0
  %1684 = vmatpush1.bf16.msra.mxu0 0
  %1685 = vmatprep.subr.bf16.mxu0 0
  %1686 = vmatpush1.bf16.msra.mxu0 0
  %1687 = vmatprep.subr.bf16.mxu0 0
  %1688 = vmatpush1.bf16.msra.mxu0 0
  %1689 = vmatprep.subr.bf16.mxu0 0
  %1690 = vmatpush1.bf16.msra.mxu0 0
  %1691 = vmatprep.subr.bf16.mxu0 0
  %1692 = vmatpush1.bf16.msra.mxu0 0
  %1693 = vmatprep.subr.bf16.mxu0 0
  %1694 = vmatpush1.bf16.msra.mxu0 0
  %1695 = vmatprep.subr.bf16.mxu0 0
  %1696 = vmatpush1.bf16.msra.mxu0 0
  %1697 = vmatprep.subr.bf16.mxu0 0
  %1698 = vmatpush1.bf16.msra.mxu0 0
  %1699 = vmatprep.subr.bf16.mxu0 0
  %1700 = vmatpush1.bf16.msra.mxu0 0
  %1701 = vmatprep.subr.bf16.mxu0 0
  %1702 = vmatpush1.bf16.msra.mxu0 0
  %1703 = vmatprep.mubr.bf16.mxu0 0
  %1704 = vmatmul.mubr.bf16.gmra.mrb[0].mxu0 %v1669
  %v1705 = vpop.f32.mrb[0].mxu0
  %v1706 = vadd.f32 0.0, %v1705
  %v1707 = vpop.f32.mrb[0].mxu0
  %v1708 = vpop.f32.mrb[0].mxu0
  %v1709 = vpop.f32.mrb[0].mxu0
  %1710 = vdwg.mxu0
  %v1711 = vadd.f32 %v1634, %v1706
  %v1712 = vld [vmem:[%s3 + $0xe0] sm:$0xf]
  %v1713 = vld [vmem:[%s3 + $0xe4] sm:$0xf]
  %v1714 = vld [vmem:[%s3 + $0xe8] sm:$0xf]
  %v1715 = vld [vmem:[%s3 + $0xec] sm:$0xf]
  %v1716 = vld [vmem:[%s3 + $0xf0] sm:$0xf]
  %v1717 = vld [vmem:[%s3 + $0xf4] sm:$0xf]
  %v1718 = vld [vmem:[%s3 + $0xf8] sm:$0xf]
  %v1719 = vld [vmem:[%s3 + $0xfc] sm:$0xf]
  %v1720 = vrot.slane %v1172, 7
  %v1729 = vunpack.c.l.b16 %v1712
  %v1730 = vunpack.c.l.b16 %v1713
  %v1731 = vunpack.c.l.b16 %v1714
  %v1732 = vunpack.c.l.b16 %v1715
  %v1733 = vunpack.c.l.b16 %v1716
  %v1734 = vunpack.c.l.b16 %v1717
  %v1735 = vunpack.c.l.b16 %v1718
  %v1736 = vunpack.c.l.b16 %v1719
  %v1737 = vpack.c.b16 %v1730, %v1729
  %v1738 = vpack.c.b16 %v1732, %v1731
  %v1739 = vpack.c.b16 %v1734, %v1733
  %v1740 = vpack.c.b16 %v1736, %v1735
  %v1746 = vsel %vm1216, %v1720, 0
  %1748 = vmatprep.subr.bf16.mxu0 0
  %1749 = vmatpush1.bf16.msra.mxu0 %v1737
  %1750 = vmatprep.subr.bf16.mxu0 0
  %1751 = vmatpush1.bf16.msra.mxu0 %v1738
  %1752 = vmatprep.subr.bf16.mxu0 0
  %1753 = vmatpush1.bf16.msra.mxu0 %v1739
  %1754 = vmatprep.subr.bf16.mxu0 0
  %1755 = vmatpush1.bf16.msra.mxu0 %v1740
  %1756 = vmatprep.subr.bf16.mxu0 0
  %1757 = vmatpush1.bf16.msra.mxu0 0
  %1758 = vmatprep.subr.bf16.mxu0 0
  %1759 = vmatpush1.bf16.msra.mxu0 0
  %1760 = vmatprep.subr.bf16.mxu0 0
  %1761 = vmatpush1.bf16.msra.mxu0 0
  %1762 = vmatprep.subr.bf16.mxu0 0
  %1763 = vmatpush1.bf16.msra.mxu0 0
  %1764 = vmatprep.subr.bf16.mxu0 0
  %1765 = vmatpush1.bf16.msra.mxu0 0
  %1766 = vmatprep.subr.bf16.mxu0 0
  %1767 = vmatpush1.bf16.msra.mxu0 0
  %1768 = vmatprep.subr.bf16.mxu0 0
  %1769 = vmatpush1.bf16.msra.mxu0 0
  %1770 = vmatprep.subr.bf16.mxu0 0
  %1771 = vmatpush1.bf16.msra.mxu0 0
  %1772 = vmatprep.subr.bf16.mxu0 0
  %1773 = vmatpush1.bf16.msra.mxu0 0
  %1774 = vmatprep.subr.bf16.mxu0 0
  %1775 = vmatpush1.bf16.msra.mxu0 0
  %1776 = vmatprep.subr.bf16.mxu0 0
  %1777 = vmatpush1.bf16.msra.mxu0 0
  %1778 = vmatprep.subr.bf16.mxu0 0
  %1779 = vmatpush1.bf16.msra.mxu0 0
  %1780 = vmatprep.mubr.bf16.mxu0 0
  %1781 = vmatmul.mubr.bf16.gmra.mrb[0].mxu0 %v1746
  %v1782 = vpop.f32.mrb[0].mxu0
  %v1783 = vadd.f32 0.0, %v1782
  %v1784 = vpop.f32.mrb[0].mxu0
  %v1785 = vpop.f32.mrb[0].mxu0
  %v1786 = vpop.f32.mrb[0].mxu0
  %1787 = vdwg.mxu0
  %v1788 = vadd.f32 %v1711, %v1783
  %v1789 = vld [vmem:[%s3 + $0x100] sm:$0xf]
  %v1790 = vld [vmem:[%s3 + $0x104] sm:$0xf]
  %v1791 = vld [vmem:[%s3 + $0x108] sm:$0xf]
  %v1792 = vld [vmem:[%s3 + $0x10c] sm:$0xf]
  %v1793 = vld [vmem:[%s3 + $0x110] sm:$0xf]
  %v1794 = vld [vmem:[%s3 + $0x114] sm:$0xf]
  %v1795 = vld [vmem:[%s3 + $0x118] sm:$0xf]
  %v1796 = vld [vmem:[%s3 + $0x11c] sm:$0xf]
  %v1805 = vunpack.c.l.b16 %v1789
  %v1806 = vunpack.c.l.b16 %v1790
  %v1807 = vunpack.c.l.b16 %v1791
  %v1808 = vunpack.c.l.b16 %v1792
  %v1809 = vunpack.c.l.b16 %v1793
  %v1810 = vunpack.c.l.b16 %v1794
  %v1811 = vunpack.c.l.b16 %v1795
  %v1812 = vunpack.c.l.b16 %v1796
  %v1813 = vpack.c.b16 %v1806, %v1805
  %v1814 = vpack.c.b16 %v1808, %v1807
  %v1815 = vpack.c.b16 %v1810, %v1809
  %v1816 = vpack.c.b16 %v1812, %v1811
  %v1822 = vsel %vm1216, %v1173, 0
  %1824 = vmatprep.subr.bf16.mxu0 0
  %1825 = vmatpush1.bf16.msra.mxu0 %v1813
  %1826 = vmatprep.subr.bf16.mxu0 0
  %1827 = vmatpush1.bf16.msra.mxu0 %v1814
  %1828 = vmatprep.subr.bf16.mxu0 0
  %1829 = vmatpush1.bf16.msra.mxu0 %v1815
  %1830 = vmatprep.subr.bf16.mxu0 0
  %1831 = vmatpush1.bf16.msra.mxu0 %v1816
  %1832 = vmatprep.subr.bf16.mxu0 0
  %1833 = vmatpush1.bf16.msra.mxu0 0
  %1834 = vmatprep.subr.bf16.mxu0 0
  %1835 = vmatpush1.bf16.msra.mxu0 0
  %1836 = vmatprep.subr.bf16.mxu0 0
  %1837 = vmatpush1.bf16.msra.mxu0 0
  %1838 = vmatprep.subr.bf16.mxu0 0
  %1839 = vmatpush1.bf16.msra.mxu0 0
  %1840 = vmatprep.subr.bf16.mxu0 0
  %1841 = vmatpush1.bf16.msra.mxu0 0
  %1842 = vmatprep.subr.bf16.mxu0 0
  %1843 = vmatpush1.bf16.msra.mxu0 0
  %1844 = vmatprep.subr.bf16.mxu0 0
  %1845 = vmatpush1.bf16.msra.mxu0 0
  %1846 = vmatprep.subr.bf16.mxu0 0
  %1847 = vmatpush1.bf16.msra.mxu0 0
  %1848 = vmatprep.subr.bf16.mxu0 0
  %1849 = vmatpush1.bf16.msra.mxu0 0
  %1850 = vmatprep.subr.bf16.mxu0 0
  %1851 = vmatpush1.bf16.msra.mxu0 0
  %1852 = vmatprep.subr.bf16.mxu0 0
  %1853 = vmatpush1.bf16.msra.mxu0 0
  %1854 = vmatprep.subr.bf16.mxu0 0
  %1855 = vmatpush1.bf16.msra.mxu0 0
  %1856 = vmatprep.mubr.bf16.mxu0 0
  %1857 = vmatmul.mubr.bf16.gmra.mrb[0].mxu0 %v1822
  %v1858 = vpop.f32.mrb[0].mxu0
  %v1859 = vadd.f32 0.0, %v1858
  %v1860 = vpop.f32.mrb[0].mxu0
  %v1861 = vpop.f32.mrb[0].mxu0
  %v1862 = vpop.f32.mrb[0].mxu0
  %1863 = vdwg.mxu0
  %v1864 = vadd.f32 %v1788, %v1859
  %v1865 = vlaneseq
  %v1866 = vshrl.u32 %v1865, 7
  %v1867 = vsub.s32 0, %v1866
  %v1868 = vrot.slane %v32, %v1867
  %v1869 = vadd.f32 %v1864, %v1868
  %v1870 = vmax.f32 %v1869, 0.0
  %v1871 = vpack.c.bf16 %v1870, %v1870
  %v1872 = vld [vmem:[%s4] sm:$0xff]
  %v1873 = vld [vmem:[%s4 + $0x8] sm:$0xff]
  %v1874 = vld [vmem:[%s4 + $0x10] sm:$0xff]
  %v1875 = vld [vmem:[%s4 + $0x18] sm:$0xff]
  %v1876 = vld [vmem:[%s4 + $0x20] sm:$0xff]
  %v1877 = vld [vmem:[%s4 + $0x28] sm:$0xff]
  %v1878 = vld [vmem:[%s4 + $0x30] sm:$0xff]
  %v1879 = vld [vmem:[%s4 + $0x38] sm:$0xff]
  %v1880 = vld [vmem:[%s7] sm:$0xf]
  %v1882 = vlaneseq
  %v1883 = vshrl.u32 %v1882, 7
  %v1884 = vsub.s32 0, %v1883
  %v1885 = vrot.slane %v1880, %v1884
  %v1886 = vlaneseq
  %v1887 = vshrl.u32 %v1886, 7
  %v1888 = vsub.s32 1, %v1887
  %v1889 = vrot.slane %v1880, %v1888
  %v1890 = vlaneseq
  %v1891 = vshrl.u32 %v1890, 7
  %v1892 = vsub.s32 2, %v1891
  %v1893 = vrot.slane %v1880, %v1892
  %v1894 = vlaneseq
  %v1895 = vshrl.u32 %v1894, 7
  %v1896 = vsub.s32 3, %v1895
  %v1897 = vrot.slane %v1880, %v1896
  %v1910 = vunpack.c.l.b16 %v1872
  %v1911 = vunpack.c.h.b16 %v1872
  %v1912 = vunpack.c.l.b16 %v1873
  %v1913 = vunpack.c.h.b16 %v1873
  %v1914 = vunpack.c.l.b16 %v1874
  %v1915 = vunpack.c.h.b16 %v1874
  %v1916 = vunpack.c.l.b16 %v1875
  %v1917 = vunpack.c.h.b16 %v1875
  %v1918 = vunpack.c.l.b16 %v1876
  %v1919 = vunpack.c.h.b16 %v1876
  %v1920 = vunpack.c.l.b16 %v1877
  %v1921 = vunpack.c.h.b16 %v1877
  %v1922 = vunpack.c.l.b16 %v1878
  %v1923 = vunpack.c.h.b16 %v1878
  %v1924 = vunpack.c.l.b16 %v1879
  %v1925 = vunpack.c.h.b16 %v1879
  %v1926 = vpack.c.b16 %v1914, %v1910
  %v1927 = vpack.c.b16 %v1915, %v1911
  %v1928 = vpack.c.b16 %v1916, %v1912
  %v1929 = vpack.c.b16 %v1917, %v1913
  %v1930 = vpack.c.b16 %v1922, %v1918
  %v1931 = vpack.c.b16 %v1923, %v1919
  %v1932 = vpack.c.b16 %v1924, %v1920
  %v1933 = vpack.c.b16 %v1925, %v1921
  %vm1942 = vcmask 261120
  %v1944 = vsel %vm1942, %v1871, 0
  %1946 = vmatprep.subr.bf16.mxu0 %v1927
  %1947 = vmatpush1.bf16.msra.mxu0 %v1926
  %1948 = vmatprep.subr.bf16.mxu0 %v1931
  %1949 = vmatpush1.bf16.msra.mxu0 %v1930
  %1950 = vmatprep.subr.bf16.mxu0 0
  %1951 = vmatpush1.bf16.msra.mxu0 0
  %1952 = vmatprep.subr.bf16.mxu0 0
  %1953 = vmatpush1.bf16.msra.mxu0 0
  %1954 = vmatprep.subr.bf16.mxu0 0
  %1955 = vmatpush1.bf16.msra.mxu0 0
  %1956 = vmatprep.subr.bf16.mxu0 0
  %1957 = vmatpush1.bf16.msra.mxu0 0
  %1958 = vmatprep.subr.bf16.mxu0 0
  %1959 = vmatpush1.bf16.msra.mxu0 0
  %1960 = vmatprep.subr.bf16.mxu0 0
  %1961 = vmatpush1.bf16.msra.mxu0 0
  %1962 = vmatprep.subr.bf16.mxu0 0
  %1963 = vmatpush1.bf16.msra.mxu0 0
  %1964 = vmatprep.subr.bf16.mxu0 0
  %1965 = vmatpush1.bf16.msra.mxu0 0
  %1966 = vmatprep.subr.bf16.mxu0 0
  %1967 = vmatpush1.bf16.msra.mxu0 0
  %1968 = vmatprep.subr.bf16.mxu0 0
  %1969 = vmatpush1.bf16.msra.mxu0 0
  %1970 = vmatprep.subr.bf16.mxu0 0
  %1971 = vmatpush1.bf16.msra.mxu0 0
  %1972 = vmatprep.subr.bf16.mxu0 0
  %1973 = vmatpush1.bf16.msra.mxu0 0
  %1974 = vmatprep.subr.bf16.mxu0 0
  %1975 = vmatpush1.bf16.msra.mxu0 0
  %1976 = vmatprep.subr.bf16.mxu0 0
  %1977 = vmatpush1.bf16.msra.mxu0 0
  %1978 = vmatprep.mubr.bf16.mxu0 0
  %1979 = vmatmul.mubr.bf16.gmra.mrb[0].mxu0 %v1944
  %v1980 = vpop.f32.mrb[0].mxu0
  %v1981 = vadd.f32 %v1885, %v1980
  %v1982 = vpop.f32.mrb[0].mxu0
  %v1983 = vadd.f32 %v1889, %v1982
  %v1984 = vpop.f32.mrb[0].mxu0
  %v1985 = vpop.f32.mrb[0].mxu0
  %1986 = vdwg.mxu0
  %1987 = vmatprep.subr.bf16.mxu0 %v1929
  %1988 = vmatpush1.bf16.msra.mxu0 %v1928
  %1989 = vmatprep.subr.bf16.mxu0 %v1933
  %1990 = vmatpush1.bf16.msra.mxu0 %v1932
  %1991 = vmatprep.subr.bf16.mxu0 0
  %1992 = vmatpush1.bf16.msra.mxu0 0
  %1993 = vmatprep.subr.bf16.mxu0 0
  %1994 = vmatpush1.bf16.msra.mxu0 0
  %1995 = vmatprep.subr.bf16.mxu0 0
  %1996 = vmatpush1.bf16.msra.mxu0 0
  %1997 = vmatprep.subr.bf16.mxu0 0
  %1998 = vmatpush1.bf16.msra.mxu0 0
  %1999 = vmatprep.subr.bf16.mxu0 0
  %2000 = vmatpush1.bf16.msra.mxu0 0
  %2001 = vmatprep.subr.bf16.mxu0 0
  %2002 = vmatpush1.bf16.msra.mxu0 0
  %2003 = vmatprep.subr.bf16.mxu0 0
  %2004 = vmatpush1.bf16.msra.mxu0 0
  %2005 = vmatprep.subr.bf16.mxu0 0
  %2006 = vmatpush1.bf16.msra.mxu0 0
  %2007 = vmatprep.subr.bf16.mxu0 0
  %2008 = vmatpush1.bf16.msra.mxu0 0
  %2009 = vmatprep.subr.bf16.mxu0 0
  %2010 = vmatpush1.bf16.msra.mxu0 0
  %2011 = vmatprep.subr.bf16.mxu0 0
  %2012 = vmatpush1.bf16.msra.mxu0 0
  %2013 = vmatprep.subr.bf16.mxu0 0
  %2014 = vmatpush1.bf16.msra.mxu0 0
  %2015 = vmatprep.subr.bf16.mxu0 0
  %2016 = vmatpush1.bf16.msra.mxu0 0
  %2017 = vmatprep.subr.bf16.mxu0 0
  %2018 = vmatpush1.bf16.msra.mxu0 0
  %2019 = vmatprep.mubr.bf16.mxu0 0
  %2020 = vmatmul.mubr.bf16.gmra.mrb[0].mxu0 %v1944
  %v2021 = vpop.f32.mrb[0].mxu0
  %v2022 = vadd.f32 %v1893, %v2021
  %v2023 = vpop.f32.mrb[0].mxu0
  %v2024 = vadd.f32 %v1897, %v2023
  %v2025 = vpop.f32.mrb[0].mxu0
  %v2026 = vpop.f32.mrb[0].mxu0
  %2027 = vdwg.mxu0
  %v2028 = vmax.f32 %v1981, 0.0
  %v2029 = vmax.f32 %v1983, 0.0
  %v2030 = vmax.f32 %v2022, 0.0
  %v2031 = vmax.f32 %v2024, 0.0
  %v2032 = vld [vmem:[%s5] sm:$0xff]
  %v2033 = vld [vmem:[%s5 + $0x8] sm:$0xff]
  %v2034 = vld [vmem:[%s5 + $0x10] sm:$0xff]
  %v2035 = vld [vmem:[%s5 + $0x18] sm:$0xff]
  %v2036 = vld [vmem:[%s5 + $0x20] sm:$0xff]
  %v2037 = vld [vmem:[%s5 + $0x28] sm:$0xff]
  %v2038 = vld [vmem:[%s5 + $0x30] sm:$0xff]
  %v2039 = vld [vmem:[%s5 + $0x38] sm:$0xff]
  %v2040 = vld [vmem:[%s5 + $0x40] sm:$0xff]
  %v2041 = vld [vmem:[%s5 + $0x48] sm:$0xff]
  %v2042 = vld [vmem:[%s5 + $0x50] sm:$0xff]
  %v2043 = vld [vmem:[%s5 + $0x58] sm:$0xff]
  %v2044 = vld [vmem:[%s5 + $0x60] sm:$0xff]
  %v2045 = vld [vmem:[%s5 + $0x68] sm:$0xff]
  %v2046 = vld [vmem:[%s5 + $0x70] sm:$0xff]
  %v2047 = vld [vmem:[%s5 + $0x78] sm:$0xff]
  %v2048 = vld [vmem:[%s5 + $0x80] sm:$0xff]
  %v2049 = vld [vmem:[%s5 + $0x88] sm:$0xff]
  %v2050 = vld [vmem:[%s5 + $0x90] sm:$0xff]
  %v2051 = vld [vmem:[%s5 + $0x98] sm:$0xff]
  %v2052 = vld [vmem:[%s5 + $0xa0] sm:$0xff]
  %v2053 = vld [vmem:[%s5 + $0xa8] sm:$0xff]
  %v2054 = vld [vmem:[%s5 + $0xb0] sm:$0xff]
  %v2055 = vld [vmem:[%s5 + $0xb8] sm:$0xff]
  %v2056 = vld [vmem:[%s5 + $0xc0] sm:$0xff]
  %v2057 = vld [vmem:[%s5 + $0xc8] sm:$0xff]
  %v2058 = vld [vmem:[%s5 + $0xd0] sm:$0xff]
  %v2059 = vld [vmem:[%s5 + $0xd8] sm:$0xff]
  %v2060 = vld [vmem:[%s5 + $0xe0] sm:$0xff]
  %v2061 = vld [vmem:[%s5 + $0xe8] sm:$0xff]
  %v2062 = vld [vmem:[%s5 + $0xf0] sm:$0xff]
  %v2063 = vld [vmem:[%s5 + $0xf8] sm:$0xff]
  %v2064 = vld [vmem:[%s5 + $0x100] sm:$0xff]
  %v2065 = vld [vmem:[%s5 + $0x108] sm:$0xff]
  %v2066 = vld [vmem:[%s5 + $0x110] sm:$0xff]
  %v2067 = vld [vmem:[%s5 + $0x118] sm:$0xff]
  %v2068 = vld [vmem:[%s5 + $0x120] sm:$0xff]
  %v2069 = vld [vmem:[%s5 + $0x128] sm:$0xff]
  %v2070 = vld [vmem:[%s5 + $0x130] sm:$0xff]
  %v2071 = vld [vmem:[%s5 + $0x138] sm:$0xff]
  %v2072 = vld [vmem:[%s5 + $0x140] sm:$0xff]
  %v2073 = vld [vmem:[%s5 + $0x148] sm:$0xff]
  %v2074 = vld [vmem:[%s5 + $0x150] sm:$0xff]
  %v2075 = vld [vmem:[%s5 + $0x158] sm:$0xff]
  %v2076 = vld [vmem:[%s5 + $0x160] sm:$0xff]
  %v2077 = vld [vmem:[%s5 + $0x168] sm:$0xff]
  %v2078 = vld [vmem:[%s5 + $0x170] sm:$0xff]
  %v2079 = vld [vmem:[%s5 + $0x178] sm:$0xff]
  %v2080 = vld [vmem:[%s5 + $0x180] sm:$0xff]
  %v2081 = vld [vmem:[%s5 + $0x188] sm:$0xff]
  %v2082 = vld [vmem:[%s5 + $0x190] sm:$0xff]
  %v2083 = vld [vmem:[%s5 + $0x198] sm:$0xff]
  %v2084 = vld [vmem:[%s5 + $0x1a0] sm:$0xff]
  %v2085 = vld [vmem:[%s5 + $0x1a8] sm:$0xff]
  %v2086 = vld [vmem:[%s5 + $0x1b0] sm:$0xff]
  %v2087 = vld [vmem:[%s5 + $0x1b8] sm:$0xff]
  %v2088 = vld [vmem:[%s5 + $0x1c0] sm:$0xff]
  %v2089 = vld [vmem:[%s5 + $0x1c8] sm:$0xff]
  %v2090 = vld [vmem:[%s5 + $0x1d0] sm:$0xff]
  %v2091 = vld [vmem:[%s5 + $0x1d8] sm:$0xff]
  %v2092 = vld [vmem:[%s5 + $0x1e0] sm:$0xff]
  %v2093 = vld [vmem:[%s5 + $0x1e8] sm:$0xff]
  %v2094 = vld [vmem:[%s5 + $0x1f0] sm:$0xff]
  %v2095 = vld [vmem:[%s5 + $0x1f8] sm:$0xff]
  %v2096 = vlaneseq
  %v2097 = vshrl.u32 %v2096, 7
  %v2098 = vsub.s32 0, %v2097
  %v2099 = vrot.slane %v33, %v2098
  %2100 = vmatprep.subr.mxu0 0.0
  %v2101 = vand.u32 %v2032, 4294901760
  %2102 = vmatpush1.msra.mxu0 %v2101
  %2103 = vmatprep.subr.mxu0 0.0
  %v2104 = vand.u32 %v2033, 4294901760
  %2105 = vmatpush1.msra.mxu0 %v2104
  %2106 = vmatprep.subr.mxu0 0.0
  %v2107 = vand.u32 %v2034, 4294901760
  %2108 = vmatpush1.msra.mxu0 %v2107
  %2109 = vmatprep.subr.mxu0 0.0
  %v2110 = vand.u32 %v2035, 4294901760
  %2111 = vmatpush1.msra.mxu0 %v2110
  %2112 = vmatprep.subr.mxu0 0.0
  %v2113 = vand.u32 %v2036, 4294901760
  %2114 = vmatpush1.msra.mxu0 %v2113
  %2115 = vmatprep.subr.mxu0 0.0
  %v2116 = vand.u32 %v2037, 4294901760
  %2117 = vmatpush1.msra.mxu0 %v2116
  %2118 = vmatprep.subr.mxu0 0.0
  %v2119 = vand.u32 %v2038, 4294901760
  %2120 = vmatpush1.msra.mxu0 %v2119
  %2121 = vmatprep.subr.mxu0 0.0
  %v2122 = vand.u32 %v2039, 4294901760
  %2123 = vmatpush1.msra.mxu0 %v2122
  %2124 = vmatprep.subr.mxu0 0.0
  %v2125 = vand.u32 %v2040, 4294901760
  %2126 = vmatpush1.msra.mxu0 %v2125
  %2127 = vmatprep.subr.mxu0 0.0
  %v2128 = vand.u32 %v2041, 4294901760
  %2129 = vmatpush1.msra.mxu0 %v2128
  %2130 = vmatprep.subr.mxu0 0.0
  %v2131 = vand.u32 %v2042, 4294901760
  %2132 = vmatpush1.msra.mxu0 %v2131
  %2133 = vmatprep.subr.mxu0 0.0
  %v2134 = vand.u32 %v2043, 4294901760
  %2135 = vmatpush1.msra.mxu0 %v2134
  %2136 = vmatprep.subr.mxu0 0.0
  %v2137 = vand.u32 %v2044, 4294901760
  %2138 = vmatpush1.msra.mxu0 %v2137
  %2139 = vmatprep.subr.mxu0 0.0
  %v2140 = vand.u32 %v2045, 4294901760
  %2141 = vmatpush1.msra.mxu0 %v2140
  %2142 = vmatprep.subr.mxu0 0.0
  %v2143 = vand.u32 %v2046, 4294901760
  %2144 = vmatpush1.msra.mxu0 %v2143
  %2145 = vmatprep.subr.mxu0 0.0
  %v2146 = vand.u32 %v2047, 4294901760
  %2147 = vmatpush1.msra.mxu0 %v2146
  %2148 = vmatprep.subr.mxu0 0.0
  %v2149 = vand.u32 %v2048, 4294901760
  %2150 = vmatpush1.msra.mxu0 %v2149
  %2151 = vmatprep.subr.mxu0 0.0
  %v2152 = vand.u32 %v2049, 4294901760
  %2153 = vmatpush1.msra.mxu0 %v2152
  %2154 = vmatprep.subr.mxu0 0.0
  %v2155 = vand.u32 %v2050, 4294901760
  %2156 = vmatpush1.msra.mxu0 %v2155
  %2157 = vmatprep.subr.mxu0 0.0
  %v2158 = vand.u32 %v2051, 4294901760
  %2159 = vmatpush1.msra.mxu0 %v2158
  %2160 = vmatprep.subr.mxu0 0.0
  %v2161 = vand.u32 %v2052, 4294901760
  %2162 = vmatpush1.msra.mxu0 %v2161
  %2163 = vmatprep.subr.mxu0 0.0
  %v2164 = vand.u32 %v2053, 4294901760
  %2165 = vmatpush1.msra.mxu0 %v2164
  %2166 = vmatprep.subr.mxu0 0.0
  %v2167 = vand.u32 %v2054, 4294901760
  %2168 = vmatpush1.msra.mxu0 %v2167
  %2169 = vmatprep.subr.mxu0 0.0
  %v2170 = vand.u32 %v2055, 4294901760
  %2171 = vmatpush1.msra.mxu0 %v2170
  %2172 = vmatprep.subr.mxu0 0.0
  %v2173 = vand.u32 %v2056, 4294901760
  %2174 = vmatpush1.msra.mxu0 %v2173
  %2175 = vmatprep.subr.mxu0 0.0
  %v2176 = vand.u32 %v2057, 4294901760
  %2177 = vmatpush1.msra.mxu0 %v2176
  %2178 = vmatprep.subr.mxu0 0.0
  %v2179 = vand.u32 %v2058, 4294901760
  %2180 = vmatpush1.msra.mxu0 %v2179
  %2181 = vmatprep.subr.mxu0 0.0
  %v2182 = vand.u32 %v2059, 4294901760
  %2183 = vmatpush1.msra.mxu0 %v2182
  %2184 = vmatprep.subr.mxu0 0.0
  %v2185 = vand.u32 %v2060, 4294901760
  %2186 = vmatpush1.msra.mxu0 %v2185
  %2187 = vmatprep.subr.mxu0 0.0
  %v2188 = vand.u32 %v2061, 4294901760
  %2189 = vmatpush1.msra.mxu0 %v2188
  %2190 = vmatprep.subr.mxu0 0.0
  %v2191 = vand.u32 %v2062, 4294901760
  %2192 = vmatpush1.msra.mxu0 %v2191
  %2193 = vmatprep.subr.mxu0 0.0
  %v2194 = vand.u32 %v2063, 4294901760
  %2195 = vmatpush1.msra.mxu0 %v2194
  %v2196 = vand.u32 %v2029, 4294901760
  %v2197 = vsub.f32 %v2029, %v2196
  %v2198 = vand.u32 %v2197, 4294901760
  %v2199 = vsub.f32 %v2197, %v2198
  %v2200 = vand.u32 %v2199, 4294901760
  %2201 = vmatprep.mubr.f32.mxu0 %v2200
  %v2202 = vand.u32 %v2028, 4294901760
  %v2203 = vsub.f32 %v2028, %v2202
  %v2204 = vand.u32 %v2203, 4294901760
  %v2205 = vsub.f32 %v2203, %v2204
  %v2206 = vand.u32 %v2205, 4294901760
  %2207 = vmatmul.mubr.f32.gmra.mrb[0].mxu0 %v2206
  %v2208 = vpop.f32.mrb[0].mxu0
  %v2209 = vadd.f32 %v2099, %v2208
  %v2210 = vpop.f32.mrb[0].mxu0
  %2211 = vdwg.mxu0
  %2212 = vmatprep.subr.mxu0 0.0
  %v2213 = vand.u32 %v2032, 4294901760
  %v2214 = vsub.f32 %v2032, %v2213
  %v2215 = vand.u32 %v2214, 4294901760
  %v2216 = vsub.f32 %v2214, %v2215
  %v2217 = vand.u32 %v2216, 4294901760
  %2218 = vmatpush1.msra.mxu0 %v2217
  %2219 = vmatprep.subr.mxu0 0.0
  %v2220 = vand.u32 %v2033, 4294901760
  %v2221 = vsub.f32 %v2033, %v2220
  %v2222 = vand.u32 %v2221, 4294901760
  %v2223 = vsub.f32 %v2221, %v2222
  %v2224 = vand.u32 %v2223, 4294901760
  %2225 = vmatpush1.msra.mxu0 %v2224
  %2226 = vmatprep.subr.mxu0 0.0
  %v2227 = vand.u32 %v2034, 4294901760
  %v2228 = vsub.f32 %v2034, %v2227
  %v2229 = vand.u32 %v2228, 4294901760
  %v2230 = vsub.f32 %v2228, %v2229
  %v2231 = vand.u32 %v2230, 4294901760
  %2232 = vmatpush1.msra.mxu0 %v2231
  %2233 = vmatprep.subr.mxu0 0.0
  %v2234 = vand.u32 %v2035, 4294901760
  %v2235 = vsub.f32 %v2035, %v2234
  %v2236 = vand.u32 %v2235, 4294901760
  %v2237 = vsub.f32 %v2235, %v2236
  %v2238 = vand.u32 %v2237, 4294901760
  %2239 = vmatpush1.msra.mxu0 %v2238
  %2240 = vmatprep.subr.mxu0 0.0
  %v2241 = vand.u32 %v2036, 4294901760
  %v2242 = vsub.f32 %v2036, %v2241
  %v2243 = vand.u32 %v2242, 4294901760
  %v2244 = vsub.f32 %v2242, %v2243
  %v2245 = vand.u32 %v2244, 4294901760
  %2246 = vmatpush1.msra.mxu0 %v2245
  %2247 = vmatprep.subr.mxu0 0.0
  %v2248 = vand.u32 %v2037, 4294901760
  %v2249 = vsub.f32 %v2037, %v2248
  %v2250 = vand.u32 %v2249, 4294901760
  %v2251 = vsub.f32 %v2249, %v2250
  %v2252 = vand.u32 %v2251, 4294901760
  %2253 = vmatpush1.msra.mxu0 %v2252
  %2254 = vmatprep.subr.mxu0 0.0
  %v2255 = vand.u32 %v2038, 4294901760
  %v2256 = vsub.f32 %v2038, %v2255
  %v2257 = vand.u32 %v2256, 4294901760
  %v2258 = vsub.f32 %v2256, %v2257
  %v2259 = vand.u32 %v2258, 4294901760
  %2260 = vmatpush1.msra.mxu0 %v2259
  %2261 = vmatprep.subr.mxu0 0.0
  %v2262 = vand.u32 %v2039, 4294901760
  %v2263 = vsub.f32 %v2039, %v2262
  %v2264 = vand.u32 %v2263, 4294901760
  %v2265 = vsub.f32 %v2263, %v2264
  %v2266 = vand.u32 %v2265, 4294901760
  %2267 = vmatpush1.msra.mxu0 %v2266
  %2268 = vmatprep.subr.mxu0 0.0
  %v2269 = vand.u32 %v2040, 4294901760
  %v2270 = vsub.f32 %v2040, %v2269
  %v2271 = vand.u32 %v2270, 4294901760
  %v2272 = vsub.f32 %v2270, %v2271
  %v2273 = vand.u32 %v2272, 4294901760
  %2274 = vmatpush1.msra.mxu0 %v2273
  %2275 = vmatprep.subr.mxu0 0.0
  %v2276 = vand.u32 %v2041, 4294901760
  %v2277 = vsub.f32 %v2041, %v2276
  %v2278 = vand.u32 %v2277, 4294901760
  %v2279 = vsub.f32 %v2277, %v2278
  %v2280 = vand.u32 %v2279, 4294901760
  %2281 = vmatpush1.msra.mxu0 %v2280
  %2282 = vmatprep.subr.mxu0 0.0
  %v2283 = vand.u32 %v2042, 4294901760
  %v2284 = vsub.f32 %v2042, %v2283
  %v2285 = vand.u32 %v2284, 4294901760
  %v2286 = vsub.f32 %v2284, %v2285
  %v2287 = vand.u32 %v2286, 4294901760
  %2288 = vmatpush1.msra.mxu0 %v2287
  %2289 = vmatprep.subr.mxu0 0.0
  %v2290 = vand.u32 %v2043, 4294901760
  %v2291 = vsub.f32 %v2043, %v2290
  %v2292 = vand.u32 %v2291, 4294901760
  %v2293 = vsub.f32 %v2291, %v2292
  %v2294 = vand.u32 %v2293, 4294901760
  %2295 = vmatpush1.msra.mxu0 %v2294
  %2296 = vmatprep.subr.mxu0 0.0
  %v2297 = vand.u32 %v2044, 4294901760
  %v2298 = vsub.f32 %v2044, %v2297
  %v2299 = vand.u32 %v2298, 4294901760
  %v2300 = vsub.f32 %v2298, %v2299
  %v2301 = vand.u32 %v2300, 4294901760
  %2302 = vmatpush1.msra.mxu0 %v2301
  %2303 = vmatprep.subr.mxu0 0.0
  %v2304 = vand.u32 %v2045, 4294901760
  %v2305 = vsub.f32 %v2045, %v2304
  %v2306 = vand.u32 %v2305, 4294901760
  %v2307 = vsub.f32 %v2305, %v2306
  %v2308 = vand.u32 %v2307, 4294901760
  %2309 = vmatpush1.msra.mxu0 %v2308
  %2310 = vmatprep.subr.mxu0 0.0
  %v2311 = vand.u32 %v2046, 4294901760
  %v2312 = vsub.f32 %v2046, %v2311
  %v2313 = vand.u32 %v2312, 4294901760
  %v2314 = vsub.f32 %v2312, %v2313
  %v2315 = vand.u32 %v2314, 4294901760
  %2316 = vmatpush1.msra.mxu0 %v2315
  %2317 = vmatprep.subr.mxu0 0.0
  %v2318 = vand.u32 %v2047, 4294901760
  %v2319 = vsub.f32 %v2047, %v2318
  %v2320 = vand.u32 %v2319, 4294901760
  %v2321 = vsub.f32 %v2319, %v2320
  %v2322 = vand.u32 %v2321, 4294901760
  %2323 = vmatpush1.msra.mxu0 %v2322
  %2324 = vmatprep.subr.mxu0 0.0
  %v2325 = vand.u32 %v2048, 4294901760
  %v2326 = vsub.f32 %v2048, %v2325
  %v2327 = vand.u32 %v2326, 4294901760
  %v2328 = vsub.f32 %v2326, %v2327
  %v2329 = vand.u32 %v2328, 4294901760
  %2330 = vmatpush1.msra.mxu0 %v2329
  %2331 = vmatprep.subr.mxu0 0.0
  %v2332 = vand.u32 %v2049, 4294901760
  %v2333 = vsub.f32 %v2049, %v2332
  %v2334 = vand.u32 %v2333, 4294901760
  %v2335 = vsub.f32 %v2333, %v2334
  %v2336 = vand.u32 %v2335, 4294901760
  %2337 = vmatpush1.msra.mxu0 %v2336
  %2338 = vmatprep.subr.mxu0 0.0
  %v2339 = vand.u32 %v2050, 4294901760
  %v2340 = vsub.f32 %v2050, %v2339
  %v2341 = vand.u32 %v2340, 4294901760
  %v2342 = vsub.f32 %v2340, %v2341
  %v2343 = vand.u32 %v2342, 4294901760
  %2344 = vmatpush1.msra.mxu0 %v2343
  %2345 = vmatprep.subr.mxu0 0.0
  %v2346 = vand.u32 %v2051, 4294901760
  %v2347 = vsub.f32 %v2051, %v2346
  %v2348 = vand.u32 %v2347, 4294901760
  %v2349 = vsub.f32 %v2347, %v2348
  %v2350 = vand.u32 %v2349, 4294901760
  %2351 = vmatpush1.msra.mxu0 %v2350
  %2352 = vmatprep.subr.mxu0 0.0
  %v2353 = vand.u32 %v2052, 4294901760
  %v2354 = vsub.f32 %v2052, %v2353
  %v2355 = vand.u32 %v2354, 4294901760
  %v2356 = vsub.f32 %v2354, %v2355
  %v2357 = vand.u32 %v2356, 4294901760
  %2358 = vmatpush1.msra.mxu0 %v2357
  %2359 = vmatprep.subr.mxu0 0.0
  %v2360 = vand.u32 %v2053, 4294901760
  %v2361 = vsub.f32 %v2053, %v2360
  %v2362 = vand.u32 %v2361, 4294901760
  %v2363 = vsub.f32 %v2361, %v2362
  %v2364 = vand.u32 %v2363, 4294901760
  %2365 = vmatpush1.msra.mxu0 %v2364
  %2366 = vmatprep.subr.mxu0 0.0
  %v2367 = vand.u32 %v2054, 4294901760
  %v2368 = vsub.f32 %v2054, %v2367
  %v2369 = vand.u32 %v2368, 4294901760
  %v2370 = vsub.f32 %v2368, %v2369
  %v2371 = vand.u32 %v2370, 4294901760
  %2372 = vmatpush1.msra.mxu0 %v2371
  %2373 = vmatprep.subr.mxu0 0.0
  %v2374 = vand.u32 %v2055, 4294901760
  %v2375 = vsub.f32 %v2055, %v2374
  %v2376 = vand.u32 %v2375, 4294901760
  %v2377 = vsub.f32 %v2375, %v2376
  %v2378 = vand.u32 %v2377, 4294901760
  %2379 = vmatpush1.msra.mxu0 %v2378
  %2380 = vmatprep.subr.mxu0 0.0
  %v2381 = vand.u32 %v2056, 4294901760
  %v2382 = vsub.f32 %v2056, %v2381
  %v2383 = vand.u32 %v2382, 4294901760
  %v2384 = vsub.f32 %v2382, %v2383
  %v2385 = vand.u32 %v2384, 4294901760
  %2386 = vmatpush1.msra.mxu0 %v2385
  %2387 = vmatprep.subr.mxu0 0.0
  %v2388 = vand.u32 %v2057, 4294901760
  %v2389 = vsub.f32 %v2057, %v2388
  %v2390 = vand.u32 %v2389, 4294901760
  %v2391 = vsub.f32 %v2389, %v2390
  %v2392 = vand.u32 %v2391, 4294901760
  %2393 = vmatpush1.msra.mxu0 %v2392
  %2394 = vmatprep.subr.mxu0 0.0
  %v2395 = vand.u32 %v2058, 4294901760
  %v2396 = vsub.f32 %v2058, %v2395
  %v2397 = vand.u32 %v2396, 4294901760
  %v2398 = vsub.f32 %v2396, %v2397
  %v2399 = vand.u32 %v2398, 4294901760
  %2400 = vmatpush1.msra.mxu0 %v2399
  %2401 = vmatprep.subr.mxu0 0.0
  %v2402 = vand.u32 %v2059, 4294901760
  %v2403 = vsub.f32 %v2059, %v2402
  %v2404 = vand.u32 %v2403, 4294901760
  %v2405 = vsub.f32 %v2403, %v2404
  %v2406 = vand.u32 %v2405, 4294901760
  %2407 = vmatpush1.msra.mxu0 %v2406
  %2408 = vmatprep.subr.mxu0 0.0
  %v2409 = vand.u32 %v2060, 4294901760
  %v2410 = vsub.f32 %v2060, %v2409
  %v2411 = vand.u32 %v2410, 4294901760
  %v2412 = vsub.f32 %v2410, %v2411
  %v2413 = vand.u32 %v2412, 4294901760
  %2414 = vmatpush1.msra.mxu0 %v2413
  %2415 = vmatprep.subr.mxu0 0.0
  %v2416 = vand.u32 %v2061, 4294901760
  %v2417 = vsub.f32 %v2061, %v2416
  %v2418 = vand.u32 %v2417, 4294901760
  %v2419 = vsub.f32 %v2417, %v2418
  %v2420 = vand.u32 %v2419, 4294901760
  %2421 = vmatpush1.msra.mxu0 %v2420
  %2422 = vmatprep.subr.mxu0 0.0
  %v2423 = vand.u32 %v2062, 4294901760
  %v2424 = vsub.f32 %v2062, %v2423
  %v2425 = vand.u32 %v2424, 4294901760
  %v2426 = vsub.f32 %v2424, %v2425
  %v2427 = vand.u32 %v2426, 4294901760
  %2428 = vmatpush1.msra.mxu0 %v2427
  %2429 = vmatprep.subr.mxu0 0.0
  %v2430 = vand.u32 %v2063, 4294901760
  %v2431 = vsub.f32 %v2063, %v2430
  %v2432 = vand.u32 %v2431, 4294901760
  %v2433 = vsub.f32 %v2431, %v2432
  %v2434 = vand.u32 %v2433, 4294901760
  %2435 = vmatpush1.msra.mxu0 %v2434
  %v2436 = vand.u32 %v2029, 4294901760
  %2437 = vmatprep.mubr.f32.mxu0 %v2436
  %v2438 = vand.u32 %v2028, 4294901760
  %2439 = vmatmul.mubr.f32.gmra.mrb[0].mxu0 %v2438
  %v2440 = vpop.f32.mrb[0].mxu0
  %v2441 = vadd.f32 %v2209, %v2440
  %v2442 = vpop.f32.mrb[0].mxu0
  %2443 = vdwg.mxu0
  %2444 = vmatprep.subr.mxu0 0.0
  %v2445 = vand.u32 %v2032, 4294901760
  %v2446 = vsub.f32 %v2032, %v2445
  %2447 = vmatpush1.msra.mxu0 %v2446
  %2448 = vmatprep.subr.mxu0 0.0
  %v2449 = vand.u32 %v2033, 4294901760
  %v2450 = vsub.f32 %v2033, %v2449
  %2451 = vmatpush1.msra.mxu0 %v2450
  %2452 = vmatprep.subr.mxu0 0.0
  %v2453 = vand.u32 %v2034, 4294901760
  %v2454 = vsub.f32 %v2034, %v2453
  %2455 = vmatpush1.msra.mxu0 %v2454
  %2456 = vmatprep.subr.mxu0 0.0
  %v2457 = vand.u32 %v2035, 4294901760
  %v2458 = vsub.f32 %v2035, %v2457
  %2459 = vmatpush1.msra.mxu0 %v2458
  %2460 = vmatprep.subr.mxu0 0.0
  %v2461 = vand.u32 %v2036, 4294901760
  %v2462 = vsub.f32 %v2036, %v2461
  %2463 = vmatpush1.msra.mxu0 %v2462
  %2464 = vmatprep.subr.mxu0 0.0
  %v2465 = vand.u32 %v2037, 4294901760
  %v2466 = vsub.f32 %v2037, %v2465
  %2467 = vmatpush1.msra.mxu0 %v2466
  %2468 = vmatprep.subr.mxu0 0.0
  %v2469 = vand.u32 %v2038, 4294901760
  %v2470 = vsub.f32 %v2038, %v2469
  %2471 = vmatpush1.msra.mxu0 %v2470
  %2472 = vmatprep.subr.mxu0 0.0
  %v2473 = vand.u32 %v2039, 4294901760
  %v2474 = vsub.f32 %v2039, %v2473
  %2475 = vmatpush1.msra.mxu0 %v2474
  %2476 = vmatprep.subr.mxu0 0.0
  %v2477 = vand.u32 %v2040, 4294901760
  %v2478 = vsub.f32 %v2040, %v2477
  %2479 = vmatpush1.msra.mxu0 %v2478
  %2480 = vmatprep.subr.mxu0 0.0
  %v2481 = vand.u32 %v2041, 4294901760
  %v2482 = vsub.f32 %v2041, %v2481
  %2483 = vmatpush1.msra.mxu0 %v2482
  %2484 = vmatprep.subr.mxu0 0.0
  %v2485 = vand.u32 %v2042, 4294901760
  %v2486 = vsub.f32 %v2042, %v2485
  %2487 = vmatpush1.msra.mxu0 %v2486
  %2488 = vmatprep.subr.mxu0 0.0
  %v2489 = vand.u32 %v2043, 4294901760
  %v2490 = vsub.f32 %v2043, %v2489
  %2491 = vmatpush1.msra.mxu0 %v2490
  %2492 = vmatprep.subr.mxu0 0.0
  %v2493 = vand.u32 %v2044, 4294901760
  %v2494 = vsub.f32 %v2044, %v2493
  %2495 = vmatpush1.msra.mxu0 %v2494
  %2496 = vmatprep.subr.mxu0 0.0
  %v2497 = vand.u32 %v2045, 4294901760
  %v2498 = vsub.f32 %v2045, %v2497
  %2499 = vmatpush1.msra.mxu0 %v2498
  %2500 = vmatprep.subr.mxu0 0.0
  %v2501 = vand.u32 %v2046, 4294901760
  %v2502 = vsub.f32 %v2046, %v2501
  %2503 = vmatpush1.msra.mxu0 %v2502
  %2504 = vmatprep.subr.mxu0 0.0
  %v2505 = vand.u32 %v2047, 4294901760
  %v2506 = vsub.f32 %v2047, %v2505
  %2507 = vmatpush1.msra.mxu0 %v2506
  %2508 = vmatprep.subr.mxu0 0.0
  %v2509 = vand.u32 %v2048, 4294901760
  %v2510 = vsub.f32 %v2048, %v2509
  %2511 = vmatpush1.msra.mxu0 %v2510
  %2512 = vmatprep.subr.mxu0 0.0
  %v2513 = vand.u32 %v2049, 4294901760
  %v2514 = vsub.f32 %v2049, %v2513
  %2515 = vmatpush1.msra.mxu0 %v2514
  %2516 = vmatprep.subr.mxu0 0.0
  %v2517 = vand.u32 %v2050, 4294901760
  %v2518 = vsub.f32 %v2050, %v2517
  %2519 = vmatpush1.msra.mxu0 %v2518
  %2520 = vmatprep.subr.mxu0 0.0
  %v2521 = vand.u32 %v2051, 4294901760
  %v2522 = vsub.f32 %v2051, %v2521
  %2523 = vmatpush1.msra.mxu0 %v2522
  %2524 = vmatprep.subr.mxu0 0.0
  %v2525 = vand.u32 %v2052, 4294901760
  %v2526 = vsub.f32 %v2052, %v2525
  %2527 = vmatpush1.msra.mxu0 %v2526
  %2528 = vmatprep.subr.mxu0 0.0
  %v2529 = vand.u32 %v2053, 4294901760
  %v2530 = vsub.f32 %v2053, %v2529
  %2531 = vmatpush1.msra.mxu0 %v2530
  %2532 = vmatprep.subr.mxu0 0.0
  %v2533 = vand.u32 %v2054, 4294901760
  %v2534 = vsub.f32 %v2054, %v2533
  %2535 = vmatpush1.msra.mxu0 %v2534
  %2536 = vmatprep.subr.mxu0 0.0
  %v2537 = vand.u32 %v2055, 4294901760
  %v2538 = vsub.f32 %v2055, %v2537
  %2539 = vmatpush1.msra.mxu0 %v2538
  %2540 = vmatprep.subr.mxu0 0.0
  %v2541 = vand.u32 %v2056, 4294901760
  %v2542 = vsub.f32 %v2056, %v2541
  %2543 = vmatpush1.msra.mxu0 %v2542
  %2544 = vmatprep.subr.mxu0 0.0
  %v2545 = vand.u32 %v2057, 4294901760
  %v2546 = vsub.f32 %v2057, %v2545
  %2547 = vmatpush1.msra.mxu0 %v2546
  %2548 = vmatprep.subr.mxu0 0.0
  %v2549 = vand.u32 %v2058, 4294901760
  %v2550 = vsub.f32 %v2058, %v2549
  %2551 = vmatpush1.msra.mxu0 %v2550
  %2552 = vmatprep.subr.mxu0 0.0
  %v2553 = vand.u32 %v2059, 4294901760
  %v2554 = vsub.f32 %v2059, %v2553
  %2555 = vmatpush1.msra.mxu0 %v2554
  %2556 = vmatprep.subr.mxu0 0.0
  %v2557 = vand.u32 %v2060, 4294901760
  %v2558 = vsub.f32 %v2060, %v2557
  %2559 = vmatpush1.msra.mxu0 %v2558
  %2560 = vmatprep.subr.mxu0 0.0
  %v2561 = vand.u32 %v2061, 4294901760
  %v2562 = vsub.f32 %v2061, %v2561
  %2563 = vmatpush1.msra.mxu0 %v2562
  %2564 = vmatprep.subr.mxu0 0.0
  %v2565 = vand.u32 %v2062, 4294901760
  %v2566 = vsub.f32 %v2062, %v2565
  %2567 = vmatpush1.msra.mxu0 %v2566
  %2568 = vmatprep.subr.mxu0 0.0
  %v2569 = vand.u32 %v2063, 4294901760
  %v2570 = vsub.f32 %v2063, %v2569
  %2571 = vmatpush1.msra.mxu0 %v2570
  %v2572 = vand.u32 %v2029, 4294901760
  %v2573 = vsub.f32 %v2029, %v2572
  %2574 = vmatprep.mubr.f32.mxu0 %v2573
  %v2575 = vand.u32 %v2028, 4294901760
  %v2576 = vsub.f32 %v2028, %v2575
  %2577 = vmatmul.mubr.f32.gmra.mrb[0].mxu0 %v2576
  %v2578 = vpop.f32.mrb[0].mxu0
  %v2579 = vadd.f32 %v2441, %v2578
  %v2580 = vpop.f32.mrb[0].mxu0
  %2581 = vdwg.mxu0
  %2582 = vmatprep.subr.mxu0 0.0
  %v2583 = vand.u32 %v2032, 4294901760
  %2584 = vmatpush1.msra.mxu0 %v2583
  %2585 = vmatprep.subr.mxu0 0.0
  %v2586 = vand.u32 %v2033, 4294901760
  %2587 = vmatpush1.msra.mxu0 %v2586
  %2588 = vmatprep.subr.mxu0 0.0
  %v2589 = vand.u32 %v2034, 4294901760
  %2590 = vmatpush1.msra.mxu0 %v2589
  %2591 = vmatprep.subr.mxu0 0.0
  %v2592 = vand.u32 %v2035, 4294901760
  %2593 = vmatpush1.msra.mxu0 %v2592
  %2594 = vmatprep.subr.mxu0 0.0
  %v2595 = vand.u32 %v2036, 4294901760
  %2596 = vmatpush1.msra.mxu0 %v2595
  %2597 = vmatprep.subr.mxu0 0.0
  %v2598 = vand.u32 %v2037, 4294901760
  %2599 = vmatpush1.msra.mxu0 %v2598
  %2600 = vmatprep.subr.mxu0 0.0
  %v2601 = vand.u32 %v2038, 4294901760
  %2602 = vmatpush1.msra.mxu0 %v2601
  %2603 = vmatprep.subr.mxu0 0.0
  %v2604 = vand.u32 %v2039, 4294901760
  %2605 = vmatpush1.msra.mxu0 %v2604
  %2606 = vmatprep.subr.mxu0 0.0
  %v2607 = vand.u32 %v2040, 4294901760
  %2608 = vmatpush1.msra.mxu0 %v2607
  %2609 = vmatprep.subr.mxu0 0.0
  %v2610 = vand.u32 %v2041, 4294901760
  %2611 = vmatpush1.msra.mxu0 %v2610
  %2612 = vmatprep.subr.mxu0 0.0
  %v2613 = vand.u32 %v2042, 4294901760
  %2614 = vmatpush1.msra.mxu0 %v2613
  %2615 = vmatprep.subr.mxu0 0.0
  %v2616 = vand.u32 %v2043, 4294901760
  %2617 = vmatpush1.msra.mxu0 %v2616
  %2618 = vmatprep.subr.mxu0 0.0
  %v2619 = vand.u32 %v2044, 4294901760
  %2620 = vmatpush1.msra.mxu0 %v2619
  %2621 = vmatprep.subr.mxu0 0.0
  %v2622 = vand.u32 %v2045, 4294901760
  %2623 = vmatpush1.msra.mxu0 %v2622
  %2624 = vmatprep.subr.mxu0 0.0
  %v2625 = vand.u32 %v2046, 4294901760
  %2626 = vmatpush1.msra.mxu0 %v2625
  %2627 = vmatprep.subr.mxu0 0.0
  %v2628 = vand.u32 %v2047, 4294901760
  %2629 = vmatpush1.msra.mxu0 %v2628
  %2630 = vmatprep.subr.mxu0 0.0
  %v2631 = vand.u32 %v2048, 4294901760
  %2632 = vmatpush1.msra.mxu0 %v2631
  %2633 = vmatprep.subr.mxu0 0.0
  %v2634 = vand.u32 %v2049, 4294901760
  %2635 = vmatpush1.msra.mxu0 %v2634
  %2636 = vmatprep.subr.mxu0 0.0
  %v2637 = vand.u32 %v2050, 4294901760
  %2638 = vmatpush1.msra.mxu0 %v2637
  %2639 = vmatprep.subr.mxu0 0.0
  %v2640 = vand.u32 %v2051, 4294901760
  %2641 = vmatpush1.msra.mxu0 %v2640
  %2642 = vmatprep.subr.mxu0 0.0
  %v2643 = vand.u32 %v2052, 4294901760
  %2644 = vmatpush1.msra.mxu0 %v2643
  %2645 = vmatprep.subr.mxu0 0.0
  %v2646 = vand.u32 %v2053, 4294901760
  %2647 = vmatpush1.msra.mxu0 %v2646
  %2648 = vmatprep.subr.mxu0 0.0
  %v2649 = vand.u32 %v2054, 4294901760
  %2650 = vmatpush1.msra.mxu0 %v2649
  %2651 = vmatprep.subr.mxu0 0.0
  %v2652 = vand.u32 %v2055, 4294901760
  %2653 = vmatpush1.msra.mxu0 %v2652
  %2654 = vmatprep.subr.mxu0 0.0
  %v2655 = vand.u32 %v2056, 4294901760
  %2656 = vmatpush1.msra.mxu0 %v2655
  %2657 = vmatprep.subr.mxu0 0.0
  %v2658 = vand.u32 %v2057, 4294901760
  %2659 = vmatpush1.msra.mxu0 %v2658
  %2660 = vmatprep.subr.mxu0 0.0
  %v2661 = vand.u32 %v2058, 4294901760
  %2662 = vmatpush1.msra.mxu0 %v2661
  %2663 = vmatprep.subr.mxu0 0.0
  %v2664 = vand.u32 %v2059, 4294901760
  %2665 = vmatpush1.msra.mxu0 %v2664
  %2666 = vmatprep.subr.mxu0 0.0
  %v2667 = vand.u32 %v2060, 4294901760
  %2668 = vmatpush1.msra.mxu0 %v2667
  %2669 = vmatprep.subr.mxu0 0.0
  %v2670 = vand.u32 %v2061, 4294901760
  %2671 = vmatpush1.msra.mxu0 %v2670
  %2672 = vmatprep.subr.mxu0 0.0
  %v2673 = vand.u32 %v2062, 4294901760
  %2674 = vmatpush1.msra.mxu0 %v2673
  %2675 = vmatprep.subr.mxu0 0.0
  %v2676 = vand.u32 %v2063, 4294901760
  %2677 = vmatpush1.msra.mxu0 %v2676
  %v2678 = vand.u32 %v2029, 4294901760
  %v2679 = vsub.f32 %v2029, %v2678
  %v2680 = vand.u32 %v2679, 4294901760
  %2681 = vmatprep.mubr.f32.mxu0 %v2680
  %v2682 = vand.u32 %v2028, 4294901760
  %v2683 = vsub.f32 %v2028, %v2682
  %v2684 = vand.u32 %v2683, 4294901760
  %2685 = vmatmul.mubr.f32.gmra.mrb[0].mxu0 %v2684
  %v2686 = vpop.f32.mrb[0].mxu0
  %v2687 = vadd.f32 %v2579, %v2686
  %v2688 = vpop.f32.mrb[0].mxu0
  %2689 = vdwg.mxu0
  %2690 = vmatprep.subr.mxu0 0.0
  %v2691 = vand.u32 %v2032, 4294901760
  %v2692 = vsub.f32 %v2032, %v2691
  %v2693 = vand.u32 %v2692, 4294901760
  %2694 = vmatpush1.msra.mxu0 %v2693
  %2695 = vmatprep.subr.mxu0 0.0
  %v2696 = vand.u32 %v2033, 4294901760
  %v2697 = vsub.f32 %v2033, %v2696
  %v2698 = vand.u32 %v2697, 4294901760
  %2699 = vmatpush1.msra.mxu0 %v2698
  %2700 = vmatprep.subr.mxu0 0.0
  %v2701 = vand.u32 %v2034, 4294901760
  %v2702 = vsub.f32 %v2034, %v2701
  %v2703 = vand.u32 %v2702, 4294901760
  %2704 = vmatpush1.msra.mxu0 %v2703
  %2705 = vmatprep.subr.mxu0 0.0
  %v2706 = vand.u32 %v2035, 4294901760
  %v2707 = vsub.f32 %v2035, %v2706
  %v2708 = vand.u32 %v2707, 4294901760
  %2709 = vmatpush1.msra.mxu0 %v2708
  %2710 = vmatprep.subr.mxu0 0.0
  %v2711 = vand.u32 %v2036, 4294901760
  %v2712 = vsub.f32 %v2036, %v2711
  %v2713 = vand.u32 %v2712, 4294901760
  %2714 = vmatpush1.msra.mxu0 %v2713
  %2715 = vmatprep.subr.mxu0 0.0
  %v2716 = vand.u32 %v2037, 4294901760
  %v2717 = vsub.f32 %v2037, %v2716
  %v2718 = vand.u32 %v2717, 4294901760
  %2719 = vmatpush1.msra.mxu0 %v2718
  %2720 = vmatprep.subr.mxu0 0.0
  %v2721 = vand.u32 %v2038, 4294901760
  %v2722 = vsub.f32 %v2038, %v2721
  %v2723 = vand.u32 %v2722, 4294901760
  %2724 = vmatpush1.msra.mxu0 %v2723
  %2725 = vmatprep.subr.mxu0 0.0
  %v2726 = vand.u32 %v2039, 4294901760
  %v2727 = vsub.f32 %v2039, %v2726
  %v2728 = vand.u32 %v2727, 4294901760
  %2729 = vmatpush1.msra.mxu0 %v2728
  %2730 = vmatprep.subr.mxu0 0.0
  %v2731 = vand.u32 %v2040, 4294901760
  %v2732 = vsub.f32 %v2040, %v2731
  %v2733 = vand.u32 %v2732, 4294901760
  %2734 = vmatpush1.msra.mxu0 %v2733
  %2735 = vmatprep.subr.mxu0 0.0
  %v2736 = vand.u32 %v2041, 4294901760
  %v2737 = vsub.f32 %v2041, %v2736
  %v2738 = vand.u32 %v2737, 4294901760
  %2739 = vmatpush1.msra.mxu0 %v2738
  %2740 = vmatprep.subr.mxu0 0.0
  %v2741 = vand.u32 %v2042, 4294901760
  %v2742 = vsub.f32 %v2042, %v2741
  %v2743 = vand.u32 %v2742, 4294901760
  %2744 = vmatpush1.msra.mxu0 %v2743
  %2745 = vmatprep.subr.mxu0 0.0
  %v2746 = vand.u32 %v2043, 4294901760
  %v2747 = vsub.f32 %v2043, %v2746
  %v2748 = vand.u32 %v2747, 4294901760
  %2749 = vmatpush1.msra.mxu0 %v2748
  %2750 = vmatprep.subr.mxu0 0.0
  %v2751 = vand.u32 %v2044, 4294901760
  %v2752 = vsub.f32 %v2044, %v2751
  %v2753 = vand.u32 %v2752, 4294901760
  %2754 = vmatpush1.msra.mxu0 %v2753
  %2755 = vmatprep.subr.mxu0 0.0
  %v2756 = vand.u32 %v2045, 4294901760
  %v2757 = vsub.f32 %v2045, %v2756
  %v2758 = vand.u32 %v2757, 4294901760
  %2759 = vmatpush1.msra.mxu0 %v2758
  %2760 = vmatprep.subr.mxu0 0.0
  %v2761 = vand.u32 %v2046, 4294901760
  %v2762 = vsub.f32 %v2046, %v2761
  %v2763 = vand.u32 %v2762, 4294901760
  %2764 = vmatpush1.msra.mxu0 %v2763
  %2765 = vmatprep.subr.mxu0 0.0
  %v2766 = vand.u32 %v2047, 4294901760
  %v2767 = vsub.f32 %v2047, %v2766
  %v2768 = vand.u32 %v2767, 4294901760
  %2769 = vmatpush1.msra.mxu0 %v2768
  %2770 = vmatprep.subr.mxu0 0.0
  %v2771 = vand.u32 %v2048, 4294901760
  %v2772 = vsub.f32 %v2048, %v2771
  %v2773 = vand.u32 %v2772, 4294901760
  %2774 = vmatpush1.msra.mxu0 %v2773
  %2775 = vmatprep.subr.mxu0 0.0
  %v2776 = vand.u32 %v2049, 4294901760
  %v2777 = vsub.f32 %v2049, %v2776
  %v2778 = vand.u32 %v2777, 4294901760
  %2779 = vmatpush1.msra.mxu0 %v2778
  %2780 = vmatprep.subr.mxu0 0.0
  %v2781 = vand.u32 %v2050, 4294901760
  %v2782 = vsub.f32 %v2050, %v2781
  %v2783 = vand.u32 %v2782, 4294901760
  %2784 = vmatpush1.msra.mxu0 %v2783
  %2785 = vmatprep.subr.mxu0 0.0
  %v2786 = vand.u32 %v2051, 4294901760
  %v2787 = vsub.f32 %v2051, %v2786
  %v2788 = vand.u32 %v2787, 4294901760
  %2789 = vmatpush1.msra.mxu0 %v2788
  %2790 = vmatprep.subr.mxu0 0.0
  %v2791 = vand.u32 %v2052, 4294901760
  %v2792 = vsub.f32 %v2052, %v2791
  %v2793 = vand.u32 %v2792, 4294901760
  %2794 = vmatpush1.msra.mxu0 %v2793
  %2795 = vmatprep.subr.mxu0 0.0
  %v2796 = vand.u32 %v2053, 4294901760
  %v2797 = vsub.f32 %v2053, %v2796
  %v2798 = vand.u32 %v2797, 4294901760
  %2799 = vmatpush1.msra.mxu0 %v2798
  %2800 = vmatprep.subr.mxu0 0.0
  %v2801 = vand.u32 %v2054, 4294901760
  %v2802 = vsub.f32 %v2054, %v2801
  %v2803 = vand.u32 %v2802, 4294901760
  %2804 = vmatpush1.msra.mxu0 %v2803
  %2805 = vmatprep.subr.mxu0 0.0
  %v2806 = vand.u32 %v2055, 4294901760
  %v2807 = vsub.f32 %v2055, %v2806
  %v2808 = vand.u32 %v2807, 4294901760
  %2809 = vmatpush1.msra.mxu0 %v2808
  %2810 = vmatprep.subr.mxu0 0.0
  %v2811 = vand.u32 %v2056, 4294901760
  %v2812 = vsub.f32 %v2056, %v2811
  %v2813 = vand.u32 %v2812, 4294901760
  %2814 = vmatpush1.msra.mxu0 %v2813
  %2815 = vmatprep.subr.mxu0 0.0
  %v2816 = vand.u32 %v2057, 4294901760
  %v2817 = vsub.f32 %v2057, %v2816
  %v2818 = vand.u32 %v2817, 4294901760
  %2819 = vmatpush1.msra.mxu0 %v2818
  %2820 = vmatprep.subr.mxu0 0.0
  %v2821 = vand.u32 %v2058, 4294901760
  %v2822 = vsub.f32 %v2058, %v2821
  %v2823 = vand.u32 %v2822, 4294901760
  %2824 = vmatpush1.msra.mxu0 %v2823
  %2825 = vmatprep.subr.mxu0 0.0
  %v2826 = vand.u32 %v2059, 4294901760
  %v2827 = vsub.f32 %v2059, %v2826
  %v2828 = vand.u32 %v2827, 4294901760
  %2829 = vmatpush1.msra.mxu0 %v2828
  %2830 = vmatprep.subr.mxu0 0.0
  %v2831 = vand.u32 %v2060, 4294901760
  %v2832 = vsub.f32 %v2060, %v2831
  %v2833 = vand.u32 %v2832, 4294901760
  %2834 = vmatpush1.msra.mxu0 %v2833
  %2835 = vmatprep.subr.mxu0 0.0
  %v2836 = vand.u32 %v2061, 4294901760
  %v2837 = vsub.f32 %v2061, %v2836
  %v2838 = vand.u32 %v2837, 4294901760
  %2839 = vmatpush1.msra.mxu0 %v2838
  %2840 = vmatprep.subr.mxu0 0.0
  %v2841 = vand.u32 %v2062, 4294901760
  %v2842 = vsub.f32 %v2062, %v2841
  %v2843 = vand.u32 %v2842, 4294901760
  %2844 = vmatpush1.msra.mxu0 %v2843
  %2845 = vmatprep.subr.mxu0 0.0
  %v2846 = vand.u32 %v2063, 4294901760
  %v2847 = vsub.f32 %v2063, %v2846
  %v2848 = vand.u32 %v2847, 4294901760
  %2849 = vmatpush1.msra.mxu0 %v2848
  %v2850 = vand.u32 %v2029, 4294901760
  %2851 = vmatprep.mubr.f32.mxu0 %v2850
  %v2852 = vand.u32 %v2028, 4294901760
  %2853 = vmatmul.mubr.f32.gmra.mrb[0].mxu0 %v2852
  %v2854 = vpop.f32.mrb[0].mxu0
  %v2855 = vadd.f32 %v2687, %v2854
  %v2856 = vpop.f32.mrb[0].mxu0
  %2857 = vdwg.mxu0
  %2858 = vmatprep.subr.mxu0 0.0
  %v2859 = vand.u32 %v2032, 4294901760
  %2860 = vmatpush1.msra.mxu0 %v2859
  %2861 = vmatprep.subr.mxu0 0.0
  %v2862 = vand.u32 %v2033, 4294901760
  %2863 = vmatpush1.msra.mxu0 %v2862
  %2864 = vmatprep.subr.mxu0 0.0
  %v2865 = vand.u32 %v2034, 4294901760
  %2866 = vmatpush1.msra.mxu0 %v2865
  %2867 = vmatprep.subr.mxu0 0.0
  %v2868 = vand.u32 %v2035, 4294901760
  %2869 = vmatpush1.msra.mxu0 %v2868
  %2870 = vmatprep.subr.mxu0 0.0
  %v2871 = vand.u32 %v2036, 4294901760
  %2872 = vmatpush1.msra.mxu0 %v2871
  %2873 = vmatprep.subr.mxu0 0.0
  %v2874 = vand.u32 %v2037, 4294901760
  %2875 = vmatpush1.msra.mxu0 %v2874
  %2876 = vmatprep.subr.mxu0 0.0
  %v2877 = vand.u32 %v2038, 4294901760
  %2878 = vmatpush1.msra.mxu0 %v2877
  %2879 = vmatprep.subr.mxu0 0.0
  %v2880 = vand.u32 %v2039, 4294901760
  %2881 = vmatpush1.msra.mxu0 %v2880
  %2882 = vmatprep.subr.mxu0 0.0
  %v2883 = vand.u32 %v2040, 4294901760
  %2884 = vmatpush1.msra.mxu0 %v2883
  %2885 = vmatprep.subr.mxu0 0.0
  %v2886 = vand.u32 %v2041, 4294901760
  %2887 = vmatpush1.msra.mxu0 %v2886
  %2888 = vmatprep.subr.mxu0 0.0
  %v2889 = vand.u32 %v2042, 4294901760
  %2890 = vmatpush1.msra.mxu0 %v2889
  %2891 = vmatprep.subr.mxu0 0.0
  %v2892 = vand.u32 %v2043, 4294901760
  %2893 = vmatpush1.msra.mxu0 %v2892
  %2894 = vmatprep.subr.mxu0 0.0
  %v2895 = vand.u32 %v2044, 4294901760
  %2896 = vmatpush1.msra.mxu0 %v2895
  %2897 = vmatprep.subr.mxu0 0.0
  %v2898 = vand.u32 %v2045, 4294901760
  %2899 = vmatpush1.msra.mxu0 %v2898
  %2900 = vmatprep.subr.mxu0 0.0
  %v2901 = vand.u32 %v2046, 4294901760
  %2902 = vmatpush1.msra.mxu0 %v2901
  %2903 = vmatprep.subr.mxu0 0.0
  %v2904 = vand.u32 %v2047, 4294901760
  %2905 = vmatpush1.msra.mxu0 %v2904
  %2906 = vmatprep.subr.mxu0 0.0
  %v2907 = vand.u32 %v2048, 4294901760
  %2908 = vmatpush1.msra.mxu0 %v2907
  %2909 = vmatprep.subr.mxu0 0.0
  %v2910 = vand.u32 %v2049, 4294901760
  %2911 = vmatpush1.msra.mxu0 %v2910
  %2912 = vmatprep.subr.mxu0 0.0
  %v2913 = vand.u32 %v2050, 4294901760
  %2914 = vmatpush1.msra.mxu0 %v2913
  %2915 = vmatprep.subr.mxu0 0.0
  %v2916 = vand.u32 %v2051, 4294901760
  %2917 = vmatpush1.msra.mxu0 %v2916
  %2918 = vmatprep.subr.mxu0 0.0
  %v2919 = vand.u32 %v2052, 4294901760
  %2920 = vmatpush1.msra.mxu0 %v2919
  %2921 = vmatprep.subr.mxu0 0.0
  %v2922 = vand.u32 %v2053, 4294901760
  %2923 = vmatpush1.msra.mxu0 %v2922
  %2924 = vmatprep.subr.mxu0 0.0
  %v2925 = vand.u32 %v2054, 4294901760
  %2926 = vmatpush1.msra.mxu0 %v2925
  %2927 = vmatprep.subr.mxu0 0.0
  %v2928 = vand.u32 %v2055, 4294901760
  %2929 = vmatpush1.msra.mxu0 %v2928
  %2930 = vmatprep.subr.mxu0 0.0
  %v2931 = vand.u32 %v2056, 4294901760
  %2932 = vmatpush1.msra.mxu0 %v2931
  %2933 = vmatprep.subr.mxu0 0.0
  %v2934 = vand.u32 %v2057, 4294901760
  %2935 = vmatpush1.msra.mxu0 %v2934
  %2936 = vmatprep.subr.mxu0 0.0
  %v2937 = vand.u32 %v2058, 4294901760
  %2938 = vmatpush1.msra.mxu0 %v2937
  %2939 = vmatprep.subr.mxu0 0.0
  %v2940 = vand.u32 %v2059, 4294901760
  %2941 = vmatpush1.msra.mxu0 %v2940
  %2942 = vmatprep.subr.mxu0 0.0
  %v2943 = vand.u32 %v2060, 4294901760
  %2944 = vmatpush1.msra.mxu0 %v2943
  %2945 = vmatprep.subr.mxu0 0.0
  %v2946 = vand.u32 %v2061, 4294901760
  %2947 = vmatpush1.msra.mxu0 %v2946
  %2948 = vmatprep.subr.mxu0 0.0
  %v2949 = vand.u32 %v2062, 4294901760
  %2950 = vmatpush1.msra.mxu0 %v2949
  %2951 = vmatprep.subr.mxu0 0.0
  %v2952 = vand.u32 %v2063, 4294901760
  %2953 = vmatpush1.msra.mxu0 %v2952
  %v2954 = vand.u32 %v2029, 4294901760
  %2955 = vmatprep.mubr.f32.mxu0 %v2954
  %v2956 = vand.u32 %v2028, 4294901760
  %2957 = vmatmul.mubr.f32.gmra.mrb[0].mxu0 %v2956
  %v2958 = vpop.f32.mrb[0].mxu0
  %v2959 = vadd.f32 %v2855, %v2958
  %v2960 = vpop.f32.mrb[0].mxu0
  %2961 = vdwg.mxu0
  %2962 = vmatprep.subr.mxu0 0.0
  %v2963 = vand.u32 %v2064, 4294901760
  %2964 = vmatpush1.msra.mxu0 %v2963
  %2965 = vmatprep.subr.mxu0 0.0
  %v2966 = vand.u32 %v2065, 4294901760
  %2967 = vmatpush1.msra.mxu0 %v2966
  %2968 = vmatprep.subr.mxu0 0.0
  %v2969 = vand.u32 %v2066, 4294901760
  %2970 = vmatpush1.msra.mxu0 %v2969
  %2971 = vmatprep.subr.mxu0 0.0
  %v2972 = vand.u32 %v2067, 4294901760
  %2973 = vmatpush1.msra.mxu0 %v2972
  %2974 = vmatprep.subr.mxu0 0.0
  %v2975 = vand.u32 %v2068, 4294901760
  %2976 = vmatpush1.msra.mxu0 %v2975
  %2977 = vmatprep.subr.mxu0 0.0
  %v2978 = vand.u32 %v2069, 4294901760
  %2979 = vmatpush1.msra.mxu0 %v2978
  %2980 = vmatprep.subr.mxu0 0.0
  %v2981 = vand.u32 %v2070, 4294901760
  %2982 = vmatpush1.msra.mxu0 %v2981
  %2983 = vmatprep.subr.mxu0 0.0
  %v2984 = vand.u32 %v2071, 4294901760
  %2985 = vmatpush1.msra.mxu0 %v2984
  %2986 = vmatprep.subr.mxu0 0.0
  %v2987 = vand.u32 %v2072, 4294901760
  %2988 = vmatpush1.msra.mxu0 %v2987
  %2989 = vmatprep.subr.mxu0 0.0
  %v2990 = vand.u32 %v2073, 4294901760
  %2991 = vmatpush1.msra.mxu0 %v2990
  %2992 = vmatprep.subr.mxu0 0.0
  %v2993 = vand.u32 %v2074, 4294901760
  %2994 = vmatpush1.msra.mxu0 %v2993
  %2995 = vmatprep.subr.mxu0 0.0
  %v2996 = vand.u32 %v2075, 4294901760
  %2997 = vmatpush1.msra.mxu0 %v2996
  %2998 = vmatprep.subr.mxu0 0.0
  %v2999 = vand.u32 %v2076, 4294901760
  %3000 = vmatpush1.msra.mxu0 %v2999
  %3001 = vmatprep.subr.mxu0 0.0
  %v3002 = vand.u32 %v2077, 4294901760
  %3003 = vmatpush1.msra.mxu0 %v3002
  %3004 = vmatprep.subr.mxu0 0.0
  %v3005 = vand.u32 %v2078, 4294901760
  %3006 = vmatpush1.msra.mxu0 %v3005
  %3007 = vmatprep.subr.mxu0 0.0
  %v3008 = vand.u32 %v2079, 4294901760
  %3009 = vmatpush1.msra.mxu0 %v3008
  %3010 = vmatprep.subr.mxu0 0.0
  %v3011 = vand.u32 %v2080, 4294901760
  %3012 = vmatpush1.msra.mxu0 %v3011
  %3013 = vmatprep.subr.mxu0 0.0
  %v3014 = vand.u32 %v2081, 4294901760
  %3015 = vmatpush1.msra.mxu0 %v3014
  %3016 = vmatprep.subr.mxu0 0.0
  %v3017 = vand.u32 %v2082, 4294901760
  %3018 = vmatpush1.msra.mxu0 %v3017
  %3019 = vmatprep.subr.mxu0 0.0
  %v3020 = vand.u32 %v2083, 4294901760
  %3021 = vmatpush1.msra.mxu0 %v3020
  %3022 = vmatprep.subr.mxu0 0.0
  %v3023 = vand.u32 %v2084, 4294901760
  %3024 = vmatpush1.msra.mxu0 %v3023
  %3025 = vmatprep.subr.mxu0 0.0
  %v3026 = vand.u32 %v2085, 4294901760
  %3027 = vmatpush1.msra.mxu0 %v3026
  %3028 = vmatprep.subr.mxu0 0.0
  %v3029 = vand.u32 %v2086, 4294901760
  %3030 = vmatpush1.msra.mxu0 %v3029
  %3031 = vmatprep.subr.mxu0 0.0
  %v3032 = vand.u32 %v2087, 4294901760
  %3033 = vmatpush1.msra.mxu0 %v3032
  %3034 = vmatprep.subr.mxu0 0.0
  %v3035 = vand.u32 %v2088, 4294901760
  %3036 = vmatpush1.msra.mxu0 %v3035
  %3037 = vmatprep.subr.mxu0 0.0
  %v3038 = vand.u32 %v2089, 4294901760
  %3039 = vmatpush1.msra.mxu0 %v3038
  %3040 = vmatprep.subr.mxu0 0.0
  %v3041 = vand.u32 %v2090, 4294901760
  %3042 = vmatpush1.msra.mxu0 %v3041
  %3043 = vmatprep.subr.mxu0 0.0
  %v3044 = vand.u32 %v2091, 4294901760
  %3045 = vmatpush1.msra.mxu0 %v3044
  %3046 = vmatprep.subr.mxu0 0.0
  %v3047 = vand.u32 %v2092, 4294901760
  %3048 = vmatpush1.msra.mxu0 %v3047
  %3049 = vmatprep.subr.mxu0 0.0
  %v3050 = vand.u32 %v2093, 4294901760
  %3051 = vmatpush1.msra.mxu0 %v3050
  %3052 = vmatprep.subr.mxu0 0.0
  %v3053 = vand.u32 %v2094, 4294901760
  %3054 = vmatpush1.msra.mxu0 %v3053
  %3055 = vmatprep.subr.mxu0 0.0
  %v3056 = vand.u32 %v2095, 4294901760
  %3057 = vmatpush1.msra.mxu0 %v3056
  %v3058 = vand.u32 %v2031, 4294901760
  %v3059 = vsub.f32 %v2031, %v3058
  %v3060 = vand.u32 %v3059, 4294901760
  %v3061 = vsub.f32 %v3059, %v3060
  %v3062 = vand.u32 %v3061, 4294901760
  %3063 = vmatprep.mubr.f32.mxu0 %v3062
  %v3064 = vand.u32 %v2030, 4294901760
  %v3065 = vsub.f32 %v2030, %v3064
  %v3066 = vand.u32 %v3065, 4294901760
  %v3067 = vsub.f32 %v3065, %v3066
  %v3068 = vand.u32 %v3067, 4294901760
  %3069 = vmatmul.mubr.f32.gmra.mrb[0].mxu0 %v3068
  %v3070 = vpop.f32.mrb[0].mxu0
  %v3071 = vadd.f32 %v2959, %v3070
  %v3072 = vpop.f32.mrb[0].mxu0
  %3073 = vdwg.mxu0
  %3074 = vmatprep.subr.mxu0 0.0
  %v3075 = vand.u32 %v2064, 4294901760
  %v3076 = vsub.f32 %v2064, %v3075
  %v3077 = vand.u32 %v3076, 4294901760
  %v3078 = vsub.f32 %v3076, %v3077
  %v3079 = vand.u32 %v3078, 4294901760
  %3080 = vmatpush1.msra.mxu0 %v3079
  %3081 = vmatprep.subr.mxu0 0.0
  %v3082 = vand.u32 %v2065, 4294901760
  %v3083 = vsub.f32 %v2065, %v3082
  %v3084 = vand.u32 %v3083, 4294901760
  %v3085 = vsub.f32 %v3083, %v3084
  %v3086 = vand.u32 %v3085, 4294901760
  %3087 = vmatpush1.msra.mxu0 %v3086
  %3088 = vmatprep.subr.mxu0 0.0
  %v3089 = vand.u32 %v2066, 4294901760
  %v3090 = vsub.f32 %v2066, %v3089
  %v3091 = vand.u32 %v3090, 4294901760
  %v3092 = vsub.f32 %v3090, %v3091
  %v3093 = vand.u32 %v3092, 4294901760
  %3094 = vmatpush1.msra.mxu0 %v3093
  %3095 = vmatprep.subr.mxu0 0.0
  %v3096 = vand.u32 %v2067, 4294901760
  %v3097 = vsub.f32 %v2067, %v3096
  %v3098 = vand.u32 %v3097, 4294901760
  %v3099 = vsub.f32 %v3097, %v3098
  %v3100 = vand.u32 %v3099, 4294901760
  %3101 = vmatpush1.msra.mxu0 %v3100
  %3102 = vmatprep.subr.mxu0 0.0
  %v3103 = vand.u32 %v2068, 4294901760
  %v3104 = vsub.f32 %v2068, %v3103
  %v3105 = vand.u32 %v3104, 4294901760
  %v3106 = vsub.f32 %v3104, %v3105
  %v3107 = vand.u32 %v3106, 4294901760
  %3108 = vmatpush1.msra.mxu0 %v3107
  %3109 = vmatprep.subr.mxu0 0.0
  %v3110 = vand.u32 %v2069, 4294901760
  %v3111 = vsub.f32 %v2069, %v3110
  %v3112 = vand.u32 %v3111, 4294901760
  %v3113 = vsub.f32 %v3111, %v3112
  %v3114 = vand.u32 %v3113, 4294901760
  %3115 = vmatpush1.msra.mxu0 %v3114
  %3116 = vmatprep.subr.mxu0 0.0
  %v3117 = vand.u32 %v2070, 4294901760
  %v3118 = vsub.f32 %v2070, %v3117
  %v3119 = vand.u32 %v3118, 4294901760
  %v3120 = vsub.f32 %v3118, %v3119
  %v3121 = vand.u32 %v3120, 4294901760
  %3122 = vmatpush1.msra.mxu0 %v3121
  %3123 = vmatprep.subr.mxu0 0.0
  %v3124 = vand.u32 %v2071, 4294901760
  %v3125 = vsub.f32 %v2071, %v3124
  %v3126 = vand.u32 %v3125, 4294901760
  %v3127 = vsub.f32 %v3125, %v3126
  %v3128 = vand.u32 %v3127, 4294901760
  %3129 = vmatpush1.msra.mxu0 %v3128
  %3130 = vmatprep.subr.mxu0 0.0
  %v3131 = vand.u32 %v2072, 4294901760
  %v3132 = vsub.f32 %v2072, %v3131
  %v3133 = vand.u32 %v3132, 4294901760
  %v3134 = vsub.f32 %v3132, %v3133
  %v3135 = vand.u32 %v3134, 4294901760
  %3136 = vmatpush1.msra.mxu0 %v3135
  %3137 = vmatprep.subr.mxu0 0.0
  %v3138 = vand.u32 %v2073, 4294901760
  %v3139 = vsub.f32 %v2073, %v3138
  %v3140 = vand.u32 %v3139, 4294901760
  %v3141 = vsub.f32 %v3139, %v3140
  %v3142 = vand.u32 %v3141, 4294901760
  %3143 = vmatpush1.msra.mxu0 %v3142
  %3144 = vmatprep.subr.mxu0 0.0
  %v3145 = vand.u32 %v2074, 4294901760
  %v3146 = vsub.f32 %v2074, %v3145
  %v3147 = vand.u32 %v3146, 4294901760
  %v3148 = vsub.f32 %v3146, %v3147
  %v3149 = vand.u32 %v3148, 4294901760
  %3150 = vmatpush1.msra.mxu0 %v3149
  %3151 = vmatprep.subr.mxu0 0.0
  %v3152 = vand.u32 %v2075, 4294901760
  %v3153 = vsub.f32 %v2075, %v3152
  %v3154 = vand.u32 %v3153, 4294901760
  %v3155 = vsub.f32 %v3153, %v3154
  %v3156 = vand.u32 %v3155, 4294901760
  %3157 = vmatpush1.msra.mxu0 %v3156
  %3158 = vmatprep.subr.mxu0 0.0
  %v3159 = vand.u32 %v2076, 4294901760
  %v3160 = vsub.f32 %v2076, %v3159
  %v3161 = vand.u32 %v3160, 4294901760
  %v3162 = vsub.f32 %v3160, %v3161
  %v3163 = vand.u32 %v3162, 4294901760
  %3164 = vmatpush1.msra.mxu0 %v3163
  %3165 = vmatprep.subr.mxu0 0.0
  %v3166 = vand.u32 %v2077, 4294901760
  %v3167 = vsub.f32 %v2077, %v3166
  %v3168 = vand.u32 %v3167, 4294901760
  %v3169 = vsub.f32 %v3167, %v3168
  %v3170 = vand.u32 %v3169, 4294901760
  %3171 = vmatpush1.msra.mxu0 %v3170
  %3172 = vmatprep.subr.mxu0 0.0
  %v3173 = vand.u32 %v2078, 4294901760
  %v3174 = vsub.f32 %v2078, %v3173
  %v3175 = vand.u32 %v3174, 4294901760
  %v3176 = vsub.f32 %v3174, %v3175
  %v3177 = vand.u32 %v3176, 4294901760
  %3178 = vmatpush1.msra.mxu0 %v3177
  %3179 = vmatprep.subr.mxu0 0.0
  %v3180 = vand.u32 %v2079, 4294901760
  %v3181 = vsub.f32 %v2079, %v3180
  %v3182 = vand.u32 %v3181, 4294901760
  %v3183 = vsub.f32 %v3181, %v3182
  %v3184 = vand.u32 %v3183, 4294901760
  %3185 = vmatpush1.msra.mxu0 %v3184
  %3186 = vmatprep.subr.mxu0 0.0
  %v3187 = vand.u32 %v2080, 4294901760
  %v3188 = vsub.f32 %v2080, %v3187
  %v3189 = vand.u32 %v3188, 4294901760
  %v3190 = vsub.f32 %v3188, %v3189
  %v3191 = vand.u32 %v3190, 4294901760
  %3192 = vmatpush1.msra.mxu0 %v3191
  %3193 = vmatprep.subr.mxu0 0.0
  %v3194 = vand.u32 %v2081, 4294901760
  %v3195 = vsub.f32 %v2081, %v3194
  %v3196 = vand.u32 %v3195, 4294901760
  %v3197 = vsub.f32 %v3195, %v3196
  %v3198 = vand.u32 %v3197, 4294901760
  %3199 = vmatpush1.msra.mxu0 %v3198
  %3200 = vmatprep.subr.mxu0 0.0
  %v3201 = vand.u32 %v2082, 4294901760
  %v3202 = vsub.f32 %v2082, %v3201
  %v3203 = vand.u32 %v3202, 4294901760
  %v3204 = vsub.f32 %v3202, %v3203
  %v3205 = vand.u32 %v3204, 4294901760
  %3206 = vmatpush1.msra.mxu0 %v3205
  %3207 = vmatprep.subr.mxu0 0.0
  %v3208 = vand.u32 %v2083, 4294901760
  %v3209 = vsub.f32 %v2083, %v3208
  %v3210 = vand.u32 %v3209, 4294901760
  %v3211 = vsub.f32 %v3209, %v3210
  %v3212 = vand.u32 %v3211, 4294901760
  %3213 = vmatpush1.msra.mxu0 %v3212
  %3214 = vmatprep.subr.mxu0 0.0
  %v3215 = vand.u32 %v2084, 4294901760
  %v3216 = vsub.f32 %v2084, %v3215
  %v3217 = vand.u32 %v3216, 4294901760
  %v3218 = vsub.f32 %v3216, %v3217
  %v3219 = vand.u32 %v3218, 4294901760
  %3220 = vmatpush1.msra.mxu0 %v3219
  %3221 = vmatprep.subr.mxu0 0.0
  %v3222 = vand.u32 %v2085, 4294901760
  %v3223 = vsub.f32 %v2085, %v3222
  %v3224 = vand.u32 %v3223, 4294901760
  %v3225 = vsub.f32 %v3223, %v3224
  %v3226 = vand.u32 %v3225, 4294901760
  %3227 = vmatpush1.msra.mxu0 %v3226
  %3228 = vmatprep.subr.mxu0 0.0
  %v3229 = vand.u32 %v2086, 4294901760
  %v3230 = vsub.f32 %v2086, %v3229
  %v3231 = vand.u32 %v3230, 4294901760
  %v3232 = vsub.f32 %v3230, %v3231
  %v3233 = vand.u32 %v3232, 4294901760
  %3234 = vmatpush1.msra.mxu0 %v3233
  %3235 = vmatprep.subr.mxu0 0.0
  %v3236 = vand.u32 %v2087, 4294901760
  %v3237 = vsub.f32 %v2087, %v3236
  %v3238 = vand.u32 %v3237, 4294901760
  %v3239 = vsub.f32 %v3237, %v3238
  %v3240 = vand.u32 %v3239, 4294901760
  %3241 = vmatpush1.msra.mxu0 %v3240
  %3242 = vmatprep.subr.mxu0 0.0
  %v3243 = vand.u32 %v2088, 4294901760
  %v3244 = vsub.f32 %v2088, %v3243
  %v3245 = vand.u32 %v3244, 4294901760
  %v3246 = vsub.f32 %v3244, %v3245
  %v3247 = vand.u32 %v3246, 4294901760
  %3248 = vmatpush1.msra.mxu0 %v3247
  %3249 = vmatprep.subr.mxu0 0.0
  %v3250 = vand.u32 %v2089, 4294901760
  %v3251 = vsub.f32 %v2089, %v3250
  %v3252 = vand.u32 %v3251, 4294901760
  %v3253 = vsub.f32 %v3251, %v3252
  %v3254 = vand.u32 %v3253, 4294901760
  %3255 = vmatpush1.msra.mxu0 %v3254
  %3256 = vmatprep.subr.mxu0 0.0
  %v3257 = vand.u32 %v2090, 4294901760
  %v3258 = vsub.f32 %v2090, %v3257
  %v3259 = vand.u32 %v3258, 4294901760
  %v3260 = vsub.f32 %v3258, %v3259
  %v3261 = vand.u32 %v3260, 4294901760
  %3262 = vmatpush1.msra.mxu0 %v3261
  %3263 = vmatprep.subr.mxu0 0.0
  %v3264 = vand.u32 %v2091, 4294901760
  %v3265 = vsub.f32 %v2091, %v3264
  %v3266 = vand.u32 %v3265, 4294901760
  %v3267 = vsub.f32 %v3265, %v3266
  %v3268 = vand.u32 %v3267, 4294901760
  %3269 = vmatpush1.msra.mxu0 %v3268
  %3270 = vmatprep.subr.mxu0 0.0
  %v3271 = vand.u32 %v2092, 4294901760
  %v3272 = vsub.f32 %v2092, %v3271
  %v3273 = vand.u32 %v3272, 4294901760
  %v3274 = vsub.f32 %v3272, %v3273
  %v3275 = vand.u32 %v3274, 4294901760
  %3276 = vmatpush1.msra.mxu0 %v3275
  %3277 = vmatprep.subr.mxu0 0.0
  %v3278 = vand.u32 %v2093, 4294901760
  %v3279 = vsub.f32 %v2093, %v3278
  %v3280 = vand.u32 %v3279, 4294901760
  %v3281 = vsub.f32 %v3279, %v3280
  %v3282 = vand.u32 %v3281, 4294901760
  %3283 = vmatpush1.msra.mxu0 %v3282
  %3284 = vmatprep.subr.mxu0 0.0
  %v3285 = vand.u32 %v2094, 4294901760
  %v3286 = vsub.f32 %v2094, %v3285
  %v3287 = vand.u32 %v3286, 4294901760
  %v3288 = vsub.f32 %v3286, %v3287
  %v3289 = vand.u32 %v3288, 4294901760
  %3290 = vmatpush1.msra.mxu0 %v3289
  %3291 = vmatprep.subr.mxu0 0.0
  %v3292 = vand.u32 %v2095, 4294901760
  %v3293 = vsub.f32 %v2095, %v3292
  %v3294 = vand.u32 %v3293, 4294901760
  %v3295 = vsub.f32 %v3293, %v3294
  %v3296 = vand.u32 %v3295, 4294901760
  %3297 = vmatpush1.msra.mxu0 %v3296
  %v3298 = vand.u32 %v2031, 4294901760
  %3299 = vmatprep.mubr.f32.mxu0 %v3298
  %v3300 = vand.u32 %v2030, 4294901760
  %3301 = vmatmul.mubr.f32.gmra.mrb[0].mxu0 %v3300
  %v3302 = vpop.f32.mrb[0].mxu0
  %v3303 = vadd.f32 %v3071, %v3302
  %v3304 = vpop.f32.mrb[0].mxu0
  %3305 = vdwg.mxu0
  %3306 = vmatprep.subr.mxu0 0.0
  %v3307 = vand.u32 %v2064, 4294901760
  %v3308 = vsub.f32 %v2064, %v3307
  %3309 = vmatpush1.msra.mxu0 %v3308
  %3310 = vmatprep.subr.mxu0 0.0
  %v3311 = vand.u32 %v2065, 4294901760
  %v3312 = vsub.f32 %v2065, %v3311
  %3313 = vmatpush1.msra.mxu0 %v3312
  %3314 = vmatprep.subr.mxu0 0.0
  %v3315 = vand.u32 %v2066, 4294901760
  %v3316 = vsub.f32 %v2066, %v3315
  %3317 = vmatpush1.msra.mxu0 %v3316
  %3318 = vmatprep.subr.mxu0 0.0
  %v3319 = vand.u32 %v2067, 4294901760
  %v3320 = vsub.f32 %v2067, %v3319
  %3321 = vmatpush1.msra.mxu0 %v3320
  %3322 = vmatprep.subr.mxu0 0.0
  %v3323 = vand.u32 %v2068, 4294901760
  %v3324 = vsub.f32 %v2068, %v3323
  %3325 = vmatpush1.msra.mxu0 %v3324
  %3326 = vmatprep.subr.mxu0 0.0
  %v3327 = vand.u32 %v2069, 4294901760
  %v3328 = vsub.f32 %v2069, %v3327
  %3329 = vmatpush1.msra.mxu0 %v3328
  %3330 = vmatprep.subr.mxu0 0.0
  %v3331 = vand.u32 %v2070, 4294901760
  %v3332 = vsub.f32 %v2070, %v3331
  %3333 = vmatpush1.msra.mxu0 %v3332
  %3334 = vmatprep.subr.mxu0 0.0
  %v3335 = vand.u32 %v2071, 4294901760
  %v3336 = vsub.f32 %v2071, %v3335
  %3337 = vmatpush1.msra.mxu0 %v3336
  %3338 = vmatprep.subr.mxu0 0.0
  %v3339 = vand.u32 %v2072, 4294901760
  %v3340 = vsub.f32 %v2072, %v3339
  %3341 = vmatpush1.msra.mxu0 %v3340
  %3342 = vmatprep.subr.mxu0 0.0
  %v3343 = vand.u32 %v2073, 4294901760
  %v3344 = vsub.f32 %v2073, %v3343
  %3345 = vmatpush1.msra.mxu0 %v3344
  %3346 = vmatprep.subr.mxu0 0.0
  %v3347 = vand.u32 %v2074, 4294901760
  %v3348 = vsub.f32 %v2074, %v3347
  %3349 = vmatpush1.msra.mxu0 %v3348
  %3350 = vmatprep.subr.mxu0 0.0
  %v3351 = vand.u32 %v2075, 4294901760
  %v3352 = vsub.f32 %v2075, %v3351
  %3353 = vmatpush1.msra.mxu0 %v3352
  %3354 = vmatprep.subr.mxu0 0.0
  %v3355 = vand.u32 %v2076, 4294901760
  %v3356 = vsub.f32 %v2076, %v3355
  %3357 = vmatpush1.msra.mxu0 %v3356
  %3358 = vmatprep.subr.mxu0 0.0
  %v3359 = vand.u32 %v2077, 4294901760
  %v3360 = vsub.f32 %v2077, %v3359
  %3361 = vmatpush1.msra.mxu0 %v3360
  %3362 = vmatprep.subr.mxu0 0.0
  %v3363 = vand.u32 %v2078, 4294901760
  %v3364 = vsub.f32 %v2078, %v3363
  %3365 = vmatpush1.msra.mxu0 %v3364
  %3366 = vmatprep.subr.mxu0 0.0
  %v3367 = vand.u32 %v2079, 4294901760
  %v3368 = vsub.f32 %v2079, %v3367
  %3369 = vmatpush1.msra.mxu0 %v3368
  %3370 = vmatprep.subr.mxu0 0.0
  %v3371 = vand.u32 %v2080, 4294901760
  %v3372 = vsub.f32 %v2080, %v3371
  %3373 = vmatpush1.msra.mxu0 %v3372
  %3374 = vmatprep.subr.mxu0 0.0
  %v3375 = vand.u32 %v2081, 4294901760
  %v3376 = vsub.f32 %v2081, %v3375
  %3377 = vmatpush1.msra.mxu0 %v3376
  %3378 = vmatprep.subr.mxu0 0.0
  %v3379 = vand.u32 %v2082, 4294901760
  %v3380 = vsub.f32 %v2082, %v3379
  %3381 = vmatpush1.msra.mxu0 %v3380
  %3382 = vmatprep.subr.mxu0 0.0
  %v3383 = vand.u32 %v2083, 4294901760
  %v3384 = vsub.f32 %v2083, %v3383
  %3385 = vmatpush1.msra.mxu0 %v3384
  %3386 = vmatprep.subr.mxu0 0.0
  %v3387 = vand.u32 %v2084, 4294901760
  %v3388 = vsub.f32 %v2084, %v3387
  %3389 = vmatpush1.msra.mxu0 %v3388
  %3390 = vmatprep.subr.mxu0 0.0
  %v3391 = vand.u32 %v2085, 4294901760
  %v3392 = vsub.f32 %v2085, %v3391
  %3393 = vmatpush1.msra.mxu0 %v3392
  %3394 = vmatprep.subr.mxu0 0.0
  %v3395 = vand.u32 %v2086, 4294901760
  %v3396 = vsub.f32 %v2086, %v3395
  %3397 = vmatpush1.msra.mxu0 %v3396
  %3398 = vmatprep.subr.mxu0 0.0
  %v3399 = vand.u32 %v2087, 4294901760
  %v3400 = vsub.f32 %v2087, %v3399
  %3401 = vmatpush1.msra.mxu0 %v3400
  %3402 = vmatprep.subr.mxu0 0.0
  %v3403 = vand.u32 %v2088, 4294901760
  %v3404 = vsub.f32 %v2088, %v3403
  %3405 = vmatpush1.msra.mxu0 %v3404
  %3406 = vmatprep.subr.mxu0 0.0
  %v3407 = vand.u32 %v2089, 4294901760
  %v3408 = vsub.f32 %v2089, %v3407
  %3409 = vmatpush1.msra.mxu0 %v3408
  %3410 = vmatprep.subr.mxu0 0.0
  %v3411 = vand.u32 %v2090, 4294901760
  %v3412 = vsub.f32 %v2090, %v3411
  %3413 = vmatpush1.msra.mxu0 %v3412
  %3414 = vmatprep.subr.mxu0 0.0
  %v3415 = vand.u32 %v2091, 4294901760
  %v3416 = vsub.f32 %v2091, %v3415
  %3417 = vmatpush1.msra.mxu0 %v3416
  %3418 = vmatprep.subr.mxu0 0.0
  %v3419 = vand.u32 %v2092, 4294901760
  %v3420 = vsub.f32 %v2092, %v3419
  %3421 = vmatpush1.msra.mxu0 %v3420
  %3422 = vmatprep.subr.mxu0 0.0
  %v3423 = vand.u32 %v2093, 4294901760
  %v3424 = vsub.f32 %v2093, %v3423
  %3425 = vmatpush1.msra.mxu0 %v3424
  %3426 = vmatprep.subr.mxu0 0.0
  %v3427 = vand.u32 %v2094, 4294901760
  %v3428 = vsub.f32 %v2094, %v3427
  %3429 = vmatpush1.msra.mxu0 %v3428
  %3430 = vmatprep.subr.mxu0 0.0
  %v3431 = vand.u32 %v2095, 4294901760
  %v3432 = vsub.f32 %v2095, %v3431
  %3433 = vmatpush1.msra.mxu0 %v3432
  %v3434 = vand.u32 %v2031, 4294901760
  %v3435 = vsub.f32 %v2031, %v3434
  %3436 = vmatprep.mubr.f32.mxu0 %v3435
  %v3437 = vand.u32 %v2030, 4294901760
  %v3438 = vsub.f32 %v2030, %v3437
  %3439 = vmatmul.mubr.f32.gmra.mrb[0].mxu0 %v3438
  %v3440 = vpop.f32.mrb[0].mxu0
  %v3441 = vadd.f32 %v3303, %v3440
  %v3442 = vpop.f32.mrb[0].mxu0
  %3443 = vdwg.mxu0
  %3444 = vmatprep.subr.mxu0 0.0
  %v3445 = vand.u32 %v2064, 4294901760
  %3446 = vmatpush1.msra.mxu0 %v3445
  %3447 = vmatprep.subr.mxu0 0.0
  %v3448 = vand.u32 %v2065, 4294901760
  %3449 = vmatpush1.msra.mxu0 %v3448
  %3450 = vmatprep.subr.mxu0 0.0
  %v3451 = vand.u32 %v2066, 4294901760
  %3452 = vmatpush1.msra.mxu0 %v3451
  %3453 = vmatprep.subr.mxu0 0.0
  %v3454 = vand.u32 %v2067, 4294901760
  %3455 = vmatpush1.msra.mxu0 %v3454
  %3456 = vmatprep.subr.mxu0 0.0
  %v3457 = vand.u32 %v2068, 4294901760
  %3458 = vmatpush1.msra.mxu0 %v3457
  %3459 = vmatprep.subr.mxu0 0.0
  %v3460 = vand.u32 %v2069, 4294901760
  %3461 = vmatpush1.msra.mxu0 %v3460
  %3462 = vmatprep.subr.mxu0 0.0
  %v3463 = vand.u32 %v2070, 4294901760
  %3464 = vmatpush1.msra.mxu0 %v3463
  %3465 = vmatprep.subr.mxu0 0.0
  %v3466 = vand.u32 %v2071, 4294901760
  %3467 = vmatpush1.msra.mxu0 %v3466
  %3468 = vmatprep.subr.mxu0 0.0
  %v3469 = vand.u32 %v2072, 4294901760
  %3470 = vmatpush1.msra.mxu0 %v3469
  %3471 = vmatprep.subr.mxu0 0.0
  %v3472 = vand.u32 %v2073, 4294901760
  %3473 = vmatpush1.msra.mxu0 %v3472
  %3474 = vmatprep.subr.mxu0 0.0
  %v3475 = vand.u32 %v2074, 4294901760
  %3476 = vmatpush1.msra.mxu0 %v3475
  %3477 = vmatprep.subr.mxu0 0.0
  %v3478 = vand.u32 %v2075, 4294901760
  %3479 = vmatpush1.msra.mxu0 %v3478
  %3480 = vmatprep.subr.mxu0 0.0
  %v3481 = vand.u32 %v2076, 4294901760
  %3482 = vmatpush1.msra.mxu0 %v3481
  %3483 = vmatprep.subr.mxu0 0.0
  %v3484 = vand.u32 %v2077, 4294901760
  %3485 = vmatpush1.msra.mxu0 %v3484
  %3486 = vmatprep.subr.mxu0 0.0
  %v3487 = vand.u32 %v2078, 4294901760
  %3488 = vmatpush1.msra.mxu0 %v3487
  %3489 = vmatprep.subr.mxu0 0.0
  %v3490 = vand.u32 %v2079, 4294901760
  %3491 = vmatpush1.msra.mxu0 %v3490
  %3492 = vmatprep.subr.mxu0 0.0
  %v3493 = vand.u32 %v2080, 4294901760
  %3494 = vmatpush1.msra.mxu0 %v3493
  %3495 = vmatprep.subr.mxu0 0.0
  %v3496 = vand.u32 %v2081, 4294901760
  %3497 = vmatpush1.msra.mxu0 %v3496
  %3498 = vmatprep.subr.mxu0 0.0
  %v3499 = vand.u32 %v2082, 4294901760
  %3500 = vmatpush1.msra.mxu0 %v3499
  %3501 = vmatprep.subr.mxu0 0.0
  %v3502 = vand.u32 %v2083, 4294901760
  %3503 = vmatpush1.msra.mxu0 %v3502
  %3504 = vmatprep.subr.mxu0 0.0
  %v3505 = vand.u32 %v2084, 4294901760
  %3506 = vmatpush1.msra.mxu0 %v3505
  %3507 = vmatprep.subr.mxu0 0.0
  %v3508 = vand.u32 %v2085, 4294901760
  %3509 = vmatpush1.msra.mxu0 %v3508
  %3510 = vmatprep.subr.mxu0 0.0
  %v3511 = vand.u32 %v2086, 4294901760
  %3512 = vmatpush1.msra.mxu0 %v3511
  %3513 = vmatprep.subr.mxu0 0.0
  %v3514 = vand.u32 %v2087, 4294901760
  %3515 = vmatpush1.msra.mxu0 %v3514
  %3516 = vmatprep.subr.mxu0 0.0
  %v3517 = vand.u32 %v2088, 4294901760
  %3518 = vmatpush1.msra.mxu0 %v3517
  %3519 = vmatprep.subr.mxu0 0.0
  %v3520 = vand.u32 %v2089, 4294901760
  %3521 = vmatpush1.msra.mxu0 %v3520
  %3522 = vmatprep.subr.mxu0 0.0
  %v3523 = vand.u32 %v2090, 4294901760
  %3524 = vmatpush1.msra.mxu0 %v3523
  %3525 = vmatprep.subr.mxu0 0.0
  %v3526 = vand.u32 %v2091, 4294901760
  %3527 = vmatpush1.msra.mxu0 %v3526
  %3528 = vmatprep.subr.mxu0 0.0
  %v3529 = vand.u32 %v2092, 4294901760
  %3530 = vmatpush1.msra.mxu0 %v3529
  %3531 = vmatprep.subr.mxu0 0.0
  %v3532 = vand.u32 %v2093, 4294901760
  %3533 = vmatpush1.msra.mxu0 %v3532
  %3534 = vmatprep.subr.mxu0 0.0
  %v3535 = vand.u32 %v2094, 4294901760
  %3536 = vmatpush1.msra.mxu0 %v3535
  %3537 = vmatprep.subr.mxu0 0.0
  %v3538 = vand.u32 %v2095, 4294901760
  %3539 = vmatpush1.msra.mxu0 %v3538
  %v3540 = vand.u32 %v2031, 4294901760
  %v3541 = vsub.f32 %v2031, %v3540
  %v3542 = vand.u32 %v3541, 4294901760
  %3543 = vmatprep.mubr.f32.mxu0 %v3542
  %v3544 = vand.u32 %v2030, 4294901760
  %v3545 = vsub.f32 %v2030, %v3544
  %v3546 = vand.u32 %v3545, 4294901760
  %3547 = vmatmul.mubr.f32.gmra.mrb[0].mxu0 %v3546
  %v3548 = vpop.f32.mrb[0].mxu0
  %v3549 = vadd.f32 %v3441, %v3548
  %v3550 = vpop.f32.mrb[0].mxu0
  %3551 = vdwg.mxu0
  %3552 = vmatprep.subr.mxu0 0.0
  %v3553 = vand.u32 %v2064, 4294901760
  %v3554 = vsub.f32 %v2064, %v3553
  %v3555 = vand.u32 %v3554, 4294901760
  %3556 = vmatpush1.msra.mxu0 %v3555
  %3557 = vmatprep.subr.mxu0 0.0
  %v3558 = vand.u32 %v2065, 4294901760
  %v3559 = vsub.f32 %v2065, %v3558
  %v3560 = vand.u32 %v3559, 4294901760
  %3561 = vmatpush1.msra.mxu0 %v3560
  %3562 = vmatprep.subr.mxu0 0.0
  %v3563 = vand.u32 %v2066, 4294901760
  %v3564 = vsub.f32 %v2066, %v3563
  %v3565 = vand.u32 %v3564, 4294901760
  %3566 = vmatpush1.msra.mxu0 %v3565
  %3567 = vmatprep.subr.mxu0 0.0
  %v3568 = vand.u32 %v2067, 4294901760
  %v3569 = vsub.f32 %v2067, %v3568
  %v3570 = vand.u32 %v3569, 4294901760
  %3571 = vmatpush1.msra.mxu0 %v3570
  %3572 = vmatprep.subr.mxu0 0.0
  %v3573 = vand.u32 %v2068, 4294901760
  %v3574 = vsub.f32 %v2068, %v3573
  %v3575 = vand.u32 %v3574, 4294901760
  %3576 = vmatpush1.msra.mxu0 %v3575
  %3577 = vmatprep.subr.mxu0 0.0
  %v3578 = vand.u32 %v2069, 4294901760
  %v3579 = vsub.f32 %v2069, %v3578
  %v3580 = vand.u32 %v3579, 4294901760
  %3581 = vmatpush1.msra.mxu0 %v3580
  %3582 = vmatprep.subr.mxu0 0.0
  %v3583 = vand.u32 %v2070, 4294901760
  %v3584 = vsub.f32 %v2070, %v3583
  %v3585 = vand.u32 %v3584, 4294901760
  %3586 = vmatpush1.msra.mxu0 %v3585
  %3587 = vmatprep.subr.mxu0 0.0
  %v3588 = vand.u32 %v2071, 4294901760
  %v3589 = vsub.f32 %v2071, %v3588
  %v3590 = vand.u32 %v3589, 4294901760
  %3591 = vmatpush1.msra.mxu0 %v3590
  %3592 = vmatprep.subr.mxu0 0.0
  %v3593 = vand.u32 %v2072, 4294901760
  %v3594 = vsub.f32 %v2072, %v3593
  %v3595 = vand.u32 %v3594, 4294901760
  %3596 = vmatpush1.msra.mxu0 %v3595
  %3597 = vmatprep.subr.mxu0 0.0
  %v3598 = vand.u32 %v2073, 4294901760
  %v3599 = vsub.f32 %v2073, %v3598
  %v3600 = vand.u32 %v3599, 4294901760
  %3601 = vmatpush1.msra.mxu0 %v3600
  %3602 = vmatprep.subr.mxu0 0.0
  %v3603 = vand.u32 %v2074, 4294901760
  %v3604 = vsub.f32 %v2074, %v3603
  %v3605 = vand.u32 %v3604, 4294901760
  %3606 = vmatpush1.msra.mxu0 %v3605
  %3607 = vmatprep.subr.mxu0 0.0
  %v3608 = vand.u32 %v2075, 4294901760
  %v3609 = vsub.f32 %v2075, %v3608
  %v3610 = vand.u32 %v3609, 4294901760
  %3611 = vmatpush1.msra.mxu0 %v3610
  %3612 = vmatprep.subr.mxu0 0.0
  %v3613 = vand.u32 %v2076, 4294901760
  %v3614 = vsub.f32 %v2076, %v3613
  %v3615 = vand.u32 %v3614, 4294901760
  %3616 = vmatpush1.msra.mxu0 %v3615
  %3617 = vmatprep.subr.mxu0 0.0
  %v3618 = vand.u32 %v2077, 4294901760
  %v3619 = vsub.f32 %v2077, %v3618
  %v3620 = vand.u32 %v3619, 4294901760
  %3621 = vmatpush1.msra.mxu0 %v3620
  %3622 = vmatprep.subr.mxu0 0.0
  %v3623 = vand.u32 %v2078, 4294901760
  %v3624 = vsub.f32 %v2078, %v3623
  %v3625 = vand.u32 %v3624, 4294901760
  %3626 = vmatpush1.msra.mxu0 %v3625
  %3627 = vmatprep.subr.mxu0 0.0
  %v3628 = vand.u32 %v2079, 4294901760
  %v3629 = vsub.f32 %v2079, %v3628
  %v3630 = vand.u32 %v3629, 4294901760
  %3631 = vmatpush1.msra.mxu0 %v3630
  %3632 = vmatprep.subr.mxu0 0.0
  %v3633 = vand.u32 %v2080, 4294901760
  %v3634 = vsub.f32 %v2080, %v3633
  %v3635 = vand.u32 %v3634, 4294901760
  %3636 = vmatpush1.msra.mxu0 %v3635
  %3637 = vmatprep.subr.mxu0 0.0
  %v3638 = vand.u32 %v2081, 4294901760
  %v3639 = vsub.f32 %v2081, %v3638
  %v3640 = vand.u32 %v3639, 4294901760
  %3641 = vmatpush1.msra.mxu0 %v3640
  %3642 = vmatprep.subr.mxu0 0.0
  %v3643 = vand.u32 %v2082, 4294901760
  %v3644 = vsub.f32 %v2082, %v3643
  %v3645 = vand.u32 %v3644, 4294901760
  %3646 = vmatpush1.msra.mxu0 %v3645
  %3647 = vmatprep.subr.mxu0 0.0
  %v3648 = vand.u32 %v2083, 4294901760
  %v3649 = vsub.f32 %v2083, %v3648
  %v3650 = vand.u32 %v3649, 4294901760
  %3651 = vmatpush1.msra.mxu0 %v3650
  %3652 = vmatprep.subr.mxu0 0.0
  %v3653 = vand.u32 %v2084, 4294901760
  %v3654 = vsub.f32 %v2084, %v3653
  %v3655 = vand.u32 %v3654, 4294901760
  %3656 = vmatpush1.msra.mxu0 %v3655
  %3657 = vmatprep.subr.mxu0 0.0
  %v3658 = vand.u32 %v2085, 4294901760
  %v3659 = vsub.f32 %v2085, %v3658
  %v3660 = vand.u32 %v3659, 4294901760
  %3661 = vmatpush1.msra.mxu0 %v3660
  %3662 = vmatprep.subr.mxu0 0.0
  %v3663 = vand.u32 %v2086, 4294901760
  %v3664 = vsub.f32 %v2086, %v3663
  %v3665 = vand.u32 %v3664, 4294901760
  %3666 = vmatpush1.msra.mxu0 %v3665
  %3667 = vmatprep.subr.mxu0 0.0
  %v3668 = vand.u32 %v2087, 4294901760
  %v3669 = vsub.f32 %v2087, %v3668
  %v3670 = vand.u32 %v3669, 4294901760
  %3671 = vmatpush1.msra.mxu0 %v3670
  %3672 = vmatprep.subr.mxu0 0.0
  %v3673 = vand.u32 %v2088, 4294901760
  %v3674 = vsub.f32 %v2088, %v3673
  %v3675 = vand.u32 %v3674, 4294901760
  %3676 = vmatpush1.msra.mxu0 %v3675
  %3677 = vmatprep.subr.mxu0 0.0
  %v3678 = vand.u32 %v2089, 4294901760
  %v3679 = vsub.f32 %v2089, %v3678
  %v3680 = vand.u32 %v3679, 4294901760
  %3681 = vmatpush1.msra.mxu0 %v3680
  %3682 = vmatprep.subr.mxu0 0.0
  %v3683 = vand.u32 %v2090, 4294901760
  %v3684 = vsub.f32 %v2090, %v3683
  %v3685 = vand.u32 %v3684, 4294901760
  %3686 = vmatpush1.msra.mxu0 %v3685
  %3687 = vmatprep.subr.mxu0 0.0
  %v3688 = vand.u32 %v2091, 4294901760
  %v3689 = vsub.f32 %v2091, %v3688
  %v3690 = vand.u32 %v3689, 4294901760
  %3691 = vmatpush1.msra.mxu0 %v3690
  %3692 = vmatprep.subr.mxu0 0.0
  %v3693 = vand.u32 %v2092, 4294901760
  %v3694 = vsub.f32 %v2092, %v3693
  %v3695 = vand.u32 %v3694, 4294901760
  %3696 = vmatpush1.msra.mxu0 %v3695
  %3697 = vmatprep.subr.mxu0 0.0
  %v3698 = vand.u32 %v2093, 4294901760
  %v3699 = vsub.f32 %v2093, %v3698
  %v3700 = vand.u32 %v3699, 4294901760
  %3701 = vmatpush1.msra.mxu0 %v3700
  %3702 = vmatprep.subr.mxu0 0.0
  %v3703 = vand.u32 %v2094, 4294901760
  %v3704 = vsub.f32 %v2094, %v3703
  %v3705 = vand.u32 %v3704, 4294901760
  %3706 = vmatpush1.msra.mxu0 %v3705
  %3707 = vmatprep.subr.mxu0 0.0
  %v3708 = vand.u32 %v2095, 4294901760
  %v3709 = vsub.f32 %v2095, %v3708
  %v3710 = vand.u32 %v3709, 4294901760
  %3711 = vmatpush1.msra.mxu0 %v3710
  %v3712 = vand.u32 %v2031, 4294901760
  %3713 = vmatprep.mubr.f32.mxu0 %v3712
  %v3714 = vand.u32 %v2030, 4294901760
  %3715 = vmatmul.mubr.f32.gmra.mrb[0].mxu0 %v3714
  %v3716 = vpop.f32.mrb[0].mxu0
  %v3717 = vadd.f32 %v3549, %v3716
  %v3718 = vpop.f32.mrb[0].mxu0
  %3719 = vdwg.mxu0
  %3720 = vmatprep.subr.mxu0 0.0
  %v3721 = vand.u32 %v2064, 4294901760
  %3722 = vmatpush1.msra.mxu0 %v3721
  %3723 = vmatprep.subr.mxu0 0.0
  %v3724 = vand.u32 %v2065, 4294901760
  %3725 = vmatpush1.msra.mxu0 %v3724
  %3726 = vmatprep.subr.mxu0 0.0
  %v3727 = vand.u32 %v2066, 4294901760
  %3728 = vmatpush1.msra.mxu0 %v3727
  %3729 = vmatprep.subr.mxu0 0.0
  %v3730 = vand.u32 %v2067, 4294901760
  %3731 = vmatpush1.msra.mxu0 %v3730
  %3732 = vmatprep.subr.mxu0 0.0
  %v3733 = vand.u32 %v2068, 4294901760
  %3734 = vmatpush1.msra.mxu0 %v3733
  %3735 = vmatprep.subr.mxu0 0.0
  %v3736 = vand.u32 %v2069, 4294901760
  %3737 = vmatpush1.msra.mxu0 %v3736
  %3738 = vmatprep.subr.mxu0 0.0
  %v3739 = vand.u32 %v2070, 4294901760
  %3740 = vmatpush1.msra.mxu0 %v3739
  %3741 = vmatprep.subr.mxu0 0.0
  %v3742 = vand.u32 %v2071, 4294901760
  %3743 = vmatpush1.msra.mxu0 %v3742
  %3744 = vmatprep.subr.mxu0 0.0
  %v3745 = vand.u32 %v2072, 4294901760
  %3746 = vmatpush1.msra.mxu0 %v3745
  %3747 = vmatprep.subr.mxu0 0.0
  %v3748 = vand.u32 %v2073, 4294901760
  %3749 = vmatpush1.msra.mxu0 %v3748
  %3750 = vmatprep.subr.mxu0 0.0
  %v3751 = vand.u32 %v2074, 4294901760
  %3752 = vmatpush1.msra.mxu0 %v3751
  %3753 = vmatprep.subr.mxu0 0.0
  %v3754 = vand.u32 %v2075, 4294901760
  %3755 = vmatpush1.msra.mxu0 %v3754
  %3756 = vmatprep.subr.mxu0 0.0
  %v3757 = vand.u32 %v2076, 4294901760
  %3758 = vmatpush1.msra.mxu0 %v3757
  %3759 = vmatprep.subr.mxu0 0.0
  %v3760 = vand.u32 %v2077, 4294901760
  %3761 = vmatpush1.msra.mxu0 %v3760
  %3762 = vmatprep.subr.mxu0 0.0
  %v3763 = vand.u32 %v2078, 4294901760
  %3764 = vmatpush1.msra.mxu0 %v3763
  %3765 = vmatprep.subr.mxu0 0.0
  %v3766 = vand.u32 %v2079, 4294901760
  %3767 = vmatpush1.msra.mxu0 %v3766
  %3768 = vmatprep.subr.mxu0 0.0
  %v3769 = vand.u32 %v2080, 4294901760
  %3770 = vmatpush1.msra.mxu0 %v3769
  %3771 = vmatprep.subr.mxu0 0.0
  %v3772 = vand.u32 %v2081, 4294901760
  %3773 = vmatpush1.msra.mxu0 %v3772
  %3774 = vmatprep.subr.mxu0 0.0
  %v3775 = vand.u32 %v2082, 4294901760
  %3776 = vmatpush1.msra.mxu0 %v3775
  %3777 = vmatprep.subr.mxu0 0.0
  %v3778 = vand.u32 %v2083, 4294901760
  %3779 = vmatpush1.msra.mxu0 %v3778
  %3780 = vmatprep.subr.mxu0 0.0
  %v3781 = vand.u32 %v2084, 4294901760
  %3782 = vmatpush1.msra.mxu0 %v3781
  %3783 = vmatprep.subr.mxu0 0.0
  %v3784 = vand.u32 %v2085, 4294901760
  %3785 = vmatpush1.msra.mxu0 %v3784
  %3786 = vmatprep.subr.mxu0 0.0
  %v3787 = vand.u32 %v2086, 4294901760
  %3788 = vmatpush1.msra.mxu0 %v3787
  %3789 = vmatprep.subr.mxu0 0.0
  %v3790 = vand.u32 %v2087, 4294901760
  %3791 = vmatpush1.msra.mxu0 %v3790
  %3792 = vmatprep.subr.mxu0 0.0
  %v3793 = vand.u32 %v2088, 4294901760
  %3794 = vmatpush1.msra.mxu0 %v3793
  %3795 = vmatprep.subr.mxu0 0.0
  %v3796 = vand.u32 %v2089, 4294901760
  %3797 = vmatpush1.msra.mxu0 %v3796
  %3798 = vmatprep.subr.mxu0 0.0
  %v3799 = vand.u32 %v2090, 4294901760
  %3800 = vmatpush1.msra.mxu0 %v3799
  %3801 = vmatprep.subr.mxu0 0.0
  %v3802 = vand.u32 %v2091, 4294901760
  %3803 = vmatpush1.msra.mxu0 %v3802
  %3804 = vmatprep.subr.mxu0 0.0
  %v3805 = vand.u32 %v2092, 4294901760
  %3806 = vmatpush1.msra.mxu0 %v3805
  %3807 = vmatprep.subr.mxu0 0.0
  %v3808 = vand.u32 %v2093, 4294901760
  %3809 = vmatpush1.msra.mxu0 %v3808
  %3810 = vmatprep.subr.mxu0 0.0
  %v3811 = vand.u32 %v2094, 4294901760
  %3812 = vmatpush1.msra.mxu0 %v3811
  %3813 = vmatprep.subr.mxu0 0.0
  %v3814 = vand.u32 %v2095, 4294901760
  %3815 = vmatpush1.msra.mxu0 %v3814
  %v3816 = vand.u32 %v2031, 4294901760
  %3817 = vmatprep.mubr.f32.mxu0 %v3816
  %v3818 = vand.u32 %v2030, 4294901760
  %3819 = vmatmul.mubr.f32.gmra.mrb[0].mxu0 %v3818
  %v3820 = vpop.f32.mrb[0].mxu0
  %v3821 = vadd.f32 %v3717, %v3820
  %v3822 = vpop.f32.mrb[0].mxu0
  %3823 = vdwg.mxu0
  %3824 = vst [vmem:[%s8] sm:$0x3] %v3821
  // Predicated region
  $region34: #{ac_forward.1} parent=0 // pred_check
    _
  $region35: #{ac_forward.1} parent=0 // pred_check_branch
    %3826 = sbr.rel (0) target = $region37
  $region36: #{ac_forward.1} parent=0 // pred_region
    _
  $region37: #{ac_forward.1} parent=0 // pred_fallthru
    _
  // Predicated region
  $region38: #{ac_forward.1} parent=0 // pred_check
    _
  $region39: #{ac_forward.1} parent=0 // pred_check_branch
    %3828 = sbr.rel (0) target = $region41
  $region40: #{ac_forward.1} parent=0 // pred_region
    _
  $region41: #{ac_forward.1} parent=0 // pred_fallthru
    _

</llo_original>
